<compile_context>
chip_gen: v5e
topology: v5e:2x2
jax: 0.10.0
libtpu: 0.0.40
codegen_flags: <defaults>
</compile_context>

<pallas_src>
import numpy as np
import jax
import jax.numpy as jnp
from jax.experimental import pallas as pl
from jax.experimental.pallas import tpu as pltpu

BN_EPS = 1e-4  # the module uses BatchNorm2d(eps=0.0001)


def _round_up(x, m):
    return (x + m - 1) // m * m


def _chip_info():
    """Best-effort local-chip query: (vmem_capacity_bytes, is_v5e)."""
    kind = ""
    try:
        kind = jax.devices()[0].device_kind.lower()
    except Exception:
        pass
    vmem_cap = None
    try:
        vmem_cap = int(pltpu.get_tpu_info().vmem_capacity_bytes)
    except Exception:
        vmem_cap = None
    if not vmem_cap:
        if "v7" in kind:
            vmem_cap = 64 * 1024 * 1024       # per-TensorCore on v7x
        elif ("v5" in kind) or ("v6" in kind):
            vmem_cap = 128 * 1024 * 1024      # v5e/v5p/v6e physical VMEM
        else:
            vmem_cap = 64 * 1024 * 1024       # conservative default
    is_v5e = ("v5 lite" in kind) or ("v5e" in kind) or ("v5litepod" in kind)
    return vmem_cap, is_v5e


def _make_kernel(W, R, Cin, Cout, halo, mxu_dtype, pack):
    """R = H*W flattened rows; Cin/Cout already lane-padded."""

    def kernel(x_ref, s_ref, b_ref, w_ref, o_ref, buf_ref):
        # ---- bn1 (eval-mode, folded) + relu : f32 on the VPU -------------
        h = jnp.maximum(x_ref[...] * s_ref[...] + b_ref[...], 0.0)   # (R, Cin)

        # ---- zero-halo row window in VMEM scratch (mxu_dtype) ------------
        # Only the halo rows are (re)zeroed each step; body rows [halo,
        # halo+R) are fully overwritten below.  Single f32 -> mxu_dtype cast.
        buf_ref[0:halo, :] = jnp.zeros((halo, Cin), mxu_dtype)
        buf_ref[halo + R:halo + R + halo, :] = jnp.zeros((halo, Cin), mxu_dtype)
        buf_ref[halo:halo + R, :] = h.astype(mxu_dtype)

        # ---- shape-only column masks (cheap (R,1) iota per step) ---------
        jcol = jax.lax.broadcasted_iota(jnp.int32, (R, 1), 0) % W
        left_ok = jcol > 0           # neighbour j-1 exists (taps with dw=-1)
        right_ok = jcol < (W - 1)    # neighbour j+1 exists (taps with dw=+1)

        def tap(kh, kw):
            # patch[r] = h[r + dh*W + dw] (zero when out of image); already
            # in mxu_dtype -> no per-tap cast.
            off = (kh - 1) * W + (kw - 1)
            p = buf_ref[halo + off:halo + off + R, :]
            if kw == 0:
                p = jnp.where(left_ok, p, 0.0)
            elif kw == 2:
                p = jnp.where(right_ok, p, 0.0)
            return p

        if pack:
            # im2col: one (R, 9*Cin) x (9*Cin, Cout) matmul, f32 accumulate.
            # Taps are already mxu_dtype, so the concat temporary is bf16.
            patch = jnp.concatenate(
                [tap(kh, kw) for kh in range(3) for kw in range(3)], axis=-1)
            acc = jnp.dot(patch, w_ref[...], preferred_element_type=jnp.float32)
        else:
            # per-tap matmuls (small / lane-unaligned Cin, or v5e).
            acc = jnp.zeros((R, Cout), jnp.float32)
            for kh in range(3):
                for kw in range(3):
                    acc = acc + jnp.dot(tap(kh, kw), w_ref[kh * 3 + kw],
                                        preferred_element_type=jnp.float32)

        o_ref[...] = acc.astype(o_ref.dtype)

    return kernel


def real_basic_dense_block(inputs, params, *, mxu_dtype=jnp.bfloat16):
    """Eval-mode forward of RealBasicDenseBlock (bottleneck=False, stride 1).

    inputs : single NHWC array or list/tuple of NHWC arrays (dense
             connectivity) concatenated along channels.
    params : dict with "w" (growth, Cin, 3, 3) PyTorch OIHW conv weight and
             "g","b","m","v" (Cin,) BatchNorm affine / running stats.
    returns: NHWC (N, H, W, growth_rate), float32.
    """
    if isinstance(inputs, (list, tuple)):
        x = jnp.concatenate(inputs, axis=-1)          # torch.cat(inputs, 1)
    else:
        x = inputs
    N, H, W, Cin = x.shape
    Cout = params["w"].shape[0]
    HW = H * W

    vmem_cap, is_v5e = _chip_info()

    # fold eval-mode BatchNorm into per-channel scale/shift
    s = params["g"] / jnp.sqrt(params["v"] + BN_EPS)
    b = params["b"] - params["m"] * s

    # ---- lane padding (review): lane-dense output stores, aligned Cin -----
    # Cout is always padded to a multiple of 128 (padded weight columns are
    # zero, padding sliced off after the call).  Cin is only padded when the
    # overhead is <= 2x (avoid 32x HBM inflation for tiny channel counts);
    # padded channels get zero scale/shift and zero weight rows.
    Cout_pad = _round_up(Cout, 128)
    Cin_pad = _round_up(Cin, 128) if Cin >= 64 else Cin

    # conv weight: PyTorch (Cout, Cin, 3, 3) -> (9, Cin_pad, Cout_pad)
    w9 = jnp.transpose(params["w"], (2, 3, 1, 0))                    # HWIO
    w9 = jnp.pad(w9, ((0, 0), (0, 0), (0, Cin_pad - Cin), (0, Cout_pad - Cout)))
    w9 = w9.reshape(9, Cin_pad, Cout_pad)

    s = jnp.pad(s, (0, Cin_pad - Cin))   # zero scale  -> padded BN+relu == 0
    b = jnp.pad(b, (0, Cin_pad - Cin))   # zero shift

    # channels-last flatten; (N, H, W, C) -> (N, H*W, C) is byte-identical.
    x3 = x.reshape(N, HW, Cin)
    if Cin_pad != Cin:
        x3 = jnp.pad(x3, ((0, 0), (0, 0), (0, Cin_pad - Cin)))

    # pack the 9 taps into a single K = 9*Cin matmul only when the lane
    # concatenation is tile-aligned AND the chip has a 256-deep MXU (v6e/v7x);
    # on v5e the 128-deep MXU is already filled by K=Cin=128 per-tap matmuls.
    pack = (not is_v5e) and (Cin_pad >= 128) and (Cin_pad % 128 == 0)
    if pack:
        w_kernel = w9.reshape(9 * Cin_pad, Cout_pad).astype(mxu_dtype)
        w_spec = pl.BlockSpec((9 * Cin_pad, Cout_pad), lambda n: (0, 0))
    else:
        w_kernel = w9.astype(mxu_dtype)
        w_spec = pl.BlockSpec((9, Cin_pad, Cout_pad), lambda n: (0, 0, 0))

    # halo rows above/below the image: >= W+1 and a multiple of 16 so the
    # packed-sublane (bf16) body store into the scratch stays aligned.
    halo = _round_up(max(W + 1, 8), 16)

    # explicit VMEM budget from the per-image working set (corrected: scratch
    # and im2col temporary are in mxu_dtype now), capped by the chip's
    # reported VMEM capacity, never below the 32 MiB scoped default.
    wb = int(jnp.dtype(mxu_dtype).itemsize)
    est = (2 * HW * Cin_pad * 4                      # input block, double-buffered
           + 2 * HW * Cout_pad * 4                   # output block, double-buffered
           + 2 * 9 * Cin_pad * Cout_pad * wb         # weights (default double-buffer)
           + (HW + 2 * halo) * Cin_pad * wb          # halo scratch (mxu_dtype)
           + HW * Cin_pad * 4                        # h f32 temporary
           + HW * Cout_pad * 4                       # f32 accumulator
           + (HW * 9 * Cin_pad * wb if pack else HW * Cin_pad * wb))  # im2col / tap temp
    vmem_limit = int(min(0.9 * vmem_cap, max(32 * 1024 * 1024, 2 * est)))

    out3 = pl.pallas_call(
        _make_kernel(W, HW, Cin_pad, Cout_pad, halo, mxu_dtype, pack),
        out_shape=jax.ShapeDtypeStruct((N, HW, Cout_pad), jnp.float32),
        grid_spec=pltpu.PrefetchScalarGridSpec(
            num_scalar_prefetch=0,
            grid=(N,),
            in_specs=[
                pl.BlockSpec((None, HW, Cin_pad), lambda n: (n, 0, 0)),  # x
                pl.BlockSpec((1, Cin_pad), lambda n: (0, 0)),            # bn scale
                pl.BlockSpec((1, Cin_pad), lambda n: (0, 0)),            # bn shift
                w_spec,                                                   # weights
            ],
            out_specs=pl.BlockSpec((None, HW, Cout_pad), lambda n: (n, 0, 0)),
            scratch_shapes=[pltpu.VMEM((HW + 2 * halo, Cin_pad), mxu_dtype)],
        ),
        compiler_params=pltpu.CompilerParams(
            dimension_semantics=("parallel",),   # megacore: images across TCs
            vmem_limit_bytes=vmem_limit,
        ),
    )(x3, s.reshape(1, Cin_pad), b.reshape(1, Cin_pad), w_kernel)

    if Cout_pad != Cout:
        out3 = out3[..., :Cout]
    return out3.reshape(N, H, W, Cout)


def ref_dense_block(inputs, params, *, mxu_dtype=jnp.float32):
    """Pure-JAX NHWC reference matching the PyTorch eval-mode forward.

    `mxu_dtype` quantizes the conv inputs (post BN+relu activations and the
    weights) the same way the kernel's MXU path does, so the comparison only
    sees accumulation-order noise instead of bf16 rounding of the operands.
    """
    if isinstance(inputs, (list, tuple)):
        x = jnp.concatenate(inputs, axis=-1)
    else:
        x = inputs
    h = (x - params["m"]) / jnp.sqrt(params["v"] + BN_EPS) * params["g"] + params["b"]
    h = jax.nn.relu(h)
    w = jnp.transpose(params["w"], (2, 3, 1, 0))   # OIHW -> HWIO
    h = h.astype(mxu_dtype).astype(jnp.float32)
    w = w.astype(mxu_dtype).astype(jnp.float32)
    return jax.lax.conv_general_dilated(
        h, w, window_strides=(1, 1), padding=((1, 1), (1, 1)),
        dimension_numbers=("NHWC", "HWIO", "NHWC"),
        precision=jax.lax.Precision.HIGHEST)


def _make_case(key, N, H, W, Cin, growth):
    ks = jax.random.split(key, 7)
    params = {
        "w": jax.random.normal(ks[0], (growth, Cin, 3, 3), jnp.float32) * 0.1,
        "g": jax.random.uniform(ks[1], (Cin,), jnp.float32, 0.5, 1.5),
        "b": jax.random.normal(ks[2], (Cin,), jnp.float32) * 0.1,
        "m": jax.random.normal(ks[3], (Cin,), jnp.float32) * 0.1,
        "v": jax.random.uniform(ks[4], (Cin,), jnp.float32, 0.5, 1.5),
    }
    # dense connectivity: two prior feature maps concatenated on channels
    c0 = Cin // 2
    x0 = jax.random.normal(ks[5], (N, H, W, c0), jnp.float32)
    x1 = jax.random.normal(ks[6], (N, H, W, Cin - c0), jnp.float32)
    return [x0, x1], params


if __name__ == "__main__":
    # Case 1: module-scale small shapes (batch=2, inplanes=4, 16x16,
    #         growth_rate=8).  Small-channel per-tap path; Cout lane-padded
    #         to 128 inside the wrapper and sliced back.  Reference is
    #         quantization-matched to the bf16 MXU inputs, so the tolerance
    #         only has to absorb accumulation-order / rounding-boundary noise.
    xs, params = _make_case(jax.random.PRNGKey(0), N=2, H=16, W=16, Cin=4, growth=8)
    out = jax.block_until_ready(real_basic_dense_block(xs, params,
                                                       mxu_dtype=jnp.bfloat16))
    ref = jax.block_until_ready(ref_dense_block(xs, params,
                                                mxu_dtype=jnp.bfloat16))
    assert out.shape == ref.shape == (2, 16, 16, 8)
    np.testing.assert_allclose(np.asarray(out), np.asarray(ref),
                               rtol=1e-2, atol=1e-2)

    # Case 2: lane-dense channels (Cin = growth = 128) -> exercises the
    #         packed K=9*Cin bf16 im2col matmul path on v6e/v7x (per-tap
    #         fallback on v5e), f32 accumulation.
    xs2, params2 = _make_case(jax.random.PRNGKey(1), N=2, H=16, W=16,
                              Cin=128, growth=128)
    out2 = jax.block_until_ready(real_basic_dense_block(xs2, params2,
                                                        mxu_dtype=jnp.bfloat16))
    ref2 = jax.block_until_ready(ref_dense_block(xs2, params2,
                                                 mxu_dtype=jnp.bfloat16))
    assert out2.shape == ref2.shape == (2, 16, 16, 128)
    np.testing.assert_allclose(np.asarray(out2), np.asarray(ref2),
                               rtol=1e-2, atol=1e-2)

    print("KERNEL_OK")
</pallas_src>

<mosaic_0001>
module attributes {stable_mosaic.version = 11 : i64} {
  func.func @kernel(%arg0: i32, %arg1: memref<1x256x4xf32, #tpu.memory_space<vmem>>, %arg2: memref<1x4xf32, #tpu.memory_space<vmem>>, %arg3: memref<1x4xf32, #tpu.memory_space<vmem>>, %arg4: memref<9x4x128xbf16, #tpu.memory_space<vmem>>, %arg5: memref<1x256x128xf32, #tpu.memory_space<vmem>>, %arg6: memref<320x4xbf16, #tpu.memory_space<vmem>>) attributes {dimension_semantics = [#tpu.dimension_semantics<parallel>], iteration_bounds = array<i64: 2>, scalar_prefetch = 0 : i64, scratch_operands = 1 : i64, tpu.core_type = #tpu.core_type<tc>, window_params = [{transform_indices = @transform_0, window_bounds = array<i64: 1, 256, 4>}, {pipeline_mode = #tpu.pipeline_mode<synchronous>, transform_indices = @transform_1, window_bounds = array<i64: 1, 4>}, {pipeline_mode = #tpu.pipeline_mode<synchronous>, transform_indices = @transform_2, window_bounds = array<i64: 1, 4>}, {pipeline_mode = #tpu.pipeline_mode<synchronous>, transform_indices = @transform_3, window_bounds = array<i64: 9, 4, 128>}, {transform_indices = @transform_4, window_bounds = array<i64: 1, 256, 128>}]} {
    %c0 = arith.constant 0 : index
    %c0_0 = arith.constant 0 : index
    %c0_1 = arith.constant 0 : index
    %0 = vector.load %arg1[%c0, %c0_0, %c0_1] : memref<1x256x4xf32, #tpu.memory_space<vmem>>, vector<1x256x4xf32>
    %1 = vector.shape_cast %0 : vector<1x256x4xf32> to vector<256x4xf32>
    %c0_2 = arith.constant 0 : index
    %c0_3 = arith.constant 0 : index
    %2 = vector.load %arg2[%c0_2, %c0_3] : memref<1x4xf32, #tpu.memory_space<vmem>>, vector<1x4xf32>
    %3 = vector.broadcast %2 : vector<1x4xf32> to vector<256x4xf32>
    %4 = arith.mulf %1, %3 : vector<256x4xf32>
    %c0_4 = arith.constant 0 : index
    %c0_5 = arith.constant 0 : index
    %5 = vector.load %arg3[%c0_4, %c0_5] : memref<1x4xf32, #tpu.memory_space<vmem>>, vector<1x4xf32>
    %6 = vector.broadcast %5 : vector<1x4xf32> to vector<256x4xf32>
    %7 = arith.addf %4, %6 : vector<256x4xf32>
    %cst = arith.constant 0.000000e+00 : f32
    %8 = vector.broadcast %cst : f32 to vector<256x4xf32>
    %9 = arith.maximumf %7, %8 : vector<256x4xf32>
    %cst_6 = arith.constant 0.000000e+00 : bf16
    %10 = vector.broadcast %cst_6 : bf16 to vector<32x4xbf16>
    %c0_7 = arith.constant 0 : index
    %c0_8 = arith.constant 0 : index
    %11 = vector.load %arg6[%c0_7, %c0_8] : memref<320x4xbf16, #tpu.memory_space<vmem>>, vector<32x4xbf16>
    tpu.vector_store %arg6[%c0_7, %c0_8], %10 {strides = array<i32>} : memref<320x4xbf16, #tpu.memory_space<vmem>>, vector<32x4xbf16>,
    %cst_9 = arith.constant 0.000000e+00 : bf16
    %12 = vector.broadcast %cst_9 : bf16 to vector<32x4xbf16>
    %c288 = arith.constant 288 : index
    %c0_10 = arith.constant 0 : index
    %13 = vector.load %arg6[%c288, %c0_10] : memref<320x4xbf16, #tpu.memory_space<vmem>>, vector<32x4xbf16>
    tpu.vector_store %arg6[%c288, %c0_10], %12 {strides = array<i32>} : memref<320x4xbf16, #tpu.memory_space<vmem>>, vector<32x4xbf16>,
    %14 = arith.truncf %9 : vector<256x4xf32> to vector<256x4xbf16>
    %c32 = arith.constant 32 : index
    %c0_11 = arith.constant 0 : index
    %15 = vector.load %arg6[%c32, %c0_11] : memref<320x4xbf16, #tpu.memory_space<vmem>>, vector<256x4xbf16>
    tpu.vector_store %arg6[%c32, %c0_11], %14 {strides = array<i32>} : memref<320x4xbf16, #tpu.memory_space<vmem>>, vector<256x4xbf16>,
    %16 = tpu.iota {dimensions = array<i32: 0>} : vector<256x1xi32>
    %c16_i32 = arith.constant 16 : i32
    %c0_i32 = arith.constant 0 : i32
    %17 = arith.cmpi eq, %c16_i32, %c0_i32 : i32
    %c1_i32 = arith.constant 1 : i32
    %18 = arith.select %17, %c1_i32, %c16_i32 : i32
    %19 = vector.broadcast %18 : i32 to vector<256x1xi32>
    %20 = arith.remsi %16, %19 : vector<256x1xi32>
    %c0_i32_12 = arith.constant 0 : i32
    %21 = vector.broadcast %c0_i32_12 : i32 to vector<256x1xi32>
    %22 = arith.cmpi ne, %20, %21 : vector<256x1xi32>
    %c0_i32_13 = arith.constant 0 : i32
    %23 = vector.broadcast %c0_i32_13 : i32 to vector<256x1xi32>
    %24 = arith.cmpi slt, %20, %23 : vector<256x1xi32>
    %c0_i32_14 = arith.constant 0 : i32
    %25 = arith.cmpi slt, %18, %c0_i32_14 : i32
    %26 = vector.broadcast %25 : i1 to vector<256x1xi1>
    %27 = vector.broadcast %26 : vector<256x1xi1> to vector<256x1xi1>
    %28 = arith.xori %24, %27 : vector<256x1xi1>
    %29 = arith.andi %28, %22 : vector<256x1xi1>
    %30 = vector.broadcast %18 : i32 to vector<256x1xi32>
    %31 = arith.addi %20, %30 : vector<256x1xi32>
    %32 = arith.select %29, %31, %20 : vector<256x1xi1>, vector<256x1xi32>
    %c0_i32_15 = arith.constant 0 : i32
    %33 = vector.broadcast %c0_i32_15 : i32 to vector<256x1xi32>
    %34 = arith.cmpi sgt, %32, %33 : vector<256x1xi32>
    %c15_i32 = arith.constant 15 : i32
    %35 = vector.broadcast %c15_i32 : i32 to vector<256x1xi32>
    %36 = arith.cmpi slt, %32, %35 : vector<256x1xi32>
    %cst_16 = arith.constant 0.000000e+00 : f32
    %37 = vector.broadcast %cst_16 : f32 to vector<256x128xf32>
    %c15 = arith.constant 15 : index
    %c0_17 = arith.constant 0 : index
    %38 = vector.load %arg6[%c15, %c0_17] : memref<320x4xbf16, #tpu.memory_space<vmem>>, vector<256x4xbf16>
    %cst_18 = arith.constant 0.000000e+00 : f32
    %39 = arith.truncf %cst_18 : f32 to bf16
    %40 = vector.shape_cast %34 : vector<256x1xi1> to vector<256x1xi1>
    %41 = vector.broadcast %40 : vector<256x1xi1> to vector<256x4xi1>
    %42 = vector.broadcast %39 : bf16 to vector<256x4xbf16>
    %43 = arith.select %41, %38, %42 : vector<256x4xi1>, vector<256x4xbf16>
    %c0_19 = arith.constant 0 : index
    %c0_20 = arith.constant 0 : index
    %c0_21 = arith.constant 0 : index
    %44 = vector.load %arg4[%c0_19, %c0_20, %c0_21] : memref<9x4x128xbf16, #tpu.memory_space<vmem>>, vector<1x4x128xbf16>
    %45 = vector.shape_cast %44 : vector<1x4x128xbf16> to vector<4x128xbf16>
    %cst_22 = arith.constant dense<0.000000e+00> : vector<256x128xf32>
    %46 = tpu.matmul %43, %45, %cst_22 {dimension_numbers = #tpu.dot_dimension_numbers<[1], [0], [0], [1], [0, 0, 1, 1], [], []>} : vector<256x4xbf16>, vector<4x128xbf16>, vector<256x128xf32> -> vector<256x128xf32>
    %47 = arith.addf %37, %46 : vector<256x128xf32>
    %c16 = arith.constant 16 : index
    %c0_23 = arith.constant 0 : index
    %48 = vector.load %arg6[%c16, %c0_23] : memref<320x4xbf16, #tpu.memory_space<vmem>>, vector<256x4xbf16>
    %c1 = arith.constant 1 : index
    %c0_24 = arith.constant 0 : index
    %c0_25 = arith.constant 0 : index
    %49 = vector.load %arg4[%c1, %c0_24, %c0_25] : memref<9x4x128xbf16, #tpu.memory_space<vmem>>, vector<1x4x128xbf16>
    %50 = vector.shape_cast %49 : vector<1x4x128xbf16> to vector<4x128xbf16>
    %cst_26 = arith.constant dense<0.000000e+00> : vector<256x128xf32>
    %51 = tpu.matmul %48, %50, %cst_26 {dimension_numbers = #tpu.dot_dimension_numbers<[1], [0], [0], [1], [0, 0, 1, 1], [], []>} : vector<256x4xbf16>, vector<4x128xbf16>, vector<256x128xf32> -> vector<256x128xf32>
    %52 = arith.addf %47, %51 : vector<256x128xf32>
    %c17 = arith.constant 17 : index
    %c0_27 = arith.constant 0 : index
    %53 = vector.load %arg6[%c17, %c0_27] : memref<320x4xbf16, #tpu.memory_space<vmem>>, vector<256x4xbf16>
    %cst_28 = arith.constant 0.000000e+00 : f32
    %54 = arith.truncf %cst_28 : f32 to bf16
    %55 = vector.shape_cast %36 : vector<256x1xi1> to vector<256x1xi1>
    %56 = vector.broadcast %55 : vector<256x1xi1> to vector<256x4xi1>
    %57 = vector.broadcast %54 : bf16 to vector<256x4xbf16>
    %58 = arith.select %56, %53, %57 : vector<256x4xi1>, vector<256x4xbf16>
    %c2 = arith.constant 2 : index
    %c0_29 = arith.constant 0 : index
    %c0_30 = arith.constant 0 : index
    %59 = vector.load %arg4[%c2, %c0_29, %c0_30] : memref<9x4x128xbf16, #tpu.memory_space<vmem>>, vector<1x4x128xbf16>
    %60 = vector.shape_cast %59 : vector<1x4x128xbf16> to vector<4x128xbf16>
    %cst_31 = arith.constant dense<0.000000e+00> : vector<256x128xf32>
    %61 = tpu.matmul %58, %60, %cst_31 {dimension_numbers = #tpu.dot_dimension_numbers<[1], [0], [0], [1], [0, 0, 1, 1], [], []>} : vector<256x4xbf16>, vector<4x128xbf16>, vector<256x128xf32> -> vector<256x128xf32>
    %62 = arith.addf %52, %61 : vector<256x128xf32>
    %c31 = arith.constant 31 : index
    %c0_32 = arith.constant 0 : index
    %63 = vector.load %arg6[%c31, %c0_32] : memref<320x4xbf16, #tpu.memory_space<vmem>>, vector<256x4xbf16>
    %cst_33 = arith.constant 0.000000e+00 : f32
    %64 = arith.truncf %cst_33 : f32 to bf16
    %65 = vector.shape_cast %34 : vector<256x1xi1> to vector<256x1xi1>
    %66 = vector.broadcast %65 : vector<256x1xi1> to vector<256x4xi1>
    %67 = vector.broadcast %64 : bf16 to vector<256x4xbf16>
    %68 = arith.select %66, %63, %67 : vector<256x4xi1>, vector<256x4xbf16>
    %c3 = arith.constant 3 : index
    %c0_34 = arith.constant 0 : index
    %c0_35 = arith.constant 0 : index
    %69 = vector.load %arg4[%c3, %c0_34, %c0_35] : memref<9x4x128xbf16, #tpu.memory_space<vmem>>, vector<1x4x128xbf16>
    %70 = vector.shape_cast %69 : vector<1x4x128xbf16> to vector<4x128xbf16>
    %cst_36 = arith.constant dense<0.000000e+00> : vector<256x128xf32>
    %71 = tpu.matmul %68, %70, %cst_36 {dimension_numbers = #tpu.dot_dimension_numbers<[1], [0], [0], [1], [0, 0, 1, 1], [], []>} : vector<256x4xbf16>, vector<4x128xbf16>, vector<256x128xf32> -> vector<256x128xf32>
    %72 = arith.addf %62, %71 : vector<256x128xf32>
    %c32_37 = arith.constant 32 : index
    %c0_38 = arith.constant 0 : index
    %73 = vector.load %arg6[%c32_37, %c0_38] : memref<320x4xbf16, #tpu.memory_space<vmem>>, vector<256x4xbf16>
    %c4 = arith.constant 4 : index
    %c0_39 = arith.constant 0 : index
    %c0_40 = arith.constant 0 : index
    %74 = vector.load %arg4[%c4, %c0_39, %c0_40] : memref<9x4x128xbf16, #tpu.memory_space<vmem>>, vector<1x4x128xbf16>
    %75 = vector.shape_cast %74 : vector<1x4x128xbf16> to vector<4x128xbf16>
    %cst_41 = arith.constant dense<0.000000e+00> : vector<256x128xf32>
    %76 = tpu.matmul %73, %75, %cst_41 {dimension_numbers = #tpu.dot_dimension_numbers<[1], [0], [0], [1], [0, 0, 1, 1], [], []>} : vector<256x4xbf16>, vector<4x128xbf16>, vector<256x128xf32> -> vector<256x128xf32>
    %77 = arith.addf %72, %76 : vector<256x128xf32>
    %c33 = arith.constant 33 : index
    %c0_42 = arith.constant 0 : index
    %78 = vector.load %arg6[%c33, %c0_42] : memref<320x4xbf16, #tpu.memory_space<vmem>>, vector<256x4xbf16>
    %cst_43 = arith.constant 0.000000e+00 : f32
    %79 = arith.truncf %cst_43 : f32 to bf16
    %80 = vector.shape_cast %36 : vector<256x1xi1> to vector<256x1xi1>
    %81 = vector.broadcast %80 : vector<256x1xi1> to vector<256x4xi1>
    %82 = vector.broadcast %79 : bf16 to vector<256x4xbf16>
    %83 = arith.select %81, %78, %82 : vector<256x4xi1>, vector<256x4xbf16>
    %c5 = arith.constant 5 : index
    %c0_44 = arith.constant 0 : index
    %c0_45 = arith.constant 0 : index
    %84 = vector.load %arg4[%c5, %c0_44, %c0_45] : memref<9x4x128xbf16, #tpu.memory_space<vmem>>, vector<1x4x128xbf16>
    %85 = vector.shape_cast %84 : vector<1x4x128xbf16> to vector<4x128xbf16>
    %cst_46 = arith.constant dense<0.000000e+00> : vector<256x128xf32>
    %86 = tpu.matmul %83, %85, %cst_46 {dimension_numbers = #tpu.dot_dimension_numbers<[1], [0], [0], [1], [0, 0, 1, 1], [], []>} : vector<256x4xbf16>, vector<4x128xbf16>, vector<256x128xf32> -> vector<256x128xf32>
    %87 = arith.addf %77, %86 : vector<256x128xf32>
    %c47 = arith.constant 47 : index
    %c0_47 = arith.constant 0 : index
    %88 = vector.load %arg6[%c47, %c0_47] : memref<320x4xbf16, #tpu.memory_space<vmem>>, vector<256x4xbf16>
    %cst_48 = arith.constant 0.000000e+00 : f32
    %89 = arith.truncf %cst_48 : f32 to bf16
    %90 = vector.shape_cast %34 : vector<256x1xi1> to vector<256x1xi1>
    %91 = vector.broadcast %90 : vector<256x1xi1> to vector<256x4xi1>
    %92 = vector.broadcast %89 : bf16 to vector<256x4xbf16>
    %93 = arith.select %91, %88, %92 : vector<256x4xi1>, vector<256x4xbf16>
    %c6 = arith.constant 6 : index
    %c0_49 = arith.constant 0 : index
    %c0_50 = arith.constant 0 : index
    %94 = vector.load %arg4[%c6, %c0_49, %c0_50] : memref<9x4x128xbf16, #tpu.memory_space<vmem>>, vector<1x4x128xbf16>
    %95 = vector.shape_cast %94 : vector<1x4x128xbf16> to vector<4x128xbf16>
    %cst_51 = arith.constant dense<0.000000e+00> : vector<256x128xf32>
    %96 = tpu.matmul %93, %95, %cst_51 {dimension_numbers = #tpu.dot_dimension_numbers<[1], [0], [0], [1], [0, 0, 1, 1], [], []>} : vector<256x4xbf16>, vector<4x128xbf16>, vector<256x128xf32> -> vector<256x128xf32>
    %97 = arith.addf %87, %96 : vector<256x128xf32>
    %c48 = arith.constant 48 : index
    %c0_52 = arith.constant 0 : index
    %98 = vector.load %arg6[%c48, %c0_52] : memref<320x4xbf16, #tpu.memory_space<vmem>>, vector<256x4xbf16>
    %c7 = arith.constant 7 : index
    %c0_53 = arith.constant 0 : index
    %c0_54 = arith.constant 0 : index
    %99 = vector.load %arg4[%c7, %c0_53, %c0_54] : memref<9x4x128xbf16, #tpu.memory_space<vmem>>, vector<1x4x128xbf16>
    %100 = vector.shape_cast %99 : vector<1x4x128xbf16> to vector<4x128xbf16>
    %cst_55 = arith.constant dense<0.000000e+00> : vector<256x128xf32>
    %101 = tpu.matmul %98, %100, %cst_55 {dimension_numbers = #tpu.dot_dimension_numbers<[1], [0], [0], [1], [0, 0, 1, 1], [], []>} : vector<256x4xbf16>, vector<4x128xbf16>, vector<256x128xf32> -> vector<256x128xf32>
    %102 = arith.addf %97, %101 : vector<256x128xf32>
    %c49 = arith.constant 49 : index
    %c0_56 = arith.constant 0 : index
    %103 = vector.load %arg6[%c49, %c0_56] : memref<320x4xbf16, #tpu.memory_space<vmem>>, vector<256x4xbf16>
    %cst_57 = arith.constant 0.000000e+00 : f32
    %104 = arith.truncf %cst_57 : f32 to bf16
    %105 = vector.shape_cast %36 : vector<256x1xi1> to vector<256x1xi1>
    %106 = vector.broadcast %105 : vector<256x1xi1> to vector<256x4xi1>
    %107 = vector.broadcast %104 : bf16 to vector<256x4xbf16>
    %108 = arith.select %106, %103, %107 : vector<256x4xi1>, vector<256x4xbf16>
    %c8 = arith.constant 8 : index
    %c0_58 = arith.constant 0 : index
    %c0_59 = arith.constant 0 : index
    %109 = vector.load %arg4[%c8, %c0_58, %c0_59] : memref<9x4x128xbf16, #tpu.memory_space<vmem>>, vector<1x4x128xbf16>
    %110 = vector.shape_cast %109 : vector<1x4x128xbf16> to vector<4x128xbf16>
    %cst_60 = arith.constant dense<0.000000e+00> : vector<256x128xf32>
    %111 = tpu.matmul %108, %110, %cst_60 {dimension_numbers = #tpu.dot_dimension_numbers<[1], [0], [0], [1], [0, 0, 1, 1], [], []>} : vector<256x4xbf16>, vector<4x128xbf16>, vector<256x128xf32> -> vector<256x128xf32>
    %112 = arith.addf %102, %111 : vector<256x128xf32>
    %c0_61 = arith.constant 0 : index
    %c0_62 = arith.constant 0 : index
    %c0_63 = arith.constant 0 : index
    %113 = vector.load %arg5[%c0_61, %c0_62, %c0_63] : memref<1x256x128xf32, #tpu.memory_space<vmem>>, vector<1x256x128xf32>
    %114 = vector.shape_cast %113 : vector<1x256x128xf32> to vector<256x128xf32>
    %115 = vector.shape_cast %112 : vector<256x128xf32> to vector<1x256x128xf32>
    tpu.vector_store %arg5[%c0_61, %c0_62, %c0_63], %115 {strides = array<i32>} : memref<1x256x128xf32, #tpu.memory_space<vmem>>, vector<1x256x128xf32>,
    return
  }
  func.func @transform_0(%arg0: i32) -> (i32, i32, i32) {
    %c0_i32 = arith.constant 0 : i32
    %c0_i32_0 = arith.constant 0 : i32
    %c0_i32_1 = arith.constant 0 : i32
    return %arg0, %c0_i32, %c0_i32_0 : i32, i32, i32
  }
  func.func @transform_1(%arg0: i32) -> (i32, i32) {
    %c0_i32 = arith.constant 0 : i32
    %c0_i32_0 = arith.constant 0 : i32
    %c0_i32_1 = arith.constant 0 : i32
    return %c0_i32, %c0_i32_0 : i32, i32
  }
  func.func @transform_2(%arg0: i32) -> (i32, i32) {
    %c0_i32 = arith.constant 0 : i32
    %c0_i32_0 = arith.constant 0 : i32
    %c0_i32_1 = arith.constant 0 : i32
    return %c0_i32, %c0_i32_0 : i32, i32
  }
  func.func @transform_3(%arg0: i32) -> (i32, i32, i32) {
    %c0_i32 = arith.constant 0 : i32
    %c0_i32_0 = arith.constant 0 : i32
    %c0_i32_1 = arith.constant 0 : i32
    %c0_i32_2 = arith.constant 0 : i32
    return %c0_i32, %c0_i32_0, %c0_i32_1 : i32, i32, i32
  }
  func.func @transform_4(%arg0: i32) -> (i32, i32, i32) {
    %c0_i32 = arith.constant 0 : i32
    %c0_i32_0 = arith.constant 0 : i32
    %c0_i32_1 = arith.constant 0 : i32
    return %arg0, %c0_i32, %c0_i32_0 : i32, i32, i32
  }
}

</mosaic_0001>

<llo_original>
// kernel: tpu_custom_call.1
$region0: #{tpu_custom_call.1}
  #allocation0 [shape = 'u32[]', space=smem, size = 0x4, offset = 0x4, fixed_abs, tag = 'smem constant byte address 0x4 - core index']
  #allocation1 [shape = 'u32[72,128]{1,0:T(1,128)}', space=vmem, size = 0x9000, scoped, tag = 'internal scratch']
  #allocation2 [shape = 'bf16[320,4]{1,0:T(8,128)(2,1)}', space=vmem, size = 0x14000, scoped, tag = 'scratch operand']
  %s0 = inlined_call_operand.vmem [shape: f32[2,256,4], index: 0, kind: input, shape index: {}]
  %s1 = inlined_call_operand.vmem [shape: f32[1,4], index: 1, kind: input, shape index: {}]
  %s2 = inlined_call_operand.vmem [shape: f32[1,4], index: 2, kind: input, shape index: {}]
  %s3 = inlined_call_operand.vmem [shape: bf16[9,4,128], index: 3, kind: input, shape index: {}]
  %s4 = inlined_call_operand.hbm [shape: f32[2,256,128], index: 4, kind: output, shape index: {}]
  %s5 = sld [smem:[#allocation0]]
  $region49: #{tpu_custom_call.1} parent=0
    _
  %s7 = ssub.s32 1, %s5
  %s8 = scalar_select 0, %s7, %s5
  $region1: #{tpu_custom_call.1} parent=0
    #allocation3 [shape = 'u8[262144]{0}', space=vmem, size = 0x40000, scoped, tag = 'output window, operand 0']
    #allocation4 [shape = 's32[2]{0}', space=sflag, size = 0x8, scoped, tag = 'scoped memory for tpu_custom_call.1']
    %9 = vsyncpa [#allocation4], 0
    %s10 = scalar_lea.sflag [#allocation4], 1
    %11 = vsyncpa %s10, 0
    loop: start=0, step=1, limit=4
    $region2: #{tpu_custom_call.1} parent=1 // loop_pre_header
      _
    $region3: #{tpu_custom_call.1} parent=1 // loop_header
      %s13 = sphi 0, %s17
      %p14 = scmp.ge.s32.totalorder %s13, 4
      %s23 = sphi 0, %s25
      %s26 = sphi 0, %s23
      %s27 = sphi 0, %s26
      %s43 = sphi 0, %s27
      %s47 = sphi 0, %s47
      %s49 = sphi 0, %s47
      %s50 = sphi 0, %s49
      %s64 = sphi 0, %s50
      %s68 = sphi 0, %s68
      %s70 = sphi 0, %s68
      %s71 = sphi 0, %s70
      %s85 = sphi 0, %s71
      %s89 = sphi 0, %s89
      %s91 = sphi 0, %s89
      %s92 = sphi 0, %s91
      %s106 = sphi 0, %s92
      %s112 = sphi 0, %s114
      %s115 = sphi 0, %s112
      %s116 = sphi 0, %s115
      %s132 = sphi 0, %s116
    $region4: #{tpu_custom_call.1} parent=1 // loop_header_branch
      %16 = sbr.rel (%p14) target = $region8
    $region5: #{tpu_custom_call.1} parent=1 // loop_body
      %s18 = ssub.s32 %s13, 1
      %s19 = ssub.s32 %s13, 2
      %s20 = sadd.s32 %s13, 1
      %s21 = ssub.s32 %s13, %s20
      %p22 = scmp.eq.s32.totalorder %s21, 0
      %s24 = sadd.s32 %s23, 1
      %s25 = scalar_select %p22, %s23, %s24
      %p28 = pneg %p22
      %p29 = scmp.eq.s32.totalorder %s13, 1
      %p30 = por %p28, %p29
      %p31 = scmp.ne.s32.totalorder %s23, %s26
      %p32 = scmp.eq.s32.totalorder %s13, 0
      %p33 = por %p31, %p32
      %p34 = scmp.ne.s32.totalorder %s23, %s26
      %p35 = scmp.eq.s32.totalorder %s18, 1
      %p36 = por %p34, %p35
      %p37 = scmp.ne.s32.totalorder %s26, %s27
      %p38 = scmp.eq.s32.totalorder %s18, 0
      %p39 = por %p37, %p38
      %p40 = scmp.ne.s32.totalorder %s26, %s27
      %p41 = scmp.eq.s32.totalorder %s19, 1
      %p42 = por %p40, %p41
      %p44 = scmp.ne.s32.totalorder %s27, %s43
      %p45 = scmp.eq.s32.totalorder %s19, 0
      %p46 = por %p44, %p45
      %s48 = sadd.s32 %s47, 1
      %p51 = scmp.eq.s32.totalorder %s13, 1
      %p52 = scmp.ne.s32.totalorder %s47, %s49
      %p53 = scmp.eq.s32.totalorder %s13, 0
      %p54 = por %p52, %p53
      %p55 = scmp.ne.s32.totalorder %s47, %s49
      %p56 = scmp.eq.s32.totalorder %s18, 1
      %p57 = por %p55, %p56
      %p58 = scmp.ne.s32.totalorder %s49, %s50
      %p59 = scmp.eq.s32.totalorder %s18, 0
      %p60 = por %p58, %p59
      %p61 = scmp.ne.s32.totalorder %s49, %s50
      %p62 = scmp.eq.s32.totalorder %s19, 1
      %p63 = por %p61, %p62
      %p65 = scmp.ne.s32.totalorder %s50, %s64
      %p66 = scmp.eq.s32.totalorder %s19, 0
      %p67 = por %p65, %p66
      %s69 = sadd.s32 %s68, 1
      %p72 = scmp.eq.s32.totalorder %s13, 1
      %p73 = scmp.ne.s32.totalorder %s68, %s70
      %p74 = scmp.eq.s32.totalorder %s13, 0
      %p75 = por %p73, %p74
      %p76 = scmp.ne.s32.totalorder %s68, %s70
      %p77 = scmp.eq.s32.totalorder %s18, 1
      %p78 = por %p76, %p77
      %p79 = scmp.ne.s32.totalorder %s70, %s71
      %p80 = scmp.eq.s32.totalorder %s18, 0
      %p81 = por %p79, %p80
      %p82 = scmp.ne.s32.totalorder %s70, %s71
      %p83 = scmp.eq.s32.totalorder %s19, 1
      %p84 = por %p82, %p83
      %p86 = scmp.ne.s32.totalorder %s71, %s85
      %p87 = scmp.eq.s32.totalorder %s19, 0
      %p88 = por %p86, %p87
      %s90 = sadd.s32 %s89, 1
      %p93 = scmp.eq.s32.totalorder %s13, 1
      %p94 = scmp.ne.s32.totalorder %s89, %s91
      %p95 = scmp.eq.s32.totalorder %s13, 0
      %p96 = por %p94, %p95
      %p97 = scmp.ne.s32.totalorder %s89, %s91
      %p98 = scmp.eq.s32.totalorder %s18, 1
      %p99 = por %p97, %p98
      %p100 = scmp.ne.s32.totalorder %s91, %s92
      %p101 = scmp.eq.s32.totalorder %s18, 0
      %p102 = por %p100, %p101
      %p103 = scmp.ne.s32.totalorder %s91, %s92
      %p104 = scmp.eq.s32.totalorder %s19, 1
      %p105 = por %p103, %p104
      %p107 = scmp.ne.s32.totalorder %s92, %s106
      %p108 = scmp.eq.s32.totalorder %s19, 0
      %p109 = por %p107, %p108
      %s110 = ssub.s32 %s13, %s20
      %p111 = scmp.eq.s32.totalorder %s110, 0
      %s113 = sadd.s32 %s112, 1
      %s114 = scalar_select %p111, %s112, %s113
      %p117 = pneg %p111
      %p118 = scmp.eq.s32.totalorder %s13, 1
      %p119 = por %p117, %p118
      %p120 = scmp.ne.s32.totalorder %s112, %s115
      %p121 = scmp.eq.s32.totalorder %s13, 0
      %p122 = por %p120, %p121
      %p123 = scmp.ne.s32.totalorder %s112, %s115
      %p124 = scmp.eq.s32.totalorder %s18, 1
      %p125 = por %p123, %p124
      %p126 = scmp.ne.s32.totalorder %s115, %s116
      %p127 = scmp.eq.s32.totalorder %s18, 0
      %p128 = por %p126, %p127
      %p129 = scmp.ne.s32.totalorder %s115, %s116
      %p130 = scmp.eq.s32.totalorder %s19, 1
      %p131 = por %p129, %p130
      %p133 = scmp.ne.s32.totalorder %s116, %s132
      %p134 = scmp.eq.s32.totalorder %s19, 0
      %p135 = por %p133, %p134
      %p136 = scmp.le.s32.totalorder 1, %s13
      %p137 = scmp.lt.s32.totalorder %s13, 3
      %p138 = pnand %p136, %p137
      %p139 = pneg %p138
      // Predicated region
      $region9: #{tpu_custom_call.1} parent=5 // pred_check
        _
      $region10: #{tpu_custom_call.1} parent=5 // pred_check_branch
        %141 = sbr.rel (%p138) target = $region12
      $region11: #{tpu_custom_call.1} parent=5 // pred_region
        %s142 = ssub.s32 %s13, 1
        // Predicated region
        $region13: #{tpu_custom_call.1} parent=11 // pred_check
          %p143 = pneg %p60
        $region14: #{tpu_custom_call.1} parent=11 // pred_check_branch
          %145 = sbr.rel (%p143) target = $region16
        $region15: #{tpu_custom_call.1} parent=11 // pred_region
          _
        $region16: #{tpu_custom_call.1} parent=11 // pred_fallthru
          _
        // Predicated region
        $region17: #{tpu_custom_call.1} parent=11 // pred_check
          %p146 = pneg %p81
        $region18: #{tpu_custom_call.1} parent=11 // pred_check_branch
          %148 = sbr.rel (%p146) target = $region20
        $region19: #{tpu_custom_call.1} parent=11 // pred_region
          _
        $region20: #{tpu_custom_call.1} parent=11 // pred_fallthru
          _
        // Predicated region
        $region21: #{tpu_custom_call.1} parent=11 // pred_check
          %p149 = pneg %p102
        $region22: #{tpu_custom_call.1} parent=11 // pred_check_branch
          %151 = sbr.rel (%p149) target = $region24
        $region23: #{tpu_custom_call.1} parent=11 // pred_region
          _
        $region24: #{tpu_custom_call.1} parent=11 // pred_fallthru
          _
      $region12: #{tpu_custom_call.1} parent=5 // pred_fallthru
        _
      %p152 = scmp.lt.s32.totalorder %s13, 2
      // Predicated region
      $region25: #{tpu_custom_call.1} parent=5 // pred_check
        %p153 = pneg %p152
      $region26: #{tpu_custom_call.1} parent=5 // pred_check_branch
        %155 = sbr.rel (%p153) target = $region28
      $region27: #{tpu_custom_call.1} parent=5 // pred_region
        // Predicated region
        $region29: #{tpu_custom_call.1} parent=27 // pred_check
          %p156 = pneg %p33
        $region30: #{tpu_custom_call.1} parent=27 // pred_check_branch
          %158 = sbr.rel (%p156) target = $region32
        $region31: #{tpu_custom_call.1} parent=27 // pred_region
          %p159 = scmp.lt.s32.totalorder %s13, 1
          %s160 = scalar_select %p159, %s13, 1
          %s161 = smul.addr %s160, 32
          %s162 = smul.addr %s161, 8
          %s163 = scalar_lea.vmem %s0, %s162
        $region32: #{tpu_custom_call.1} parent=27 // pred_fallthru
          _
      $region28: #{tpu_custom_call.1} parent=5 // pred_fallthru
        _
      %p164 = scmp.le.s32.totalorder 1, %s13
      %p165 = scmp.lt.s32.totalorder %s13, 3
      %p166 = pnand %p164, %p165
      %p167 = pneg %p166
      // Predicated region
      $region33: #{tpu_custom_call.1} parent=5 // pred_check
        _
      $region34: #{tpu_custom_call.1} parent=5 // pred_check_branch
        %169 = sbr.rel (%p166) target = $region36
      $region35: #{tpu_custom_call.1} parent=5 // pred_region
        %s170 = ssub.s32 %s13, 1
        %p171 = scmp.lt.s32.totalorder %s18, 1
        %s172 = scalar_select %p171, %s18, 1
        %s173 = smul.addr %s172, 32
        %s174 = smul.addr %s173, 8
        %s175 = scalar_lea.vmem %s0, %s174
        %p176 = pneg %p39
        %p177 = pneg %p36
        %p178 = pneg %p60
        %p179 = pneg %p57
        %p180 = pneg %p81
        %p181 = pneg %p78
        %p182 = pneg %p102
        %p183 = pneg %p99
        %p184 = pneg %p128
        %p185 = pneg %p125
        %s186 = sand.u32 %s115, 1
        %s187 = scalar_lea.sflag [#allocation4], %s186
        %s188 = sand.u32 %s115, 1
        %s189 = smul.addr %s188, 256
        %s190 = scalar_lea.vmem [#allocation3], %s189
        %p191 = scmp.lt.s32.totalorder %s18, 1
        %s192 = scalar_select %p191, %s18, 1
        %s193 = smul.addr %s192, 32
        %s194 = smul.addr %s193, 8
        %s195 = scalar_lea.vmem %s0, %s194
        %v199 = vld [vmem:[%s195] sm:$0xff]
        %v200 = vld [vmem:[%s195 + $0x8] sm:$0xff]
        %v201 = vld [vmem:[%s195 + $0x10] sm:$0xff]
        %v202 = vld [vmem:[%s195 + $0x18] sm:$0xff]
        %v203 = vld [vmem:[%s195 + $0x20] sm:$0xff]
        %v204 = vld [vmem:[%s195 + $0x28] sm:$0xff]
        %v205 = vld [vmem:[%s195 + $0x30] sm:$0xff]
        %v206 = vld [vmem:[%s195 + $0x38] sm:$0xff]
        %v207 = vld [vmem:[%s195 + $0x40] sm:$0xff]
        %v208 = vld [vmem:[%s195 + $0x48] sm:$0xff]
        %v209 = vld [vmem:[%s195 + $0x50] sm:$0xff]
        %v210 = vld [vmem:[%s195 + $0x58] sm:$0xff]
        %v211 = vld [vmem:[%s195 + $0x60] sm:$0xff]
        %v212 = vld [vmem:[%s195 + $0x68] sm:$0xff]
        %v213 = vld [vmem:[%s195 + $0x70] sm:$0xff]
        %v214 = vld [vmem:[%s195 + $0x78] sm:$0xff]
        %v215 = vld [vmem:[%s195 + $0x80] sm:$0xff]
        %v216 = vld [vmem:[%s195 + $0x88] sm:$0xff]
        %v217 = vld [vmem:[%s195 + $0x90] sm:$0xff]
        %v218 = vld [vmem:[%s195 + $0x98] sm:$0xff]
        %v219 = vld [vmem:[%s195 + $0xa0] sm:$0xff]
        %v220 = vld [vmem:[%s195 + $0xa8] sm:$0xff]
        %v221 = vld [vmem:[%s195 + $0xb0] sm:$0xff]
        %v222 = vld [vmem:[%s195 + $0xb8] sm:$0xff]
        %v223 = vld [vmem:[%s195 + $0xc0] sm:$0xff]
        %v224 = vld [vmem:[%s195 + $0xc8] sm:$0xff]
        %v225 = vld [vmem:[%s195 + $0xd0] sm:$0xff]
        %v226 = vld [vmem:[%s195 + $0xd8] sm:$0xff]
        %v227 = vld [vmem:[%s195 + $0xe0] sm:$0xff]
        %v228 = vld [vmem:[%s195 + $0xe8] sm:$0xff]
        %v229 = vld [vmem:[%s195 + $0xf0] sm:$0xff]
        %v230 = vld [vmem:[%s195 + $0xf8] sm:$0xff]
        %v231 = vld [vmem:[%s1] sm:$0x1]
        %v233 = vperm.slane %v231, 0
        %v235 = vmul.f32 %v199, %v233
        %v236 = vmul.f32 %v200, %v233
        %v237 = vmul.f32 %v201, %v233
        %v238 = vmul.f32 %v202, %v233
        %v239 = vmul.f32 %v203, %v233
        %v240 = vmul.f32 %v204, %v233
        %v241 = vmul.f32 %v205, %v233
        %v242 = vmul.f32 %v206, %v233
        %v243 = vmul.f32 %v207, %v233
        %v244 = vmul.f32 %v208, %v233
        %v245 = vmul.f32 %v209, %v233
        %v246 = vmul.f32 %v210, %v233
        %v247 = vmul.f32 %v211, %v233
        %v248 = vmul.f32 %v212, %v233
        %v249 = vmul.f32 %v213, %v233
        %v250 = vmul.f32 %v214, %v233
        %v251 = vmul.f32 %v215, %v233
        %v252 = vmul.f32 %v216, %v233
        %v253 = vmul.f32 %v217, %v233
        %v254 = vmul.f32 %v218, %v233
        %v255 = vmul.f32 %v219, %v233
        %v256 = vmul.f32 %v220, %v233
        %v257 = vmul.f32 %v221, %v233
        %v258 = vmul.f32 %v222, %v233
        %v259 = vmul.f32 %v223, %v233
        %v260 = vmul.f32 %v224, %v233
        %v261 = vmul.f32 %v225, %v233
        %v262 = vmul.f32 %v226, %v233
        %v263 = vmul.f32 %v227, %v233
        %v264 = vmul.f32 %v228, %v233
        %v265 = vmul.f32 %v229, %v233
        %v266 = vmul.f32 %v230, %v233
        %v267 = vld [vmem:[%s2] sm:$0x1]
        %v269 = vperm.slane %v267, 0
        %v271 = vadd.f32 %v235, %v269
        %v272 = vadd.f32 %v236, %v269
        %v273 = vadd.f32 %v237, %v269
        %v274 = vadd.f32 %v238, %v269
        %v275 = vadd.f32 %v239, %v269
        %v276 = vadd.f32 %v240, %v269
        %v277 = vadd.f32 %v241, %v269
        %v278 = vadd.f32 %v242, %v269
        %v279 = vadd.f32 %v243, %v269
        %v280 = vadd.f32 %v244, %v269
        %v281 = vadd.f32 %v245, %v269
        %v282 = vadd.f32 %v246, %v269
        %v283 = vadd.f32 %v247, %v269
        %v284 = vadd.f32 %v248, %v269
        %v285 = vadd.f32 %v249, %v269
        %v286 = vadd.f32 %v250, %v269
        %v287 = vadd.f32 %v251, %v269
        %v288 = vadd.f32 %v252, %v269
        %v289 = vadd.f32 %v253, %v269
        %v290 = vadd.f32 %v254, %v269
        %v291 = vadd.f32 %v255, %v269
        %v292 = vadd.f32 %v256, %v269
        %v293 = vadd.f32 %v257, %v269
        %v294 = vadd.f32 %v258, %v269
        %v295 = vadd.f32 %v259, %v269
        %v296 = vadd.f32 %v260, %v269
        %v297 = vadd.f32 %v261, %v269
        %v298 = vadd.f32 %v262, %v269
        %v299 = vadd.f32 %v263, %v269
        %v300 = vadd.f32 %v264, %v269
        %v301 = vadd.f32 %v265, %v269
        %v302 = vadd.f32 %v266, %v269
        %v303 = vmax.f32 %v271, 0.0
        %v304 = vmax.f32 %v272, 0.0
        %v305 = vmax.f32 %v273, 0.0
        %v306 = vmax.f32 %v274, 0.0
        %v307 = vmax.f32 %v275, 0.0
        %v308 = vmax.f32 %v276, 0.0
        %v309 = vmax.f32 %v277, 0.0
        %v310 = vmax.f32 %v278, 0.0
        %v311 = vmax.f32 %v279, 0.0
        %v312 = vmax.f32 %v280, 0.0
        %v313 = vmax.f32 %v281, 0.0
        %v314 = vmax.f32 %v282, 0.0
        %v315 = vmax.f32 %v283, 0.0
        %v316 = vmax.f32 %v284, 0.0
        %v317 = vmax.f32 %v285, 0.0
        %v318 = vmax.f32 %v286, 0.0
        %v319 = vmax.f32 %v287, 0.0
        %v320 = vmax.f32 %v288, 0.0
        %v321 = vmax.f32 %v289, 0.0
        %v322 = vmax.f32 %v290, 0.0
        %v323 = vmax.f32 %v291, 0.0
        %v324 = vmax.f32 %v292, 0.0
        %v325 = vmax.f32 %v293, 0.0
        %v326 = vmax.f32 %v294, 0.0
        %v327 = vmax.f32 %v295, 0.0
        %v328 = vmax.f32 %v296, 0.0
        %v329 = vmax.f32 %v297, 0.0
        %v330 = vmax.f32 %v298, 0.0
        %v331 = vmax.f32 %v299, 0.0
        %v332 = vmax.f32 %v300, 0.0
        %v333 = vmax.f32 %v301, 0.0
        %v334 = vmax.f32 %v302, 0.0
        %vm335 = vcmask 27648
        %336 = vst.msk [vmem:[#allocation2] sm:$0xf] %vm335, 0
        %337 = vst.msk [vmem:[#allocation2 + $0x4] sm:$0xf] %vm335, 0
        %338 = vst.msk [vmem:[#allocation2 + $0x8] sm:$0xf] %vm335, 0
        %339 = vst.msk [vmem:[#allocation2 + $0xc] sm:$0xf] %vm335, 0
        %340 = vst.msk [vmem:[#allocation2 + $0x90] sm:$0xf] %vm335, 0
        %341 = vst.msk [vmem:[#allocation2 + $0x94] sm:$0xf] %vm335, 0
        %342 = vst.msk [vmem:[#allocation2 + $0x98] sm:$0xf] %vm335, 0
        %343 = vst.msk [vmem:[#allocation2 + $0x9c] sm:$0xf] %vm335, 0
        %v344 = vpack.c.bf16 %v303, %v303
        %v345 = vpack.c.bf16 %v304, %v304
        %v346 = vpack.c.bf16 %v305, %v305
        %v347 = vpack.c.bf16 %v306, %v306
        %v348 = vpack.c.bf16 %v307, %v307
        %v349 = vpack.c.bf16 %v308, %v308
        %v350 = vpack.c.bf16 %v309, %v309
        %v351 = vpack.c.bf16 %v310, %v310
        %v352 = vpack.c.bf16 %v311, %v311
        %v353 = vpack.c.bf16 %v312, %v312
        %v354 = vpack.c.bf16 %v313, %v313
        %v355 = vpack.c.bf16 %v314, %v314
        %v356 = vpack.c.bf16 %v315, %v315
        %v357 = vpack.c.bf16 %v316, %v316
        %v358 = vpack.c.bf16 %v317, %v317
        %v359 = vpack.c.bf16 %v318, %v318
        %v360 = vpack.c.bf16 %v319, %v319
        %v361 = vpack.c.bf16 %v320, %v320
        %v362 = vpack.c.bf16 %v321, %v321
        %v363 = vpack.c.bf16 %v322, %v322
        %v364 = vpack.c.bf16 %v323, %v323
        %v365 = vpack.c.bf16 %v324, %v324
        %v366 = vpack.c.bf16 %v325, %v325
        %v367 = vpack.c.bf16 %v326, %v326
        %v368 = vpack.c.bf16 %v327, %v327
        %v369 = vpack.c.bf16 %v328, %v328
        %v370 = vpack.c.bf16 %v329, %v329
        %v371 = vpack.c.bf16 %v330, %v330
        %v372 = vpack.c.bf16 %v331, %v331
        %v373 = vpack.c.bf16 %v332, %v332
        %v374 = vpack.c.bf16 %v333, %v333
        %v375 = vpack.c.bf16 %v334, %v334
        %376 = vst.msk [vmem:[#allocation2 + $0x10] sm:$0xf] %vm335, %v344
        %377 = vst.msk [vmem:[#allocation2 + $0x14] sm:$0xf] %vm335, %v345
        %378 = vst.msk [vmem:[#allocation2 + $0x18] sm:$0xf] %vm335, %v346
        %379 = vst.msk [vmem:[#allocation2 + $0x1c] sm:$0xf] %vm335, %v347
        %380 = vst.msk [vmem:[#allocation2 + $0x20] sm:$0xf] %vm335, %v348
        %381 = vst.msk [vmem:[#allocation2 + $0x24] sm:$0xf] %vm335, %v349
        %382 = vst.msk [vmem:[#allocation2 + $0x28] sm:$0xf] %vm335, %v350
        %383 = vst.msk [vmem:[#allocation2 + $0x2c] sm:$0xf] %vm335, %v351
        %384 = vst.msk [vmem:[#allocation2 + $0x30] sm:$0xf] %vm335, %v352
        %385 = vst.msk [vmem:[#allocation2 + $0x34] sm:$0xf] %vm335, %v353
        %386 = vst.msk [vmem:[#allocation2 + $0x38] sm:$0xf] %vm335, %v354
        %387 = vst.msk [vmem:[#allocation2 + $0x3c] sm:$0xf] %vm335, %v355
        %388 = vst.msk [vmem:[#allocation2 + $0x40] sm:$0xf] %vm335, %v356
        %389 = vst.msk [vmem:[#allocation2 + $0x44] sm:$0xf] %vm335, %v357
        %390 = vst.msk [vmem:[#allocation2 + $0x48] sm:$0xf] %vm335, %v358
        %391 = vst.msk [vmem:[#allocation2 + $0x4c] sm:$0xf] %vm335, %v359
        %392 = vst.msk [vmem:[#allocation2 + $0x50] sm:$0xf] %vm335, %v360
        %393 = vst.msk [vmem:[#allocation2 + $0x54] sm:$0xf] %vm335, %v361
        %394 = vst.msk [vmem:[#allocation2 + $0x58] sm:$0xf] %vm335, %v362
        %395 = vst.msk [vmem:[#allocation2 + $0x5c] sm:$0xf] %vm335, %v363
        %396 = vst.msk [vmem:[#allocation2 + $0x60] sm:$0xf] %vm335, %v364
        %397 = vst.msk [vmem:[#allocation2 + $0x64] sm:$0xf] %vm335, %v365
        %398 = vst.msk [vmem:[#allocation2 + $0x68] sm:$0xf] %vm335, %v366
        %399 = vst.msk [vmem:[#allocation2 + $0x6c] sm:$0xf] %vm335, %v367
        %400 = vst.msk [vmem:[#allocation2 + $0x70] sm:$0xf] %vm335, %v368
        %401 = vst.msk [vmem:[#allocation2 + $0x74] sm:$0xf] %vm335, %v369
        %402 = vst.msk [vmem:[#allocation2 + $0x78] sm:$0xf] %vm335, %v370
        %403 = vst.msk [vmem:[#allocation2 + $0x7c] sm:$0xf] %vm335, %v371
        %404 = vst.msk [vmem:[#allocation2 + $0x80] sm:$0xf] %vm335, %v372
        %405 = vst.msk [vmem:[#allocation2 + $0x84] sm:$0xf] %vm335, %v373
        %406 = vst.msk [vmem:[#allocation2 + $0x88] sm:$0xf] %vm335, %v374
        %407 = vst.msk [vmem:[#allocation2 + $0x8c] sm:$0xf] %vm335, %v375
        %v408 = vlaneseq
        %v409 = vshrl.u32 %v408, 7
        %v410 = vadd.s32 %v409, 8
        %v411 = vadd.s32 %v409, 16
        %v412 = vadd.s32 %v409, 24
        %v413 = vadd.s32 %v409, 32
        %v414 = vadd.s32 %v409, 40
        %v415 = vadd.s32 %v409, 48
        %v416 = vadd.s32 %v409, 56
        %v417 = vadd.s32 %v409, 64
        %v418 = vadd.s32 %v409, 72
        %v419 = vadd.s32 %v409, 80
        %v420 = vadd.s32 %v409, 88
        %v421 = vadd.s32 %v409, 96
        %v422 = vadd.s32 %v409, 104
        %v423 = vadd.s32 %v409, 112
        %v424 = vadd.s32 %v409, 120
        %v425 = vadd.s32 %v409, 128
        %v426 = vadd.s32 %v409, 136
        %v427 = vadd.s32 %v409, 144
        %v428 = vadd.s32 %v409, 152
        %v429 = vadd.s32 %v409, 160
        %v430 = vadd.s32 %v409, 168
        %v431 = vadd.s32 %v409, 176
        %v432 = vadd.s32 %v409, 184
        %v433 = vadd.s32 %v409, 192
        %v434 = vadd.s32 %v409, 200
        %v435 = vadd.s32 %v409, 208
        %v436 = vadd.s32 %v409, 216
        %v437 = vadd.s32 %v409, 224
        %v438 = vadd.s32 %v409, 232
        %v439 = vadd.s32 %v409, 240
        %v440 = vadd.s32 %v409, 248
        %vm441 = vcmp.lt.s32.totalorder %v409, 0
        %v442 = vsub.s32 0, %v409
        %v443 = vsel %vm441, %v442, %v409
        %v444 = vshrl.u32 %v443, 4
        %v445 = vand.u32 %v443, 15
        %v446 = vsub.s32 0, %v445
        %v447 = vsel %vm441, %v446, %v445
        %vm448 = vcmp.lt.s32.totalorder %v410, 0
        %v449 = vsub.s32 0, %v410
        %v450 = vsel %vm448, %v449, %v410
        %v451 = vshrl.u32 %v450, 4
        %v452 = vand.u32 %v450, 15
        %v453 = vsub.s32 0, %v452
        %v454 = vsel %vm448, %v453, %v452
        %vm455 = vcmp.lt.s32.totalorder %v411, 0
        %v456 = vsub.s32 0, %v411
        %v457 = vsel %vm455, %v456, %v411
        %v458 = vshrl.u32 %v457, 4
        %v459 = vand.u32 %v457, 15
        %v460 = vsub.s32 0, %v459
        %v461 = vsel %vm455, %v460, %v459
        %vm462 = vcmp.lt.s32.totalorder %v412, 0
        %v463 = vsub.s32 0, %v412
        %v464 = vsel %vm462, %v463, %v412
        %v465 = vshrl.u32 %v464, 4
        %v466 = vand.u32 %v464, 15
        %v467 = vsub.s32 0, %v466
        %v468 = vsel %vm462, %v467, %v466
        %vm469 = vcmp.lt.s32.totalorder %v413, 0
        %v470 = vsub.s32 0, %v413
        %v471 = vsel %vm469, %v470, %v413
        %v472 = vshrl.u32 %v471, 4
        %v473 = vand.u32 %v471, 15
        %v474 = vsub.s32 0, %v473
        %v475 = vsel %vm469, %v474, %v473
        %vm476 = vcmp.lt.s32.totalorder %v414, 0
        %v477 = vsub.s32 0, %v414
        %v478 = vsel %vm476, %v477, %v414
        %v479 = vshrl.u32 %v478, 4
        %v480 = vand.u32 %v478, 15
        %v481 = vsub.s32 0, %v480
        %v482 = vsel %vm476, %v481, %v480
        %vm483 = vcmp.lt.s32.totalorder %v415, 0
        %v484 = vsub.s32 0, %v415
        %v485 = vsel %vm483, %v484, %v415
        %v486 = vshrl.u32 %v485, 4
        %v487 = vand.u32 %v485, 15
        %v488 = vsub.s32 0, %v487
        %v489 = vsel %vm483, %v488, %v487
        %vm490 = vcmp.lt.s32.totalorder %v416, 0
        %v491 = vsub.s32 0, %v416
        %v492 = vsel %vm490, %v491, %v416
        %v493 = vshrl.u32 %v492, 4
        %v494 = vand.u32 %v492, 15
        %v495 = vsub.s32 0, %v494
        %v496 = vsel %vm490, %v495, %v494
        %vm497 = vcmp.lt.s32.totalorder %v417, 0
        %v498 = vsub.s32 0, %v417
        %v499 = vsel %vm497, %v498, %v417
        %v500 = vshrl.u32 %v499, 4
        %v501 = vand.u32 %v499, 15
        %v502 = vsub.s32 0, %v501
        %v503 = vsel %vm497, %v502, %v501
        %vm504 = vcmp.lt.s32.totalorder %v418, 0
        %v505 = vsub.s32 0, %v418
        %v506 = vsel %vm504, %v505, %v418
        %v507 = vshrl.u32 %v506, 4
        %v508 = vand.u32 %v506, 15
        %v509 = vsub.s32 0, %v508
        %v510 = vsel %vm504, %v509, %v508
        %vm511 = vcmp.lt.s32.totalorder %v419, 0
        %v512 = vsub.s32 0, %v419
        %v513 = vsel %vm511, %v512, %v419
        %v514 = vshrl.u32 %v513, 4
        %v515 = vand.u32 %v513, 15
        %v516 = vsub.s32 0, %v515
        %v517 = vsel %vm511, %v516, %v515
        %vm518 = vcmp.lt.s32.totalorder %v420, 0
        %v519 = vsub.s32 0, %v420
        %v520 = vsel %vm518, %v519, %v420
        %v521 = vshrl.u32 %v520, 4
        %v522 = vand.u32 %v520, 15
        %v523 = vsub.s32 0, %v522
        %v524 = vsel %vm518, %v523, %v522
        %vm525 = vcmp.lt.s32.totalorder %v421, 0
        %v526 = vsub.s32 0, %v421
        %v527 = vsel %vm525, %v526, %v421
        %v528 = vshrl.u32 %v527, 4
        %v529 = vand.u32 %v527, 15
        %v530 = vsub.s32 0, %v529
        %v531 = vsel %vm525, %v530, %v529
        %vm532 = vcmp.lt.s32.totalorder %v422, 0
        %v533 = vsub.s32 0, %v422
        %v534 = vsel %vm532, %v533, %v422
        %v535 = vshrl.u32 %v534, 4
        %v536 = vand.u32 %v534, 15
        %v537 = vsub.s32 0, %v536
        %v538 = vsel %vm532, %v537, %v536
        %vm539 = vcmp.lt.s32.totalorder %v423, 0
        %v540 = vsub.s32 0, %v423
        %v541 = vsel %vm539, %v540, %v423
        %v542 = vshrl.u32 %v541, 4
        %v543 = vand.u32 %v541, 15
        %v544 = vsub.s32 0, %v543
        %v545 = vsel %vm539, %v544, %v543
        %vm546 = vcmp.lt.s32.totalorder %v424, 0
        %v547 = vsub.s32 0, %v424
        %v548 = vsel %vm546, %v547, %v424
        %v549 = vshrl.u32 %v548, 4
        %v550 = vand.u32 %v548, 15
        %v551 = vsub.s32 0, %v550
        %v552 = vsel %vm546, %v551, %v550
        %vm553 = vcmp.lt.s32.totalorder %v425, 0
        %v554 = vsub.s32 0, %v425
        %v555 = vsel %vm553, %v554, %v425
        %v556 = vshrl.u32 %v555, 4
        %v557 = vand.u32 %v555, 15
        %v558 = vsub.s32 0, %v557
        %v559 = vsel %vm553, %v558, %v557
        %vm560 = vcmp.lt.s32.totalorder %v426, 0
        %v561 = vsub.s32 0, %v426
        %v562 = vsel %vm560, %v561, %v426
        %v563 = vshrl.u32 %v562, 4
        %v564 = vand.u32 %v562, 15
        %v565 = vsub.s32 0, %v564
        %v566 = vsel %vm560, %v565, %v564
        %vm567 = vcmp.lt.s32.totalorder %v427, 0
        %v568 = vsub.s32 0, %v427
        %v569 = vsel %vm567, %v568, %v427
        %v570 = vshrl.u32 %v569, 4
        %v571 = vand.u32 %v569, 15
        %v572 = vsub.s32 0, %v571
        %v573 = vsel %vm567, %v572, %v571
        %vm574 = vcmp.lt.s32.totalorder %v428, 0
        %v575 = vsub.s32 0, %v428
        %v576 = vsel %vm574, %v575, %v428
        %v577 = vshrl.u32 %v576, 4
        %v578 = vand.u32 %v576, 15
        %v579 = vsub.s32 0, %v578
        %v580 = vsel %vm574, %v579, %v578
        %vm581 = vcmp.lt.s32.totalorder %v429, 0
        %v582 = vsub.s32 0, %v429
        %v583 = vsel %vm581, %v582, %v429
        %v584 = vshrl.u32 %v583, 4
        %v585 = vand.u32 %v583, 15
        %v586 = vsub.s32 0, %v585
        %v587 = vsel %vm581, %v586, %v585
        %vm588 = vcmp.lt.s32.totalorder %v430, 0
        %v589 = vsub.s32 0, %v430
        %v590 = vsel %vm588, %v589, %v430
        %v591 = vshrl.u32 %v590, 4
        %v592 = vand.u32 %v590, 15
        %v593 = vsub.s32 0, %v592
        %v594 = vsel %vm588, %v593, %v592
        %vm595 = vcmp.lt.s32.totalorder %v431, 0
        %v596 = vsub.s32 0, %v431
        %v597 = vsel %vm595, %v596, %v431
        %v598 = vshrl.u32 %v597, 4
        %v599 = vand.u32 %v597, 15
        %v600 = vsub.s32 0, %v599
        %v601 = vsel %vm595, %v600, %v599
        %vm602 = vcmp.lt.s32.totalorder %v432, 0
        %v603 = vsub.s32 0, %v432
        %v604 = vsel %vm602, %v603, %v432
        %v605 = vshrl.u32 %v604, 4
        %v606 = vand.u32 %v604, 15
        %v607 = vsub.s32 0, %v606
        %v608 = vsel %vm602, %v607, %v606
        %vm609 = vcmp.lt.s32.totalorder %v433, 0
        %v610 = vsub.s32 0, %v433
        %v611 = vsel %vm609, %v610, %v433
        %v612 = vshrl.u32 %v611, 4
        %v613 = vand.u32 %v611, 15
        %v614 = vsub.s32 0, %v613
        %v615 = vsel %vm609, %v614, %v613
        %vm616 = vcmp.lt.s32.totalorder %v434, 0
        %v617 = vsub.s32 0, %v434
        %v618 = vsel %vm616, %v617, %v434
        %v619 = vshrl.u32 %v618, 4
        %v620 = vand.u32 %v618, 15
        %v621 = vsub.s32 0, %v620
        %v622 = vsel %vm616, %v621, %v620
        %vm623 = vcmp.lt.s32.totalorder %v435, 0
        %v624 = vsub.s32 0, %v435
        %v625 = vsel %vm623, %v624, %v435
        %v626 = vshrl.u32 %v625, 4
        %v627 = vand.u32 %v625, 15
        %v628 = vsub.s32 0, %v627
        %v629 = vsel %vm623, %v628, %v627
        %vm630 = vcmp.lt.s32.totalorder %v436, 0
        %v631 = vsub.s32 0, %v436
        %v632 = vsel %vm630, %v631, %v436
        %v633 = vshrl.u32 %v632, 4
        %v634 = vand.u32 %v632, 15
        %v635 = vsub.s32 0, %v634
        %v636 = vsel %vm630, %v635, %v634
        %vm637 = vcmp.lt.s32.totalorder %v437, 0
        %v638 = vsub.s32 0, %v437
        %v639 = vsel %vm637, %v638, %v437
        %v640 = vshrl.u32 %v639, 4
        %v641 = vand.u32 %v639, 15
        %v642 = vsub.s32 0, %v641
        %v643 = vsel %vm637, %v642, %v641
        %vm644 = vcmp.lt.s32.totalorder %v438, 0
        %v645 = vsub.s32 0, %v438
        %v646 = vsel %vm644, %v645, %v438
        %v647 = vshrl.u32 %v646, 4
        %v648 = vand.u32 %v646, 15
        %v649 = vsub.s32 0, %v648
        %v650 = vsel %vm644, %v649, %v648
        %vm651 = vcmp.lt.s32.totalorder %v439, 0
        %v652 = vsub.s32 0, %v439
        %v653 = vsel %vm651, %v652, %v439
        %v654 = vshrl.u32 %v653, 4
        %v655 = vand.u32 %v653, 15
        %v656 = vsub.s32 0, %v655
        %v657 = vsel %vm651, %v656, %v655
        %vm658 = vcmp.lt.s32.totalorder %v440, 0
        %v659 = vsub.s32 0, %v440
        %v660 = vsel %vm658, %v659, %v440
        %v661 = vshrl.u32 %v660, 4
        %v662 = vand.u32 %v660, 15
        %v663 = vsub.s32 0, %v662
        %v664 = vsel %vm658, %v663, %v662
        %vm665 = vcmp.ne.s32.totalorder %v447, 0
        %vm666 = vcmp.ne.s32.totalorder %v454, 0
        %vm667 = vcmp.ne.s32.totalorder %v461, 0
        %vm668 = vcmp.ne.s32.totalorder %v468, 0
        %vm669 = vcmp.ne.s32.totalorder %v475, 0
        %vm670 = vcmp.ne.s32.totalorder %v482, 0
        %vm671 = vcmp.ne.s32.totalorder %v489, 0
        %vm672 = vcmp.ne.s32.totalorder %v496, 0
        %vm673 = vcmp.ne.s32.totalorder %v503, 0
        %vm674 = vcmp.ne.s32.totalorder %v510, 0
        %vm675 = vcmp.ne.s32.totalorder %v517, 0
        %vm676 = vcmp.ne.s32.totalorder %v524, 0
        %vm677 = vcmp.ne.s32.totalorder %v531, 0
        %vm678 = vcmp.ne.s32.totalorder %v538, 0
        %vm679 = vcmp.ne.s32.totalorder %v545, 0
        %vm680 = vcmp.ne.s32.totalorder %v552, 0
        %vm681 = vcmp.ne.s32.totalorder %v559, 0
        %vm682 = vcmp.ne.s32.totalorder %v566, 0
        %vm683 = vcmp.ne.s32.totalorder %v573, 0
        %vm684 = vcmp.ne.s32.totalorder %v580, 0
        %vm685 = vcmp.ne.s32.totalorder %v587, 0
        %vm686 = vcmp.ne.s32.totalorder %v594, 0
        %vm687 = vcmp.ne.s32.totalorder %v601, 0
        %vm688 = vcmp.ne.s32.totalorder %v608, 0
        %vm689 = vcmp.ne.s32.totalorder %v615, 0
        %vm690 = vcmp.ne.s32.totalorder %v622, 0
        %vm691 = vcmp.ne.s32.totalorder %v629, 0
        %vm692 = vcmp.ne.s32.totalorder %v636, 0
        %vm693 = vcmp.ne.s32.totalorder %v643, 0
        %vm694 = vcmp.ne.s32.totalorder %v650, 0
        %vm695 = vcmp.ne.s32.totalorder %v657, 0
        %vm696 = vcmp.ne.s32.totalorder %v664, 0
        %vm697 = vcmp.lt.s32.totalorder %v447, 0
        %vm698 = vcmp.lt.s32.totalorder %v454, 0
        %vm699 = vcmp.lt.s32.totalorder %v461, 0
        %vm700 = vcmp.lt.s32.totalorder %v468, 0
        %vm701 = vcmp.lt.s32.totalorder %v475, 0
        %vm702 = vcmp.lt.s32.totalorder %v482, 0
        %vm703 = vcmp.lt.s32.totalorder %v489, 0
        %vm704 = vcmp.lt.s32.totalorder %v496, 0
        %vm705 = vcmp.lt.s32.totalorder %v503, 0
        %vm706 = vcmp.lt.s32.totalorder %v510, 0
        %vm707 = vcmp.lt.s32.totalorder %v517, 0
        %vm708 = vcmp.lt.s32.totalorder %v524, 0
        %vm709 = vcmp.lt.s32.totalorder %v531, 0
        %vm710 = vcmp.lt.s32.totalorder %v538, 0
        %vm711 = vcmp.lt.s32.totalorder %v545, 0
        %vm712 = vcmp.lt.s32.totalorder %v552, 0
        %vm713 = vcmp.lt.s32.totalorder %v559, 0
        %vm714 = vcmp.lt.s32.totalorder %v566, 0
        %vm715 = vcmp.lt.s32.totalorder %v573, 0
        %vm716 = vcmp.lt.s32.totalorder %v580, 0
        %vm717 = vcmp.lt.s32.totalorder %v587, 0
        %vm718 = vcmp.lt.s32.totalorder %v594, 0
        %vm719 = vcmp.lt.s32.totalorder %v601, 0
        %vm720 = vcmp.lt.s32.totalorder %v608, 0
        %vm721 = vcmp.lt.s32.totalorder %v615, 0
        %vm722 = vcmp.lt.s32.totalorder %v622, 0
        %vm723 = vcmp.lt.s32.totalorder %v629, 0
        %vm724 = vcmp.lt.s32.totalorder %v636, 0
        %vm725 = vcmp.lt.s32.totalorder %v643, 0
        %vm726 = vcmp.lt.s32.totalorder %v650, 0
        %vm727 = vcmp.lt.s32.totalorder %v657, 0
        %vm728 = vcmp.lt.s32.totalorder %v664, 0
        %vm729 = vmand %vm697, %vm665
        %vm730 = vmand %vm698, %vm666
        %vm731 = vmand %vm699, %vm667
        %vm732 = vmand %vm700, %vm668
        %vm733 = vmand %vm701, %vm669
        %vm734 = vmand %vm702, %vm670
        %vm735 = vmand %vm703, %vm671
        %vm736 = vmand %vm704, %vm672
        %vm737 = vmand %vm705, %vm673
        %vm738 = vmand %vm706, %vm674
        %vm739 = vmand %vm707, %vm675
        %vm740 = vmand %vm708, %vm676
        %vm741 = vmand %vm709, %vm677
        %vm742 = vmand %vm710, %vm678
        %vm743 = vmand %vm711, %vm679
        %vm744 = vmand %vm712, %vm680
        %vm745 = vmand %vm713, %vm681
        %vm746 = vmand %vm714, %vm682
        %vm747 = vmand %vm715, %vm683
        %vm748 = vmand %vm716, %vm684
        %vm749 = vmand %vm717, %vm685
        %vm750 = vmand %vm718, %vm686
        %vm751 = vmand %vm719, %vm687
        %vm752 = vmand %vm720, %vm688
        %vm753 = vmand %vm721, %vm689
        %vm754 = vmand %vm722, %vm690
        %vm755 = vmand %vm723, %vm691
        %vm756 = vmand %vm724, %vm692
        %vm757 = vmand %vm725, %vm693
        %vm758 = vmand %vm726, %vm694
        %vm759 = vmand %vm727, %vm695
        %vm760 = vmand %vm728, %vm696
        %v761 = vadd.s32 %v447, 16
        %v762 = vadd.s32 %v454, 16
        %v763 = vadd.s32 %v461, 16
        %v764 = vadd.s32 %v468, 16
        %v765 = vadd.s32 %v475, 16
        %v766 = vadd.s32 %v482, 16
        %v767 = vadd.s32 %v489, 16
        %v768 = vadd.s32 %v496, 16
        %v769 = vadd.s32 %v503, 16
        %v770 = vadd.s32 %v510, 16
        %v771 = vadd.s32 %v517, 16
        %v772 = vadd.s32 %v524, 16
        %v773 = vadd.s32 %v531, 16
        %v774 = vadd.s32 %v538, 16
        %v775 = vadd.s32 %v545, 16
        %v776 = vadd.s32 %v552, 16
        %v777 = vadd.s32 %v559, 16
        %v778 = vadd.s32 %v566, 16
        %v779 = vadd.s32 %v573, 16
        %v780 = vadd.s32 %v580, 16
        %v781 = vadd.s32 %v587, 16
        %v782 = vadd.s32 %v594, 16
        %v783 = vadd.s32 %v601, 16
        %v784 = vadd.s32 %v608, 16
        %v785 = vadd.s32 %v615, 16
        %v786 = vadd.s32 %v622, 16
        %v787 = vadd.s32 %v629, 16
        %v788 = vadd.s32 %v636, 16
        %v789 = vadd.s32 %v643, 16
        %v790 = vadd.s32 %v650, 16
        %v791 = vadd.s32 %v657, 16
        %v792 = vadd.s32 %v664, 16
        %v793 = vsel %vm729, %v761, %v447
        %v794 = vsel %vm730, %v762, %v454
        %v795 = vsel %vm731, %v763, %v461
        %v796 = vsel %vm732, %v764, %v468
        %v797 = vsel %vm733, %v765, %v475
        %v798 = vsel %vm734, %v766, %v482
        %v799 = vsel %vm735, %v767, %v489
        %v800 = vsel %vm736, %v768, %v496
        %v801 = vsel %vm737, %v769, %v503
        %v802 = vsel %vm738, %v770, %v510
        %v803 = vsel %vm739, %v771, %v517
        %v804 = vsel %vm740, %v772, %v524
        %v805 = vsel %vm741, %v773, %v531
        %v806 = vsel %vm742, %v774, %v538
        %v807 = vsel %vm743, %v775, %v545
        %v808 = vsel %vm744, %v776, %v552
        %v809 = vsel %vm745, %v777, %v559
        %v810 = vsel %vm746, %v778, %v566
        %v811 = vsel %vm747, %v779, %v573
        %v812 = vsel %vm748, %v780, %v580
        %v813 = vsel %vm749, %v781, %v587
        %v814 = vsel %vm750, %v782, %v594
        %v815 = vsel %vm751, %v783, %v601
        %v816 = vsel %vm752, %v784, %v608
        %v817 = vsel %vm753, %v785, %v615
        %v818 = vsel %vm754, %v786, %v622
        %v819 = vsel %vm755, %v787, %v629
        %v820 = vsel %vm756, %v788, %v636
        %v821 = vsel %vm757, %v789, %v643
        %v822 = vsel %vm758, %v790, %v650
        %v823 = vsel %vm759, %v791, %v657
        %v824 = vsel %vm760, %v792, %v664
        %vm825 = vcmp.gt.s32.totalorder %v793, 0
        %vm826 = vcmp.gt.s32.totalorder %v794, 0
        %vm827 = vcmp.gt.s32.totalorder %v795, 0
        %vm828 = vcmp.gt.s32.totalorder %v796, 0
        %vm829 = vcmp.gt.s32.totalorder %v797, 0
        %vm830 = vcmp.gt.s32.totalorder %v798, 0
        %vm831 = vcmp.gt.s32.totalorder %v799, 0
        %vm832 = vcmp.gt.s32.totalorder %v800, 0
        %vm833 = vcmp.gt.s32.totalorder %v801, 0
        %vm834 = vcmp.gt.s32.totalorder %v802, 0
        %vm835 = vcmp.gt.s32.totalorder %v803, 0
        %vm836 = vcmp.gt.s32.totalorder %v804, 0
        %vm837 = vcmp.gt.s32.totalorder %v805, 0
        %vm838 = vcmp.gt.s32.totalorder %v806, 0
        %vm839 = vcmp.gt.s32.totalorder %v807, 0
        %vm840 = vcmp.gt.s32.totalorder %v808, 0
        %vm841 = vcmp.gt.s32.totalorder %v809, 0
        %vm842 = vcmp.gt.s32.totalorder %v810, 0
        %vm843 = vcmp.gt.s32.totalorder %v811, 0
        %vm844 = vcmp.gt.s32.totalorder %v812, 0
        %vm845 = vcmp.gt.s32.totalorder %v813, 0
        %vm846 = vcmp.gt.s32.totalorder %v814, 0
        %vm847 = vcmp.gt.s32.totalorder %v815, 0
        %vm848 = vcmp.gt.s32.totalorder %v816, 0
        %vm849 = vcmp.gt.s32.totalorder %v817, 0
        %vm850 = vcmp.gt.s32.totalorder %v818, 0
        %vm851 = vcmp.gt.s32.totalorder %v819, 0
        %vm852 = vcmp.gt.s32.totalorder %v820, 0
        %vm853 = vcmp.gt.s32.totalorder %v821, 0
        %vm854 = vcmp.gt.s32.totalorder %v822, 0
        %vm855 = vcmp.gt.s32.totalorder %v823, 0
        %vm856 = vcmp.gt.s32.totalorder %v824, 0
        %vm857 = vcmp.lt.s32.totalorder %v793, 15
        %vm858 = vcmp.lt.s32.totalorder %v794, 15
        %vm859 = vcmp.lt.s32.totalorder %v795, 15
        %vm860 = vcmp.lt.s32.totalorder %v796, 15
        %vm861 = vcmp.lt.s32.totalorder %v797, 15
        %vm862 = vcmp.lt.s32.totalorder %v798, 15
        %vm863 = vcmp.lt.s32.totalorder %v799, 15
        %vm864 = vcmp.lt.s32.totalorder %v800, 15
        %vm865 = vcmp.lt.s32.totalorder %v801, 15
        %vm866 = vcmp.lt.s32.totalorder %v802, 15
        %vm867 = vcmp.lt.s32.totalorder %v803, 15
        %vm868 = vcmp.lt.s32.totalorder %v804, 15
        %vm869 = vcmp.lt.s32.totalorder %v805, 15
        %vm870 = vcmp.lt.s32.totalorder %v806, 15
        %vm871 = vcmp.lt.s32.totalorder %v807, 15
        %vm872 = vcmp.lt.s32.totalorder %v808, 15
        %vm873 = vcmp.lt.s32.totalorder %v809, 15
        %vm874 = vcmp.lt.s32.totalorder %v810, 15
        %vm875 = vcmp.lt.s32.totalorder %v811, 15
        %vm876 = vcmp.lt.s32.totalorder %v812, 15
        %vm877 = vcmp.lt.s32.totalorder %v813, 15
        %vm878 = vcmp.lt.s32.totalorder %v814, 15
        %vm879 = vcmp.lt.s32.totalorder %v815, 15
        %vm880 = vcmp.lt.s32.totalorder %v816, 15
        %vm881 = vcmp.lt.s32.totalorder %v817, 15
        %vm882 = vcmp.lt.s32.totalorder %v818, 15
        %vm883 = vcmp.lt.s32.totalorder %v819, 15
        %vm884 = vcmp.lt.s32.totalorder %v820, 15
        %vm885 = vcmp.lt.s32.totalorder %v821, 15
        %vm886 = vcmp.lt.s32.totalorder %v822, 15
        %vm887 = vcmp.lt.s32.totalorder %v823, 15
        %vm888 = vcmp.lt.s32.totalorder %v824, 15
        %v889 = vld [vmem:[#allocation2 + $0x4] sm:$0x8]
        %v890 = vld [vmem:[#allocation2 + $0x8] sm:$0xf]
        %v891 = vld [vmem:[#allocation2 + $0xc] sm:$0xf]
        %v892 = vld [vmem:[#allocation2 + $0x10] sm:$0xf]
        %v893 = vld [vmem:[#allocation2 + $0x14] sm:$0xf]
        %v894 = vld [vmem:[#allocation2 + $0x18] sm:$0xf]
        %v895 = vld [vmem:[#allocation2 + $0x1c] sm:$0xf]
        %v896 = vld [vmem:[#allocation2 + $0x20] sm:$0xf]
        %v897 = vld [vmem:[#allocation2 + $0x24] sm:$0xf]
        %v898 = vld [vmem:[#allocation2 + $0x28] sm:$0xf]
        %v899 = vld [vmem:[#allocation2 + $0x2c] sm:$0xf]
        %v900 = vld [vmem:[#allocation2 + $0x30] sm:$0xf]
        %v901 = vld [vmem:[#allocation2 + $0x34] sm:$0xf]
        %v902 = vld [vmem:[#allocation2 + $0x38] sm:$0xf]
        %v903 = vld [vmem:[#allocation2 + $0x3c] sm:$0xf]
        %v904 = vld [vmem:[#allocation2 + $0x40] sm:$0xf]
        %v905 = vld [vmem:[#allocation2 + $0x44] sm:$0xf]
        %v906 = vld [vmem:[#allocation2 + $0x48] sm:$0xf]
        %v907 = vld [vmem:[#allocation2 + $0x4c] sm:$0xf]
        %v908 = vld [vmem:[#allocation2 + $0x50] sm:$0xf]
        %v909 = vld [vmem:[#allocation2 + $0x54] sm:$0xf]
        %v910 = vld [vmem:[#allocation2 + $0x58] sm:$0xf]
        %v911 = vld [vmem:[#allocation2 + $0x5c] sm:$0xf]
        %v912 = vld [vmem:[#allocation2 + $0x60] sm:$0xf]
        %v913 = vld [vmem:[#allocation2 + $0x64] sm:$0xf]
        %v914 = vld [vmem:[#allocation2 + $0x68] sm:$0xf]
        %v915 = vld [vmem:[#allocation2 + $0x6c] sm:$0xf]
        %v916 = vld [vmem:[#allocation2 + $0x70] sm:$0xf]
        %v917 = vld [vmem:[#allocation2 + $0x74] sm:$0xf]
        %v918 = vld [vmem:[#allocation2 + $0x78] sm:$0xf]
        %v919 = vld [vmem:[#allocation2 + $0x7c] sm:$0xf]
        %v920 = vld [vmem:[#allocation2 + $0x80] sm:$0xf]
        %v921 = vld [vmem:[#allocation2 + $0x84] sm:$0xf]
        %v922 = vsel %vm825, 1, 0
        %v923 = vsel %vm826, 1, 0
        %v924 = vsel %vm827, 1, 0
        %v925 = vsel %vm828, 1, 0
        %v926 = vsel %vm829, 1, 0
        %v927 = vsel %vm830, 1, 0
        %v928 = vsel %vm831, 1, 0
        %v929 = vsel %vm832, 1, 0
        %v930 = vsel %vm833, 1, 0
        %v931 = vsel %vm834, 1, 0
        %v932 = vsel %vm835, 1, 0
        %v933 = vsel %vm836, 1, 0
        %v934 = vsel %vm837, 1, 0
        %v935 = vsel %vm838, 1, 0
        %v936 = vsel %vm839, 1, 0
        %v937 = vsel %vm840, 1, 0
        %v938 = vsel %vm841, 1, 0
        %v939 = vsel %vm842, 1, 0
        %v940 = vsel %vm843, 1, 0
        %v941 = vsel %vm844, 1, 0
        %v942 = vsel %vm845, 1, 0
        %v943 = vsel %vm846, 1, 0
        %v944 = vsel %vm847, 1, 0
        %v945 = vsel %vm848, 1, 0
        %v946 = vsel %vm849, 1, 0
        %v947 = vsel %vm850, 1, 0
        %v948 = vsel %vm851, 1, 0
        %v949 = vsel %vm852, 1, 0
        %v950 = vsel %vm853, 1, 0
        %v951 = vsel %vm854, 1, 0
        %v952 = vsel %vm855, 1, 0
        %v953 = vsel %vm856, 1, 0
        %vm954 = vcmp.eq.s32.totalorder %v922, 1
        %vm955 = vcmp.eq.s32.totalorder %v923, 1
        %vm956 = vcmp.eq.s32.totalorder %v924, 1
        %vm957 = vcmp.eq.s32.totalorder %v925, 1
        %vm958 = vcmp.eq.s32.totalorder %v926, 1
        %vm959 = vcmp.eq.s32.totalorder %v927, 1
        %vm960 = vcmp.eq.s32.totalorder %v928, 1
        %vm961 = vcmp.eq.s32.totalorder %v929, 1
        %vm962 = vcmp.eq.s32.totalorder %v930, 1
        %vm963 = vcmp.eq.s32.totalorder %v931, 1
        %vm964 = vcmp.eq.s32.totalorder %v932, 1
        %vm965 = vcmp.eq.s32.totalorder %v933, 1
        %vm966 = vcmp.eq.s32.totalorder %v934, 1
        %vm967 = vcmp.eq.s32.totalorder %v935, 1
        %vm968 = vcmp.eq.s32.totalorder %v936, 1
        %vm969 = vcmp.eq.s32.totalorder %v937, 1
        %vm970 = vcmp.eq.s32.totalorder %v938, 1
        %vm971 = vcmp.eq.s32.totalorder %v939, 1
        %vm972 = vcmp.eq.s32.totalorder %v940, 1
        %vm973 = vcmp.eq.s32.totalorder %v941, 1
        %vm974 = vcmp.eq.s32.totalorder %v942, 1
        %vm975 = vcmp.eq.s32.totalorder %v943, 1
        %vm976 = vcmp.eq.s32.totalorder %v944, 1
        %vm977 = vcmp.eq.s32.totalorder %v945, 1
        %vm978 = vcmp.eq.s32.totalorder %v946, 1
        %vm979 = vcmp.eq.s32.totalorder %v947, 1
        %vm980 = vcmp.eq.s32.totalorder %v948, 1
        %vm981 = vcmp.eq.s32.totalorder %v949, 1
        %vm982 = vcmp.eq.s32.totalorder %v950, 1
        %vm983 = vcmp.eq.s32.totalorder %v951, 1
        %vm984 = vcmp.eq.s32.totalorder %v952, 1
        %vm985 = vcmp.eq.s32.totalorder %v953, 1
        %vm986 = vmpackc.low %vm954, %vm954
        %vm987 = vmpackc.low %vm955, %vm955
        %vm988 = vmpackc.low %vm956, %vm956
        %vm989 = vmpackc.low %vm957, %vm957
        %vm990 = vmpackc.low %vm958, %vm958
        %vm991 = vmpackc.low %vm959, %vm959
        %vm992 = vmpackc.low %vm960, %vm960
        %vm993 = vmpackc.low %vm961, %vm961
        %vm994 = vmpackc.low %vm962, %vm962
        %vm995 = vmpackc.low %vm963, %vm963
        %vm996 = vmpackc.low %vm964, %vm964
        %vm997 = vmpackc.low %vm965, %vm965
        %vm998 = vmpackc.low %vm966, %vm966
        %vm999 = vmpackc.low %vm967, %vm967
        %vm1000 = vmpackc.low %vm968, %vm968
        %vm1001 = vmpackc.low %vm969, %vm969
        %vm1002 = vmpackc.low %vm970, %vm970
        %vm1003 = vmpackc.low %vm971, %vm971
        %vm1004 = vmpackc.low %vm972, %vm972
        %vm1005 = vmpackc.low %vm973, %vm973
        %vm1006 = vmpackc.low %vm974, %vm974
        %vm1007 = vmpackc.low %vm975, %vm975
        %vm1008 = vmpackc.low %vm976, %vm976
        %vm1009 = vmpackc.low %vm977, %vm977
        %vm1010 = vmpackc.low %vm978, %vm978
        %vm1011 = vmpackc.low %vm979, %vm979
        %vm1012 = vmpackc.low %vm980, %vm980
        %vm1013 = vmpackc.low %vm981, %vm981
        %vm1014 = vmpackc.low %vm982, %vm982
        %vm1015 = vmpackc.low %vm983, %vm983
        %vm1016 = vmpackc.low %vm984, %vm984
        %vm1017 = vmpackc.low %vm985, %vm985
        %v1018 = vsel %vm986, 65537, 0
        %v1019 = vsel %vm987, 65537, 0
        %v1020 = vsel %vm988, 65537, 0
        %v1021 = vsel %vm989, 65537, 0
        %v1022 = vsel %vm990, 65537, 0
        %v1023 = vsel %vm991, 65537, 0
        %v1024 = vsel %vm992, 65537, 0
        %v1025 = vsel %vm993, 65537, 0
        %v1026 = vsel %vm994, 65537, 0
        %v1027 = vsel %vm995, 65537, 0
        %v1028 = vsel %vm996, 65537, 0
        %v1029 = vsel %vm997, 65537, 0
        %v1030 = vsel %vm998, 65537, 0
        %v1031 = vsel %vm999, 65537, 0
        %v1032 = vsel %vm1000, 65537, 0
        %v1033 = vsel %vm1001, 65537, 0
        %v1034 = vsel %vm1002, 65537, 0
        %v1035 = vsel %vm1003, 65537, 0
        %v1036 = vsel %vm1004, 65537, 0
        %v1037 = vsel %vm1005, 65537, 0
        %v1038 = vsel %vm1006, 65537, 0
        %v1039 = vsel %vm1007, 65537, 0
        %v1040 = vsel %vm1008, 65537, 0
        %v1041 = vsel %vm1009, 65537, 0
        %v1042 = vsel %vm1010, 65537, 0
        %v1043 = vsel %vm1011, 65537, 0
        %v1044 = vsel %vm1012, 65537, 0
        %v1045 = vsel %vm1013, 65537, 0
        %v1046 = vsel %vm1014, 65537, 0
        %v1047 = vsel %vm1015, 65537, 0
        %v1048 = vsel %vm1016, 65537, 0
        %v1049 = vsel %vm1017, 65537, 0
        %vm1050 = vsmask.f32 3328
        %vm1051 = vsmask.f32 7440
        %vm1052 = vmor %vm1050, %vm1051
        %v1054 = vshll.u32 %v1018, 16
        %v1056 = vrot.slane %v1054, 5
        %v1057 = vshrl.u32 %v1018, 16
        %v1059 = vrot.slane %v1057, 4
        %v1060 = vor.u32 %v1059, %v1056
        %v1061 = vrot.slane %v1060, 4
        %v1063 = vshll.u32 %v1019, 16
        %v1065 = vrot.slane %v1063, 5
        %v1066 = vsel %vm1052, %v1061, %v1065
        %v1067 = vshrl.u32 %v1019, 16
        %v1069 = vrot.slane %v1067, 4
        %v1070 = vor.u32 %v1069, %v1065
        %v1071 = vrot.slane %v1070, 4
        %v1073 = vshll.u32 %v1020, 16
        %v1075 = vrot.slane %v1073, 5
        %v1076 = vsel %vm1052, %v1071, %v1075
        %v1077 = vshrl.u32 %v1020, 16
        %v1079 = vrot.slane %v1077, 4
        %v1080 = vor.u32 %v1079, %v1075
        %v1081 = vrot.slane %v1080, 4
        %v1083 = vshll.u32 %v1021, 16
        %v1085 = vrot.slane %v1083, 5
        %v1086 = vsel %vm1052, %v1081, %v1085
        %v1087 = vshrl.u32 %v1021, 16
        %v1089 = vrot.slane %v1087, 4
        %v1090 = vor.u32 %v1089, %v1085
        %v1091 = vrot.slane %v1090, 4
        %v1093 = vshll.u32 %v1022, 16
        %v1095 = vrot.slane %v1093, 5
        %v1096 = vsel %vm1052, %v1091, %v1095
        %v1097 = vshrl.u32 %v1022, 16
        %v1099 = vrot.slane %v1097, 4
        %v1100 = vor.u32 %v1099, %v1095
        %v1101 = vrot.slane %v1100, 4
        %v1103 = vshll.u32 %v1023, 16
        %v1105 = vrot.slane %v1103, 5
        %v1106 = vsel %vm1052, %v1101, %v1105
        %v1107 = vshrl.u32 %v1023, 16
        %v1109 = vrot.slane %v1107, 4
        %v1110 = vor.u32 %v1109, %v1105
        %v1111 = vrot.slane %v1110, 4
        %v1113 = vshll.u32 %v1024, 16
        %v1115 = vrot.slane %v1113, 5
        %v1116 = vsel %vm1052, %v1111, %v1115
        %v1117 = vshrl.u32 %v1024, 16
        %v1119 = vrot.slane %v1117, 4
        %v1120 = vor.u32 %v1119, %v1115
        %v1121 = vrot.slane %v1120, 4
        %v1123 = vshll.u32 %v1025, 16
        %v1125 = vrot.slane %v1123, 5
        %v1126 = vsel %vm1052, %v1121, %v1125
        %v1127 = vshrl.u32 %v1025, 16
        %v1129 = vrot.slane %v1127, 4
        %v1130 = vor.u32 %v1129, %v1125
        %v1131 = vrot.slane %v1130, 4
        %v1133 = vshll.u32 %v1026, 16
        %v1135 = vrot.slane %v1133, 5
        %v1136 = vsel %vm1052, %v1131, %v1135
        %v1137 = vshrl.u32 %v1026, 16
        %v1139 = vrot.slane %v1137, 4
        %v1140 = vor.u32 %v1139, %v1135
        %v1141 = vrot.slane %v1140, 4
        %v1143 = vshll.u32 %v1027, 16
        %v1145 = vrot.slane %v1143, 5
        %v1146 = vsel %vm1052, %v1141, %v1145
        %v1147 = vshrl.u32 %v1027, 16
        %v1149 = vrot.slane %v1147, 4
        %v1150 = vor.u32 %v1149, %v1145
        %v1151 = vrot.slane %v1150, 4
        %v1153 = vshll.u32 %v1028, 16
        %v1155 = vrot.slane %v1153, 5
        %v1156 = vsel %vm1052, %v1151, %v1155
        %v1157 = vshrl.u32 %v1028, 16
        %v1159 = vrot.slane %v1157, 4
        %v1160 = vor.u32 %v1159, %v1155
        %v1161 = vrot.slane %v1160, 4
        %v1163 = vshll.u32 %v1029, 16
        %v1165 = vrot.slane %v1163, 5
        %v1166 = vsel %vm1052, %v1161, %v1165
        %v1167 = vshrl.u32 %v1029, 16
        %v1169 = vrot.slane %v1167, 4
        %v1170 = vor.u32 %v1169, %v1165
        %v1171 = vrot.slane %v1170, 4
        %v1173 = vshll.u32 %v1030, 16
        %v1175 = vrot.slane %v1173, 5
        %v1176 = vsel %vm1052, %v1171, %v1175
        %v1177 = vshrl.u32 %v1030, 16
        %v1179 = vrot.slane %v1177, 4
        %v1180 = vor.u32 %v1179, %v1175
        %v1181 = vrot.slane %v1180, 4
        %v1183 = vshll.u32 %v1031, 16
        %v1185 = vrot.slane %v1183, 5
        %v1186 = vsel %vm1052, %v1181, %v1185
        %v1187 = vshrl.u32 %v1031, 16
        %v1189 = vrot.slane %v1187, 4
        %v1190 = vor.u32 %v1189, %v1185
        %v1191 = vrot.slane %v1190, 4
        %v1193 = vshll.u32 %v1032, 16
        %v1195 = vrot.slane %v1193, 5
        %v1196 = vsel %vm1052, %v1191, %v1195
        %v1197 = vshrl.u32 %v1032, 16
        %v1199 = vrot.slane %v1197, 4
        %v1200 = vor.u32 %v1199, %v1195
        %v1201 = vrot.slane %v1200, 4
        %v1203 = vshll.u32 %v1033, 16
        %v1205 = vrot.slane %v1203, 5
        %v1206 = vsel %vm1052, %v1201, %v1205
        %v1207 = vshrl.u32 %v1033, 16
        %v1209 = vrot.slane %v1207, 4
        %v1210 = vor.u32 %v1209, %v1205
        %v1211 = vrot.slane %v1210, 4
        %v1213 = vshll.u32 %v1034, 16
        %v1215 = vrot.slane %v1213, 5
        %v1216 = vsel %vm1052, %v1211, %v1215
        %v1217 = vshrl.u32 %v1034, 16
        %v1219 = vrot.slane %v1217, 4
        %v1220 = vor.u32 %v1219, %v1215
        %v1221 = vrot.slane %v1220, 4
        %v1223 = vshll.u32 %v1035, 16
        %v1225 = vrot.slane %v1223, 5
        %v1226 = vsel %vm1052, %v1221, %v1225
        %v1227 = vshrl.u32 %v1035, 16
        %v1229 = vrot.slane %v1227, 4
        %v1230 = vor.u32 %v1229, %v1225
        %v1231 = vrot.slane %v1230, 4
        %v1233 = vshll.u32 %v1036, 16
        %v1235 = vrot.slane %v1233, 5
        %v1236 = vsel %vm1052, %v1231, %v1235
        %v1237 = vshrl.u32 %v1036, 16
        %v1239 = vrot.slane %v1237, 4
        %v1240 = vor.u32 %v1239, %v1235
        %v1241 = vrot.slane %v1240, 4
        %v1243 = vshll.u32 %v1037, 16
        %v1245 = vrot.slane %v1243, 5
        %v1246 = vsel %vm1052, %v1241, %v1245
        %v1247 = vshrl.u32 %v1037, 16
        %v1249 = vrot.slane %v1247, 4
        %v1250 = vor.u32 %v1249, %v1245
        %v1251 = vrot.slane %v1250, 4
        %v1253 = vshll.u32 %v1038, 16
        %v1255 = vrot.slane %v1253, 5
        %v1256 = vsel %vm1052, %v1251, %v1255
        %v1257 = vshrl.u32 %v1038, 16
        %v1259 = vrot.slane %v1257, 4
        %v1260 = vor.u32 %v1259, %v1255
        %v1261 = vrot.slane %v1260, 4
        %v1263 = vshll.u32 %v1039, 16
        %v1265 = vrot.slane %v1263, 5
        %v1266 = vsel %vm1052, %v1261, %v1265
        %v1267 = vshrl.u32 %v1039, 16
        %v1269 = vrot.slane %v1267, 4
        %v1270 = vor.u32 %v1269, %v1265
        %v1271 = vrot.slane %v1270, 4
        %v1273 = vshll.u32 %v1040, 16
        %v1275 = vrot.slane %v1273, 5
        %v1276 = vsel %vm1052, %v1271, %v1275
        %v1277 = vshrl.u32 %v1040, 16
        %v1279 = vrot.slane %v1277, 4
        %v1280 = vor.u32 %v1279, %v1275
        %v1281 = vrot.slane %v1280, 4
        %v1283 = vshll.u32 %v1041, 16
        %v1285 = vrot.slane %v1283, 5
        %v1286 = vsel %vm1052, %v1281, %v1285
        %v1287 = vshrl.u32 %v1041, 16
        %v1289 = vrot.slane %v1287, 4
        %v1290 = vor.u32 %v1289, %v1285
        %v1291 = vrot.slane %v1290, 4
        %v1293 = vshll.u32 %v1042, 16
        %v1295 = vrot.slane %v1293, 5
        %v1296 = vsel %vm1052, %v1291, %v1295
        %v1297 = vshrl.u32 %v1042, 16
        %v1299 = vrot.slane %v1297, 4
        %v1300 = vor.u32 %v1299, %v1295
        %v1301 = vrot.slane %v1300, 4
        %v1303 = vshll.u32 %v1043, 16
        %v1305 = vrot.slane %v1303, 5
        %v1306 = vsel %vm1052, %v1301, %v1305
        %v1307 = vshrl.u32 %v1043, 16
        %v1309 = vrot.slane %v1307, 4
        %v1310 = vor.u32 %v1309, %v1305
        %v1311 = vrot.slane %v1310, 4
        %v1313 = vshll.u32 %v1044, 16
        %v1315 = vrot.slane %v1313, 5
        %v1316 = vsel %vm1052, %v1311, %v1315
        %v1317 = vshrl.u32 %v1044, 16
        %v1319 = vrot.slane %v1317, 4
        %v1320 = vor.u32 %v1319, %v1315
        %v1321 = vrot.slane %v1320, 4
        %v1323 = vshll.u32 %v1045, 16
        %v1325 = vrot.slane %v1323, 5
        %v1326 = vsel %vm1052, %v1321, %v1325
        %v1327 = vshrl.u32 %v1045, 16
        %v1329 = vrot.slane %v1327, 4
        %v1330 = vor.u32 %v1329, %v1325
        %v1331 = vrot.slane %v1330, 4
        %v1333 = vshll.u32 %v1046, 16
        %v1335 = vrot.slane %v1333, 5
        %v1336 = vsel %vm1052, %v1331, %v1335
        %v1337 = vshrl.u32 %v1046, 16
        %v1339 = vrot.slane %v1337, 4
        %v1340 = vor.u32 %v1339, %v1335
        %v1341 = vrot.slane %v1340, 4
        %v1343 = vshll.u32 %v1047, 16
        %v1345 = vrot.slane %v1343, 5
        %v1346 = vsel %vm1052, %v1341, %v1345
        %v1347 = vshrl.u32 %v1047, 16
        %v1349 = vrot.slane %v1347, 4
        %v1350 = vor.u32 %v1349, %v1345
        %v1351 = vrot.slane %v1350, 4
        %v1353 = vshll.u32 %v1048, 16
        %v1355 = vrot.slane %v1353, 5
        %v1356 = vsel %vm1052, %v1351, %v1355
        %v1357 = vshrl.u32 %v1048, 16
        %v1359 = vrot.slane %v1357, 4
        %v1360 = vor.u32 %v1359, %v1355
        %v1361 = vrot.slane %v1360, 4
        %v1363 = vshll.u32 %v1049, 16
        %v1365 = vrot.slane %v1363, 5
        %v1366 = vsel %vm1052, %v1361, %v1365
        %v1367 = vshrl.u32 %v1049, 16
        %v1369 = vrot.slane %v1367, 4
        %v1370 = vor.u32 %v1369, %v1365
        %v1371 = vrot.slane %v1370, 4
        %v1372 = vunpack.c.l.b16 %v1056
        %v1373 = vunpack.c.h.b16 %v1056
        %v1374 = vunpack.c.l.b16 0
        %v1375 = vunpack.c.h.b16 0
        %vm1376 = vcmp.ne.s32.totalorder %v1372, %v1374
        %vm1377 = vcmp.ne.s32.totalorder %v1373, %v1375
        %vm1378 = vmpackc.low %vm1377, %vm1376
        %v1379 = vunpack.c.l.b16 %v1066
        %v1380 = vunpack.c.h.b16 %v1066
        %v1381 = vunpack.c.l.b16 0
        %v1382 = vunpack.c.h.b16 0
        %vm1383 = vcmp.ne.s32.totalorder %v1379, %v1381
        %vm1384 = vcmp.ne.s32.totalorder %v1380, %v1382
        %vm1385 = vmpackc.low %vm1384, %vm1383
        %v1386 = vunpack.c.l.b16 %v1076
        %v1387 = vunpack.c.h.b16 %v1076
        %v1388 = vunpack.c.l.b16 0
        %v1389 = vunpack.c.h.b16 0
        %vm1390 = vcmp.ne.s32.totalorder %v1386, %v1388
        %vm1391 = vcmp.ne.s32.totalorder %v1387, %v1389
        %vm1392 = vmpackc.low %vm1391, %vm1390
        %v1393 = vunpack.c.l.b16 %v1086
        %v1394 = vunpack.c.h.b16 %v1086
        %v1395 = vunpack.c.l.b16 0
        %v1396 = vunpack.c.h.b16 0
        %vm1397 = vcmp.ne.s32.totalorder %v1393, %v1395
        %vm1398 = vcmp.ne.s32.totalorder %v1394, %v1396
        %vm1399 = vmpackc.low %vm1398, %vm1397
        %v1400 = vunpack.c.l.b16 %v1096
        %v1401 = vunpack.c.h.b16 %v1096
        %v1402 = vunpack.c.l.b16 0
        %v1403 = vunpack.c.h.b16 0
        %vm1404 = vcmp.ne.s32.totalorder %v1400, %v1402
        %vm1405 = vcmp.ne.s32.totalorder %v1401, %v1403
        %vm1406 = vmpackc.low %vm1405, %vm1404
        %v1407 = vunpack.c.l.b16 %v1106
        %v1408 = vunpack.c.h.b16 %v1106
        %v1409 = vunpack.c.l.b16 0
        %v1410 = vunpack.c.h.b16 0
        %vm1411 = vcmp.ne.s32.totalorder %v1407, %v1409
        %vm1412 = vcmp.ne.s32.totalorder %v1408, %v1410
        %vm1413 = vmpackc.low %vm1412, %vm1411
        %v1414 = vunpack.c.l.b16 %v1116
        %v1415 = vunpack.c.h.b16 %v1116
        %v1416 = vunpack.c.l.b16 0
        %v1417 = vunpack.c.h.b16 0
        %vm1418 = vcmp.ne.s32.totalorder %v1414, %v1416
        %vm1419 = vcmp.ne.s32.totalorder %v1415, %v1417
        %vm1420 = vmpackc.low %vm1419, %vm1418
        %v1421 = vunpack.c.l.b16 %v1126
        %v1422 = vunpack.c.h.b16 %v1126
        %v1423 = vunpack.c.l.b16 0
        %v1424 = vunpack.c.h.b16 0
        %vm1425 = vcmp.ne.s32.totalorder %v1421, %v1423
        %vm1426 = vcmp.ne.s32.totalorder %v1422, %v1424
        %vm1427 = vmpackc.low %vm1426, %vm1425
        %v1428 = vunpack.c.l.b16 %v1136
        %v1429 = vunpack.c.h.b16 %v1136
        %v1430 = vunpack.c.l.b16 0
        %v1431 = vunpack.c.h.b16 0
        %vm1432 = vcmp.ne.s32.totalorder %v1428, %v1430
        %vm1433 = vcmp.ne.s32.totalorder %v1429, %v1431
        %vm1434 = vmpackc.low %vm1433, %vm1432
        %v1435 = vunpack.c.l.b16 %v1146
        %v1436 = vunpack.c.h.b16 %v1146
        %v1437 = vunpack.c.l.b16 0
        %v1438 = vunpack.c.h.b16 0
        %vm1439 = vcmp.ne.s32.totalorder %v1435, %v1437
        %vm1440 = vcmp.ne.s32.totalorder %v1436, %v1438
        %vm1441 = vmpackc.low %vm1440, %vm1439
        %v1442 = vunpack.c.l.b16 %v1156
        %v1443 = vunpack.c.h.b16 %v1156
        %v1444 = vunpack.c.l.b16 0
        %v1445 = vunpack.c.h.b16 0
        %vm1446 = vcmp.ne.s32.totalorder %v1442, %v1444
        %vm1447 = vcmp.ne.s32.totalorder %v1443, %v1445
        %vm1448 = vmpackc.low %vm1447, %vm1446
        %v1449 = vunpack.c.l.b16 %v1166
        %v1450 = vunpack.c.h.b16 %v1166
        %v1451 = vunpack.c.l.b16 0
        %v1452 = vunpack.c.h.b16 0
        %vm1453 = vcmp.ne.s32.totalorder %v1449, %v1451
        %vm1454 = vcmp.ne.s32.totalorder %v1450, %v1452
        %vm1455 = vmpackc.low %vm1454, %vm1453
        %v1456 = vunpack.c.l.b16 %v1176
        %v1457 = vunpack.c.h.b16 %v1176
        %v1458 = vunpack.c.l.b16 0
        %v1459 = vunpack.c.h.b16 0
        %vm1460 = vcmp.ne.s32.totalorder %v1456, %v1458
        %vm1461 = vcmp.ne.s32.totalorder %v1457, %v1459
        %vm1462 = vmpackc.low %vm1461, %vm1460
        %v1463 = vunpack.c.l.b16 %v1186
        %v1464 = vunpack.c.h.b16 %v1186
        %v1465 = vunpack.c.l.b16 0
        %v1466 = vunpack.c.h.b16 0
        %vm1467 = vcmp.ne.s32.totalorder %v1463, %v1465
        %vm1468 = vcmp.ne.s32.totalorder %v1464, %v1466
        %vm1469 = vmpackc.low %vm1468, %vm1467
        %v1470 = vunpack.c.l.b16 %v1196
        %v1471 = vunpack.c.h.b16 %v1196
        %v1472 = vunpack.c.l.b16 0
        %v1473 = vunpack.c.h.b16 0
        %vm1474 = vcmp.ne.s32.totalorder %v1470, %v1472
        %vm1475 = vcmp.ne.s32.totalorder %v1471, %v1473
        %vm1476 = vmpackc.low %vm1475, %vm1474
        %v1477 = vunpack.c.l.b16 %v1206
        %v1478 = vunpack.c.h.b16 %v1206
        %v1479 = vunpack.c.l.b16 0
        %v1480 = vunpack.c.h.b16 0
        %vm1481 = vcmp.ne.s32.totalorder %v1477, %v1479
        %vm1482 = vcmp.ne.s32.totalorder %v1478, %v1480
        %vm1483 = vmpackc.low %vm1482, %vm1481
        %v1484 = vunpack.c.l.b16 %v1216
        %v1485 = vunpack.c.h.b16 %v1216
        %v1486 = vunpack.c.l.b16 0
        %v1487 = vunpack.c.h.b16 0
        %vm1488 = vcmp.ne.s32.totalorder %v1484, %v1486
        %vm1489 = vcmp.ne.s32.totalorder %v1485, %v1487
        %vm1490 = vmpackc.low %vm1489, %vm1488
        %v1491 = vunpack.c.l.b16 %v1226
        %v1492 = vunpack.c.h.b16 %v1226
        %v1493 = vunpack.c.l.b16 0
        %v1494 = vunpack.c.h.b16 0
        %vm1495 = vcmp.ne.s32.totalorder %v1491, %v1493
        %vm1496 = vcmp.ne.s32.totalorder %v1492, %v1494
        %vm1497 = vmpackc.low %vm1496, %vm1495
        %v1498 = vunpack.c.l.b16 %v1236
        %v1499 = vunpack.c.h.b16 %v1236
        %v1500 = vunpack.c.l.b16 0
        %v1501 = vunpack.c.h.b16 0
        %vm1502 = vcmp.ne.s32.totalorder %v1498, %v1500
        %vm1503 = vcmp.ne.s32.totalorder %v1499, %v1501
        %vm1504 = vmpackc.low %vm1503, %vm1502
        %v1505 = vunpack.c.l.b16 %v1246
        %v1506 = vunpack.c.h.b16 %v1246
        %v1507 = vunpack.c.l.b16 0
        %v1508 = vunpack.c.h.b16 0
        %vm1509 = vcmp.ne.s32.totalorder %v1505, %v1507
        %vm1510 = vcmp.ne.s32.totalorder %v1506, %v1508
        %vm1511 = vmpackc.low %vm1510, %vm1509
        %v1512 = vunpack.c.l.b16 %v1256
        %v1513 = vunpack.c.h.b16 %v1256
        %v1514 = vunpack.c.l.b16 0
        %v1515 = vunpack.c.h.b16 0
        %vm1516 = vcmp.ne.s32.totalorder %v1512, %v1514
        %vm1517 = vcmp.ne.s32.totalorder %v1513, %v1515
        %vm1518 = vmpackc.low %vm1517, %vm1516
        %v1519 = vunpack.c.l.b16 %v1266
        %v1520 = vunpack.c.h.b16 %v1266
        %v1521 = vunpack.c.l.b16 0
        %v1522 = vunpack.c.h.b16 0
        %vm1523 = vcmp.ne.s32.totalorder %v1519, %v1521
        %vm1524 = vcmp.ne.s32.totalorder %v1520, %v1522
        %vm1525 = vmpackc.low %vm1524, %vm1523
        %v1526 = vunpack.c.l.b16 %v1276
        %v1527 = vunpack.c.h.b16 %v1276
        %v1528 = vunpack.c.l.b16 0
        %v1529 = vunpack.c.h.b16 0
        %vm1530 = vcmp.ne.s32.totalorder %v1526, %v1528
        %vm1531 = vcmp.ne.s32.totalorder %v1527, %v1529
        %vm1532 = vmpackc.low %vm1531, %vm1530
        %v1533 = vunpack.c.l.b16 %v1286
        %v1534 = vunpack.c.h.b16 %v1286
        %v1535 = vunpack.c.l.b16 0
        %v1536 = vunpack.c.h.b16 0
        %vm1537 = vcmp.ne.s32.totalorder %v1533, %v1535
        %vm1538 = vcmp.ne.s32.totalorder %v1534, %v1536
        %vm1539 = vmpackc.low %vm1538, %vm1537
        %v1540 = vunpack.c.l.b16 %v1296
        %v1541 = vunpack.c.h.b16 %v1296
        %v1542 = vunpack.c.l.b16 0
        %v1543 = vunpack.c.h.b16 0
        %vm1544 = vcmp.ne.s32.totalorder %v1540, %v1542
        %vm1545 = vcmp.ne.s32.totalorder %v1541, %v1543
        %vm1546 = vmpackc.low %vm1545, %vm1544
        %v1547 = vunpack.c.l.b16 %v1306
        %v1548 = vunpack.c.h.b16 %v1306
        %v1549 = vunpack.c.l.b16 0
        %v1550 = vunpack.c.h.b16 0
        %vm1551 = vcmp.ne.s32.totalorder %v1547, %v1549
        %vm1552 = vcmp.ne.s32.totalorder %v1548, %v1550
        %vm1553 = vmpackc.low %vm1552, %vm1551
        %v1554 = vunpack.c.l.b16 %v1316
        %v1555 = vunpack.c.h.b16 %v1316
        %v1556 = vunpack.c.l.b16 0
        %v1557 = vunpack.c.h.b16 0
        %vm1558 = vcmp.ne.s32.totalorder %v1554, %v1556
        %vm1559 = vcmp.ne.s32.totalorder %v1555, %v1557
        %vm1560 = vmpackc.low %vm1559, %vm1558
        %v1561 = vunpack.c.l.b16 %v1326
        %v1562 = vunpack.c.h.b16 %v1326
        %v1563 = vunpack.c.l.b16 0
        %v1564 = vunpack.c.h.b16 0
        %vm1565 = vcmp.ne.s32.totalorder %v1561, %v1563
        %vm1566 = vcmp.ne.s32.totalorder %v1562, %v1564
        %vm1567 = vmpackc.low %vm1566, %vm1565
        %v1568 = vunpack.c.l.b16 %v1336
        %v1569 = vunpack.c.h.b16 %v1336
        %v1570 = vunpack.c.l.b16 0
        %v1571 = vunpack.c.h.b16 0
        %vm1572 = vcmp.ne.s32.totalorder %v1568, %v1570
        %vm1573 = vcmp.ne.s32.totalorder %v1569, %v1571
        %vm1574 = vmpackc.low %vm1573, %vm1572
        %v1575 = vunpack.c.l.b16 %v1346
        %v1576 = vunpack.c.h.b16 %v1346
        %v1577 = vunpack.c.l.b16 0
        %v1578 = vunpack.c.h.b16 0
        %vm1579 = vcmp.ne.s32.totalorder %v1575, %v1577
        %vm1580 = vcmp.ne.s32.totalorder %v1576, %v1578
        %vm1581 = vmpackc.low %vm1580, %vm1579
        %v1582 = vunpack.c.l.b16 %v1356
        %v1583 = vunpack.c.h.b16 %v1356
        %v1584 = vunpack.c.l.b16 0
        %v1585 = vunpack.c.h.b16 0
        %vm1586 = vcmp.ne.s32.totalorder %v1582, %v1584
        %vm1587 = vcmp.ne.s32.totalorder %v1583, %v1585
        %vm1588 = vmpackc.low %vm1587, %vm1586
        %v1589 = vunpack.c.l.b16 %v1366
        %v1590 = vunpack.c.h.b16 %v1366
        %v1591 = vunpack.c.l.b16 0
        %v1592 = vunpack.c.h.b16 0
        %vm1593 = vcmp.ne.s32.totalorder %v1589, %v1591
        %vm1594 = vcmp.ne.s32.totalorder %v1590, %v1592
        %vm1595 = vmpackc.low %vm1594, %vm1593
        %v1596 = vunpack.c.l.b16 %v1371
        %v1597 = vunpack.c.h.b16 %v1371
        %v1598 = vunpack.c.l.b16 0
        %v1599 = vunpack.c.h.b16 0
        %vm1600 = vcmp.ne.s32.totalorder %v1596, %v1598
        %vm1601 = vcmp.ne.s32.totalorder %v1597, %v1599
        %vm1602 = vmpackc.low %vm1601, %vm1600
        %v1603 = vsel %vm1378, %v889, 0
        %v1604 = vsel %vm1385, %v890, 0
        %v1605 = vsel %vm1392, %v891, 0
        %v1606 = vsel %vm1399, %v892, 0
        %v1607 = vsel %vm1406, %v893, 0
        %v1608 = vsel %vm1413, %v894, 0
        %v1609 = vsel %vm1420, %v895, 0
        %v1610 = vsel %vm1427, %v896, 0
        %v1611 = vsel %vm1434, %v897, 0
        %v1612 = vsel %vm1441, %v898, 0
        %v1613 = vsel %vm1448, %v899, 0
        %v1614 = vsel %vm1455, %v900, 0
        %v1615 = vsel %vm1462, %v901, 0
        %v1616 = vsel %vm1469, %v902, 0
        %v1617 = vsel %vm1476, %v903, 0
        %v1618 = vsel %vm1483, %v904, 0
        %v1619 = vsel %vm1490, %v905, 0
        %v1620 = vsel %vm1497, %v906, 0
        %v1621 = vsel %vm1504, %v907, 0
        %v1622 = vsel %vm1511, %v908, 0
        %v1623 = vsel %vm1518, %v909, 0
        %v1624 = vsel %vm1525, %v910, 0
        %v1625 = vsel %vm1532, %v911, 0
        %v1626 = vsel %vm1539, %v912, 0
        %v1627 = vsel %vm1546, %v913, 0
        %v1628 = vsel %vm1553, %v914, 0
        %v1629 = vsel %vm1560, %v915, 0
        %v1630 = vsel %vm1567, %v916, 0
        %v1631 = vsel %vm1574, %v917, 0
        %v1632 = vsel %vm1581, %v918, 0
        %v1633 = vsel %vm1588, %v919, 0
        %v1634 = vsel %vm1595, %v920, 0
        %v1635 = vsel %vm1602, %v921, 0
        %v1636 = vld [vmem:[%s3] sm:$0x3]
        %s1637 = scalar_lea.vmem %s3, 2
        %v1638 = vld [vmem:[%s1637] sm:$0x3]
        %v1671 = vunpack.c.l.b16 %v890
        %v1672 = vunpack.c.l.b16 %v891
        %v1673 = vunpack.c.l.b16 %v892
        %v1674 = vunpack.c.l.b16 %v893
        %v1675 = vunpack.c.l.b16 %v894
        %v1676 = vunpack.c.l.b16 %v895
        %v1677 = vunpack.c.l.b16 %v896
        %v1678 = vunpack.c.l.b16 %v897
        %v1679 = vunpack.c.l.b16 %v898
        %v1680 = vunpack.c.l.b16 %v899
        %v1681 = vunpack.c.l.b16 %v900
        %v1682 = vunpack.c.l.b16 %v901
        %v1683 = vunpack.c.l.b16 %v902
        %v1684 = vunpack.c.l.b16 %v903
        %v1685 = vunpack.c.l.b16 %v904
        %v1686 = vunpack.c.l.b16 %v905
        %v1687 = vunpack.c.l.b16 %v906
        %v1688 = vunpack.c.l.b16 %v907
        %v1689 = vunpack.c.l.b16 %v908
        %v1690 = vunpack.c.l.b16 %v909
        %v1691 = vunpack.c.l.b16 %v910
        %v1692 = vunpack.c.l.b16 %v911
        %v1693 = vunpack.c.l.b16 %v912
        %v1694 = vunpack.c.l.b16 %v913
        %v1695 = vunpack.c.l.b16 %v914
        %v1696 = vunpack.c.l.b16 %v915
        %v1697 = vunpack.c.l.b16 %v916
        %v1698 = vunpack.c.l.b16 %v917
        %v1699 = vunpack.c.l.b16 %v918
        %v1700 = vunpack.c.l.b16 %v919
        %v1701 = vunpack.c.l.b16 %v920
        %v1702 = vunpack.c.l.b16 %v921
        %v1703 = vpack.c.b16 %v1672, %v1671
        %v1704 = vpack.c.b16 %v1674, %v1673
        %v1705 = vpack.c.b16 %v1676, %v1675
        %v1706 = vpack.c.b16 %v1678, %v1677
        %v1707 = vpack.c.b16 %v1680, %v1679
        %v1708 = vpack.c.b16 %v1682, %v1681
        %v1709 = vpack.c.b16 %v1684, %v1683
        %v1710 = vpack.c.b16 %v1686, %v1685
        %v1711 = vpack.c.b16 %v1688, %v1687
        %v1712 = vpack.c.b16 %v1690, %v1689
        %v1713 = vpack.c.b16 %v1692, %v1691
        %v1714 = vpack.c.b16 %v1694, %v1693
        %v1715 = vpack.c.b16 %v1696, %v1695
        %v1716 = vpack.c.b16 %v1698, %v1697
        %v1717 = vpack.c.b16 %v1700, %v1699
        %v1718 = vpack.c.b16 %v1702, %v1701
        %vm1719 = vcmask 31744
        %v1721 = vsel %vm1719, %v1703, 0
        %v1724 = vsel %vm1719, %v1704, 0
        %v1727 = vsel %vm1719, %v1705, 0
        %v1730 = vsel %vm1719, %v1706, 0
        %v1733 = vsel %vm1719, %v1707, 0
        %v1736 = vsel %vm1719, %v1708, 0
        %v1739 = vsel %vm1719, %v1709, 0
        %v1742 = vsel %vm1719, %v1710, 0
        %v1745 = vsel %vm1719, %v1711, 0
        %v1748 = vsel %vm1719, %v1712, 0
        %v1751 = vsel %vm1719, %v1713, 0
        %v1754 = vsel %vm1719, %v1714, 0
        %v1757 = vsel %vm1719, %v1715, 0
        %v1760 = vsel %vm1719, %v1716, 0
        %v1763 = vsel %vm1719, %v1717, 0
        %v1766 = vsel %vm1719, %v1718, 0
        %vm1768 = vcmask 1041408
        %v1770 = vsel %vm1768, %v1638, 0
        %1772 = vmatpush.bf16.msra.mxu0 0
        %1773 = vmatpush.bf16.msra.mxu0 0
        %1774 = vmatpush.bf16.msra.mxu0 0
        %1775 = vmatpush.bf16.msra.mxu0 0
        %1776 = vmatpush.bf16.msra.mxu0 0
        %1777 = vmatpush.bf16.msra.mxu0 0
        %1778 = vmatpush.bf16.msra.mxu0 0
        %1779 = vmatpush.bf16.msra.mxu0 %v1770
        %1780 = vmatmul.bf16.gmra.mxu0 %v1721
        %v1781 = vpop.f32.mrf.mxu0
        %v1782 = vadd.f32 0.0, %v1781
        %v1783 = vpop.f32.mrf.mxu0
        %v1784 = vadd.f32 0.0, %v1783
        %1785 = vmatmul.bf16.gmra.mxu0 %v1724
        %v1786 = vpop.f32.mrf.mxu0
        %v1787 = vadd.f32 0.0, %v1786
        %v1788 = vpop.f32.mrf.mxu0
        %v1789 = vadd.f32 0.0, %v1788
        %1790 = vmatmul.bf16.gmra.mxu0 %v1727
        %v1791 = vpop.f32.mrf.mxu0
        %v1792 = vadd.f32 0.0, %v1791
        %v1793 = vpop.f32.mrf.mxu0
        %v1794 = vadd.f32 0.0, %v1793
        %1795 = vmatmul.bf16.gmra.mxu0 %v1730
        %v1796 = vpop.f32.mrf.mxu0
        %v1797 = vadd.f32 0.0, %v1796
        %v1798 = vpop.f32.mrf.mxu0
        %v1799 = vadd.f32 0.0, %v1798
        %1800 = vmatmul.bf16.gmra.mxu0 %v1733
        %v1801 = vpop.f32.mrf.mxu0
        %v1802 = vadd.f32 0.0, %v1801
        %v1803 = vpop.f32.mrf.mxu0
        %v1804 = vadd.f32 0.0, %v1803
        %1805 = vmatmul.bf16.gmra.mxu0 %v1736
        %v1806 = vpop.f32.mrf.mxu0
        %v1807 = vadd.f32 0.0, %v1806
        %v1808 = vpop.f32.mrf.mxu0
        %v1809 = vadd.f32 0.0, %v1808
        %1810 = vmatmul.bf16.gmra.mxu0 %v1739
        %v1811 = vpop.f32.mrf.mxu0
        %v1812 = vadd.f32 0.0, %v1811
        %v1813 = vpop.f32.mrf.mxu0
        %v1814 = vadd.f32 0.0, %v1813
        %1815 = vmatmul.bf16.gmra.mxu0 %v1742
        %v1816 = vpop.f32.mrf.mxu0
        %v1817 = vadd.f32 0.0, %v1816
        %v1818 = vpop.f32.mrf.mxu0
        %v1819 = vadd.f32 0.0, %v1818
        %1820 = vmatmul.bf16.gmra.mxu0 %v1745
        %v1821 = vpop.f32.mrf.mxu0
        %v1822 = vadd.f32 0.0, %v1821
        %v1823 = vpop.f32.mrf.mxu0
        %v1824 = vadd.f32 0.0, %v1823
        %1825 = vmatmul.bf16.gmra.mxu0 %v1748
        %v1826 = vpop.f32.mrf.mxu0
        %v1827 = vadd.f32 0.0, %v1826
        %v1828 = vpop.f32.mrf.mxu0
        %v1829 = vadd.f32 0.0, %v1828
        %1830 = vmatmul.bf16.gmra.mxu0 %v1751
        %v1831 = vpop.f32.mrf.mxu0
        %v1832 = vadd.f32 0.0, %v1831
        %v1833 = vpop.f32.mrf.mxu0
        %v1834 = vadd.f32 0.0, %v1833
        %1835 = vmatmul.bf16.gmra.mxu0 %v1754
        %v1836 = vpop.f32.mrf.mxu0
        %v1837 = vadd.f32 0.0, %v1836
        %v1838 = vpop.f32.mrf.mxu0
        %v1839 = vadd.f32 0.0, %v1838
        %1840 = vmatmul.bf16.gmra.mxu0 %v1757
        %v1841 = vpop.f32.mrf.mxu0
        %v1842 = vadd.f32 0.0, %v1841
        %v1843 = vpop.f32.mrf.mxu0
        %v1844 = vadd.f32 0.0, %v1843
        %1845 = vmatmul.bf16.gmra.mxu0 %v1760
        %v1846 = vpop.f32.mrf.mxu0
        %v1847 = vadd.f32 0.0, %v1846
        %v1848 = vpop.f32.mrf.mxu0
        %v1849 = vadd.f32 0.0, %v1848
        %1850 = vmatmul.bf16.gmra.mxu0 %v1763
        %v1851 = vpop.f32.mrf.mxu0
        %v1852 = vadd.f32 0.0, %v1851
        %v1853 = vpop.f32.mrf.mxu0
        %v1854 = vadd.f32 0.0, %v1853
        %1855 = vmatmul.bf16.gmra.mxu0 %v1766
        %v1856 = vpop.f32.mrf.mxu0
        %v1857 = vadd.f32 0.0, %v1856
        %v1858 = vpop.f32.mrf.mxu0
        %v1859 = vadd.f32 0.0, %v1858
        %1860 = vdwg.mxu0
        %v1894 = vunpack.c.l.b16 %v1603
        %v1895 = vunpack.c.l.b16 %v1604
        %v1896 = vunpack.c.l.b16 %v1605
        %v1897 = vunpack.c.l.b16 %v1606
        %v1898 = vunpack.c.l.b16 %v1607
        %v1899 = vunpack.c.l.b16 %v1608
        %v1900 = vunpack.c.l.b16 %v1609
        %v1901 = vunpack.c.l.b16 %v1610
        %v1902 = vunpack.c.l.b16 %v1611
        %v1903 = vunpack.c.l.b16 %v1612
        %v1904 = vunpack.c.l.b16 %v1613
        %v1905 = vunpack.c.l.b16 %v1614
        %v1906 = vunpack.c.l.b16 %v1615
        %v1907 = vunpack.c.l.b16 %v1616
        %v1908 = vunpack.c.l.b16 %v1617
        %v1909 = vunpack.c.l.b16 %v1618
        %v1910 = vunpack.c.l.b16 %v1619
        %v1911 = vunpack.c.l.b16 %v1620
        %v1912 = vunpack.c.l.b16 %v1621
        %v1913 = vunpack.c.l.b16 %v1622
        %v1914 = vunpack.c.l.b16 %v1623
        %v1915 = vunpack.c.l.b16 %v1624
        %v1916 = vunpack.c.l.b16 %v1625
        %v1917 = vunpack.c.l.b16 %v1626
        %v1918 = vunpack.c.l.b16 %v1627
        %v1919 = vunpack.c.l.b16 %v1628
        %v1920 = vunpack.c.l.b16 %v1629
        %v1921 = vunpack.c.l.b16 %v1630
        %v1922 = vunpack.c.l.b16 %v1631
        %v1923 = vunpack.c.l.b16 %v1632
        %v1924 = vunpack.c.l.b16 %v1633
        %v1925 = vunpack.c.l.b16 %v1634
        %v1926 = vunpack.c.l.b16 %v1635
        %v1927 = vpack.c.b16 %v1895, %v1894
        %v1928 = vpack.c.b16 %v1897, %v1896
        %v1929 = vpack.c.b16 %v1899, %v1898
        %v1930 = vpack.c.b16 %v1901, %v1900
        %v1931 = vpack.c.b16 %v1903, %v1902
        %v1932 = vpack.c.b16 %v1905, %v1904
        %v1933 = vpack.c.b16 %v1907, %v1906
        %v1934 = vpack.c.b16 %v1909, %v1908
        %v1935 = vpack.c.b16 %v1911, %v1910
        %v1936 = vpack.c.b16 %v1913, %v1912
        %v1937 = vpack.c.b16 %v1915, %v1914
        %v1938 = vpack.c.b16 %v1917, %v1916
        %v1939 = vpack.c.b16 %v1919, %v1918
        %v1940 = vpack.c.b16 %v1921, %v1920
        %v1941 = vpack.c.b16 %v1923, %v1922
        %v1942 = vpack.c.b16 %v1925, %v1924
        %v1943 = vpack.c.b16 %v1926, %v1926
        %vm1944 = vsmask.f32 4352
        %v1946 = vshrl.u32 %v1927, 16
        %v1948 = vrot.slane %v1946, 3
        %v1949 = vshll.u32 %v1927, 16
        %v1951 = vrot.slane %v1949, 4
        %v1952 = vor.u32 %v1948, %v1951
        %v1954 = vshrl.u32 %v1928, 16
        %v1956 = vrot.slane %v1954, 3
        %v1957 = vshll.u32 %v1928, 16
        %v1959 = vrot.slane %v1957, 4
        %v1960 = vor.u32 %v1956, %v1959
        %v1961 = vsel %vm1944, %v1952, %v1960
        %v1963 = vshrl.u32 %v1929, 16
        %v1965 = vrot.slane %v1963, 3
        %v1966 = vshll.u32 %v1929, 16
        %v1968 = vrot.slane %v1966, 4
        %v1969 = vor.u32 %v1965, %v1968
        %v1970 = vsel %vm1944, %v1960, %v1969
        %v1972 = vshrl.u32 %v1930, 16
        %v1974 = vrot.slane %v1972, 3
        %v1975 = vshll.u32 %v1930, 16
        %v1977 = vrot.slane %v1975, 4
        %v1978 = vor.u32 %v1974, %v1977
        %v1979 = vsel %vm1944, %v1969, %v1978
        %v1981 = vshrl.u32 %v1931, 16
        %v1983 = vrot.slane %v1981, 3
        %v1984 = vshll.u32 %v1931, 16
        %v1986 = vrot.slane %v1984, 4
        %v1987 = vor.u32 %v1983, %v1986
        %v1988 = vsel %vm1944, %v1978, %v1987
        %v1990 = vshrl.u32 %v1932, 16
        %v1992 = vrot.slane %v1990, 3
        %v1993 = vshll.u32 %v1932, 16
        %v1995 = vrot.slane %v1993, 4
        %v1996 = vor.u32 %v1992, %v1995
        %v1997 = vsel %vm1944, %v1987, %v1996
        %v1999 = vshrl.u32 %v1933, 16
        %v2001 = vrot.slane %v1999, 3
        %v2002 = vshll.u32 %v1933, 16
        %v2004 = vrot.slane %v2002, 4
        %v2005 = vor.u32 %v2001, %v2004
        %v2006 = vsel %vm1944, %v1996, %v2005
        %v2008 = vshrl.u32 %v1934, 16
        %v2010 = vrot.slane %v2008, 3
        %v2011 = vshll.u32 %v1934, 16
        %v2013 = vrot.slane %v2011, 4
        %v2014 = vor.u32 %v2010, %v2013
        %v2015 = vsel %vm1944, %v2005, %v2014
        %v2017 = vshrl.u32 %v1935, 16
        %v2019 = vrot.slane %v2017, 3
        %v2020 = vshll.u32 %v1935, 16
        %v2022 = vrot.slane %v2020, 4
        %v2023 = vor.u32 %v2019, %v2022
        %v2024 = vsel %vm1944, %v2014, %v2023
        %v2026 = vshrl.u32 %v1936, 16
        %v2028 = vrot.slane %v2026, 3
        %v2029 = vshll.u32 %v1936, 16
        %v2031 = vrot.slane %v2029, 4
        %v2032 = vor.u32 %v2028, %v2031
        %v2033 = vsel %vm1944, %v2023, %v2032
        %v2035 = vshrl.u32 %v1937, 16
        %v2037 = vrot.slane %v2035, 3
        %v2038 = vshll.u32 %v1937, 16
        %v2040 = vrot.slane %v2038, 4
        %v2041 = vor.u32 %v2037, %v2040
        %v2042 = vsel %vm1944, %v2032, %v2041
        %v2044 = vshrl.u32 %v1938, 16
        %v2046 = vrot.slane %v2044, 3
        %v2047 = vshll.u32 %v1938, 16
        %v2049 = vrot.slane %v2047, 4
        %v2050 = vor.u32 %v2046, %v2049
        %v2051 = vsel %vm1944, %v2041, %v2050
        %v2053 = vshrl.u32 %v1939, 16
        %v2055 = vrot.slane %v2053, 3
        %v2056 = vshll.u32 %v1939, 16
        %v2058 = vrot.slane %v2056, 4
        %v2059 = vor.u32 %v2055, %v2058
        %v2060 = vsel %vm1944, %v2050, %v2059
        %v2062 = vshrl.u32 %v1940, 16
        %v2064 = vrot.slane %v2062, 3
        %v2065 = vshll.u32 %v1940, 16
        %v2067 = vrot.slane %v2065, 4
        %v2068 = vor.u32 %v2064, %v2067
        %v2069 = vsel %vm1944, %v2059, %v2068
        %v2071 = vshrl.u32 %v1941, 16
        %v2073 = vrot.slane %v2071, 3
        %v2074 = vshll.u32 %v1941, 16
        %v2076 = vrot.slane %v2074, 4
        %v2077 = vor.u32 %v2073, %v2076
        %v2078 = vsel %vm1944, %v2068, %v2077
        %v2080 = vshrl.u32 %v1942, 16
        %v2082 = vrot.slane %v2080, 3
        %v2083 = vshll.u32 %v1942, 16
        %v2085 = vrot.slane %v2083, 4
        %v2086 = vor.u32 %v2082, %v2085
        %v2087 = vsel %vm1944, %v2077, %v2086
        %v2089 = vshrl.u32 %v1943, 16
        %v2091 = vrot.slane %v2089, 3
        %v2092 = vshll.u32 %v1943, 16
        %v2094 = vrot.slane %v2092, 4
        %v2095 = vor.u32 %v2091, %v2094
        %v2096 = vsel %vm1944, %v2086, %v2095
        %v2098 = vsel %vm1719, %v1961, 0
        %v2101 = vsel %vm1719, %v1970, 0
        %v2104 = vsel %vm1719, %v1979, 0
        %v2107 = vsel %vm1719, %v1988, 0
        %v2110 = vsel %vm1719, %v1997, 0
        %v2113 = vsel %vm1719, %v2006, 0
        %v2116 = vsel %vm1719, %v2015, 0
        %v2119 = vsel %vm1719, %v2024, 0
        %v2122 = vsel %vm1719, %v2033, 0
        %v2125 = vsel %vm1719, %v2042, 0
        %v2128 = vsel %vm1719, %v2051, 0
        %v2131 = vsel %vm1719, %v2060, 0
        %v2134 = vsel %vm1719, %v2069, 0
        %v2137 = vsel %vm1719, %v2078, 0
        %v2140 = vsel %vm1719, %v2087, 0
        %v2143 = vsel %vm1719, %v2096, 0
        %v2146 = vsel %vm1768, %v1636, 0
        %2148 = vmatpush.bf16.msra.mxu0 0
        %2149 = vmatpush.bf16.msra.mxu0 0
        %2150 = vmatpush.bf16.msra.mxu0 0
        %2151 = vmatpush.bf16.msra.mxu0 0
        %2152 = vmatpush.bf16.msra.mxu0 0
        %2153 = vmatpush.bf16.msra.mxu0 0
        %2154 = vmatpush.bf16.msra.mxu0 0
        %2155 = vmatpush.bf16.msra.mxu0 %v2146
        %2156 = vmatmul.bf16.gmra.mxu0 %v2098
        %v2157 = vpop.f32.mrf.mxu0
        %v2158 = vadd.f32 %v1782, %v2157
        %v2159 = vpop.f32.mrf.mxu0
        %v2160 = vadd.f32 %v1784, %v2159
        %2161 = vmatmul.bf16.gmra.mxu0 %v2101
        %v2162 = vpop.f32.mrf.mxu0
        %v2163 = vadd.f32 %v1787, %v2162
        %v2164 = vpop.f32.mrf.mxu0
        %v2165 = vadd.f32 %v1789, %v2164
        %2166 = vmatmul.bf16.gmra.mxu0 %v2104
        %v2167 = vpop.f32.mrf.mxu0
        %v2168 = vadd.f32 %v1792, %v2167
        %v2169 = vpop.f32.mrf.mxu0
        %v2170 = vadd.f32 %v1794, %v2169
        %2171 = vmatmul.bf16.gmra.mxu0 %v2107
        %v2172 = vpop.f32.mrf.mxu0
        %v2173 = vadd.f32 %v1797, %v2172
        %v2174 = vpop.f32.mrf.mxu0
        %v2175 = vadd.f32 %v1799, %v2174
        %2176 = vmatmul.bf16.gmra.mxu0 %v2110
        %v2177 = vpop.f32.mrf.mxu0
        %v2178 = vadd.f32 %v1802, %v2177
        %v2179 = vpop.f32.mrf.mxu0
        %v2180 = vadd.f32 %v1804, %v2179
        %2181 = vmatmul.bf16.gmra.mxu0 %v2113
        %v2182 = vpop.f32.mrf.mxu0
        %v2183 = vadd.f32 %v1807, %v2182
        %v2184 = vpop.f32.mrf.mxu0
        %v2185 = vadd.f32 %v1809, %v2184
        %2186 = vmatmul.bf16.gmra.mxu0 %v2116
        %v2187 = vpop.f32.mrf.mxu0
        %v2188 = vadd.f32 %v1812, %v2187
        %v2189 = vpop.f32.mrf.mxu0
        %v2190 = vadd.f32 %v1814, %v2189
        %2191 = vmatmul.bf16.gmra.mxu0 %v2119
        %v2192 = vpop.f32.mrf.mxu0
        %v2193 = vadd.f32 %v1817, %v2192
        %v2194 = vpop.f32.mrf.mxu0
        %v2195 = vadd.f32 %v1819, %v2194
        %2196 = vmatmul.bf16.gmra.mxu0 %v2122
        %v2197 = vpop.f32.mrf.mxu0
        %v2198 = vadd.f32 %v1822, %v2197
        %v2199 = vpop.f32.mrf.mxu0
        %v2200 = vadd.f32 %v1824, %v2199
        %2201 = vmatmul.bf16.gmra.mxu0 %v2125
        %v2202 = vpop.f32.mrf.mxu0
        %v2203 = vadd.f32 %v1827, %v2202
        %v2204 = vpop.f32.mrf.mxu0
        %v2205 = vadd.f32 %v1829, %v2204
        %2206 = vmatmul.bf16.gmra.mxu0 %v2128
        %v2207 = vpop.f32.mrf.mxu0
        %v2208 = vadd.f32 %v1832, %v2207
        %v2209 = vpop.f32.mrf.mxu0
        %v2210 = vadd.f32 %v1834, %v2209
        %2211 = vmatmul.bf16.gmra.mxu0 %v2131
        %v2212 = vpop.f32.mrf.mxu0
        %v2213 = vadd.f32 %v1837, %v2212
        %v2214 = vpop.f32.mrf.mxu0
        %v2215 = vadd.f32 %v1839, %v2214
        %2216 = vmatmul.bf16.gmra.mxu0 %v2134
        %v2217 = vpop.f32.mrf.mxu0
        %v2218 = vadd.f32 %v1842, %v2217
        %v2219 = vpop.f32.mrf.mxu0
        %v2220 = vadd.f32 %v1844, %v2219
        %2221 = vmatmul.bf16.gmra.mxu0 %v2137
        %v2222 = vpop.f32.mrf.mxu0
        %v2223 = vadd.f32 %v1847, %v2222
        %v2224 = vpop.f32.mrf.mxu0
        %v2225 = vadd.f32 %v1849, %v2224
        %2226 = vmatmul.bf16.gmra.mxu0 %v2140
        %v2227 = vpop.f32.mrf.mxu0
        %v2228 = vadd.f32 %v1852, %v2227
        %v2229 = vpop.f32.mrf.mxu0
        %v2230 = vadd.f32 %v1854, %v2229
        %2231 = vmatmul.bf16.gmra.mxu0 %v2143
        %v2232 = vpop.f32.mrf.mxu0
        %v2233 = vadd.f32 %v1857, %v2232
        %v2234 = vpop.f32.mrf.mxu0
        %v2235 = vadd.f32 %v1859, %v2234
        %2236 = vdwg.mxu0
        %v2237 = vld [vmem:[#allocation2 + $0x8] sm:$0xf]
        %v2238 = vld [vmem:[#allocation2 + $0xc] sm:$0xf]
        %v2239 = vld [vmem:[#allocation2 + $0x10] sm:$0xf]
        %v2240 = vld [vmem:[#allocation2 + $0x14] sm:$0xf]
        %v2241 = vld [vmem:[#allocation2 + $0x18] sm:$0xf]
        %v2242 = vld [vmem:[#allocation2 + $0x1c] sm:$0xf]
        %v2243 = vld [vmem:[#allocation2 + $0x20] sm:$0xf]
        %v2244 = vld [vmem:[#allocation2 + $0x24] sm:$0xf]
        %v2245 = vld [vmem:[#allocation2 + $0x28] sm:$0xf]
        %v2246 = vld [vmem:[#allocation2 + $0x2c] sm:$0xf]
        %v2247 = vld [vmem:[#allocation2 + $0x30] sm:$0xf]
        %v2248 = vld [vmem:[#allocation2 + $0x34] sm:$0xf]
        %v2249 = vld [vmem:[#allocation2 + $0x38] sm:$0xf]
        %v2250 = vld [vmem:[#allocation2 + $0x3c] sm:$0xf]
        %v2251 = vld [vmem:[#allocation2 + $0x40] sm:$0xf]
        %v2252 = vld [vmem:[#allocation2 + $0x44] sm:$0xf]
        %v2253 = vld [vmem:[#allocation2 + $0x48] sm:$0xf]
        %v2254 = vld [vmem:[#allocation2 + $0x4c] sm:$0xf]
        %v2255 = vld [vmem:[#allocation2 + $0x50] sm:$0xf]
        %v2256 = vld [vmem:[#allocation2 + $0x54] sm:$0xf]
        %v2257 = vld [vmem:[#allocation2 + $0x58] sm:$0xf]
        %v2258 = vld [vmem:[#allocation2 + $0x5c] sm:$0xf]
        %v2259 = vld [vmem:[#allocation2 + $0x60] sm:$0xf]
        %v2260 = vld [vmem:[#allocation2 + $0x64] sm:$0xf]
        %v2261 = vld [vmem:[#allocation2 + $0x68] sm:$0xf]
        %v2262 = vld [vmem:[#allocation2 + $0x6c] sm:$0xf]
        %v2263 = vld [vmem:[#allocation2 + $0x70] sm:$0xf]
        %v2264 = vld [vmem:[#allocation2 + $0x74] sm:$0xf]
        %v2265 = vld [vmem:[#allocation2 + $0x78] sm:$0xf]
        %v2266 = vld [vmem:[#allocation2 + $0x7c] sm:$0xf]
        %v2267 = vld [vmem:[#allocation2 + $0x80] sm:$0xf]
        %v2268 = vld [vmem:[#allocation2 + $0x84] sm:$0xf]
        %v2269 = vld [vmem:[#allocation2 + $0x88] sm:$0x1]
        %v2270 = vsel %vm857, 1, 0
        %v2271 = vsel %vm858, 1, 0
        %v2272 = vsel %vm859, 1, 0
        %v2273 = vsel %vm860, 1, 0
        %v2274 = vsel %vm861, 1, 0
        %v2275 = vsel %vm862, 1, 0
        %v2276 = vsel %vm863, 1, 0
        %v2277 = vsel %vm864, 1, 0
        %v2278 = vsel %vm865, 1, 0
        %v2279 = vsel %vm866, 1, 0
        %v2280 = vsel %vm867, 1, 0
        %v2281 = vsel %vm868, 1, 0
        %v2282 = vsel %vm869, 1, 0
        %v2283 = vsel %vm870, 1, 0
        %v2284 = vsel %vm871, 1, 0
        %v2285 = vsel %vm872, 1, 0
        %v2286 = vsel %vm873, 1, 0
        %v2287 = vsel %vm874, 1, 0
        %v2288 = vsel %vm875, 1, 0
        %v2289 = vsel %vm876, 1, 0
        %v2290 = vsel %vm877, 1, 0
        %v2291 = vsel %vm878, 1, 0
        %v2292 = vsel %vm879, 1, 0
        %v2293 = vsel %vm880, 1, 0
        %v2294 = vsel %vm881, 1, 0
        %v2295 = vsel %vm882, 1, 0
        %v2296 = vsel %vm883, 1, 0
        %v2297 = vsel %vm884, 1, 0
        %v2298 = vsel %vm885, 1, 0
        %v2299 = vsel %vm886, 1, 0
        %v2300 = vsel %vm887, 1, 0
        %v2301 = vsel %vm888, 1, 0
        %vm2302 = vcmp.eq.s32.totalorder %v2270, 1
        %vm2303 = vcmp.eq.s32.totalorder %v2271, 1
        %vm2304 = vcmp.eq.s32.totalorder %v2272, 1
        %vm2305 = vcmp.eq.s32.totalorder %v2273, 1
        %vm2306 = vcmp.eq.s32.totalorder %v2274, 1
        %vm2307 = vcmp.eq.s32.totalorder %v2275, 1
        %vm2308 = vcmp.eq.s32.totalorder %v2276, 1
        %vm2309 = vcmp.eq.s32.totalorder %v2277, 1
        %vm2310 = vcmp.eq.s32.totalorder %v2278, 1
        %vm2311 = vcmp.eq.s32.totalorder %v2279, 1
        %vm2312 = vcmp.eq.s32.totalorder %v2280, 1
        %vm2313 = vcmp.eq.s32.totalorder %v2281, 1
        %vm2314 = vcmp.eq.s32.totalorder %v2282, 1
        %vm2315 = vcmp.eq.s32.totalorder %v2283, 1
        %vm2316 = vcmp.eq.s32.totalorder %v2284, 1
        %vm2317 = vcmp.eq.s32.totalorder %v2285, 1
        %vm2318 = vcmp.eq.s32.totalorder %v2286, 1
        %vm2319 = vcmp.eq.s32.totalorder %v2287, 1
        %vm2320 = vcmp.eq.s32.totalorder %v2288, 1
        %vm2321 = vcmp.eq.s32.totalorder %v2289, 1
        %vm2322 = vcmp.eq.s32.totalorder %v2290, 1
        %vm2323 = vcmp.eq.s32.totalorder %v2291, 1
        %vm2324 = vcmp.eq.s32.totalorder %v2292, 1
        %vm2325 = vcmp.eq.s32.totalorder %v2293, 1
        %vm2326 = vcmp.eq.s32.totalorder %v2294, 1
        %vm2327 = vcmp.eq.s32.totalorder %v2295, 1
        %vm2328 = vcmp.eq.s32.totalorder %v2296, 1
        %vm2329 = vcmp.eq.s32.totalorder %v2297, 1
        %vm2330 = vcmp.eq.s32.totalorder %v2298, 1
        %vm2331 = vcmp.eq.s32.totalorder %v2299, 1
        %vm2332 = vcmp.eq.s32.totalorder %v2300, 1
        %vm2333 = vcmp.eq.s32.totalorder %v2301, 1
        %vm2334 = vmpackc.low %vm2302, %vm2302
        %vm2335 = vmpackc.low %vm2303, %vm2303
        %vm2336 = vmpackc.low %vm2304, %vm2304
        %vm2337 = vmpackc.low %vm2305, %vm2305
        %vm2338 = vmpackc.low %vm2306, %vm2306
        %vm2339 = vmpackc.low %vm2307, %vm2307
        %vm2340 = vmpackc.low %vm2308, %vm2308
        %vm2341 = vmpackc.low %vm2309, %vm2309
        %vm2342 = vmpackc.low %vm2310, %vm2310
        %vm2343 = vmpackc.low %vm2311, %vm2311
        %vm2344 = vmpackc.low %vm2312, %vm2312
        %vm2345 = vmpackc.low %vm2313, %vm2313
        %vm2346 = vmpackc.low %vm2314, %vm2314
        %vm2347 = vmpackc.low %vm2315, %vm2315
        %vm2348 = vmpackc.low %vm2316, %vm2316
        %vm2349 = vmpackc.low %vm2317, %vm2317
        %vm2350 = vmpackc.low %vm2318, %vm2318
        %vm2351 = vmpackc.low %vm2319, %vm2319
        %vm2352 = vmpackc.low %vm2320, %vm2320
        %vm2353 = vmpackc.low %vm2321, %vm2321
        %vm2354 = vmpackc.low %vm2322, %vm2322
        %vm2355 = vmpackc.low %vm2323, %vm2323
        %vm2356 = vmpackc.low %vm2324, %vm2324
        %vm2357 = vmpackc.low %vm2325, %vm2325
        %vm2358 = vmpackc.low %vm2326, %vm2326
        %vm2359 = vmpackc.low %vm2327, %vm2327
        %vm2360 = vmpackc.low %vm2328, %vm2328
        %vm2361 = vmpackc.low %vm2329, %vm2329
        %vm2362 = vmpackc.low %vm2330, %vm2330
        %vm2363 = vmpackc.low %vm2331, %vm2331
        %vm2364 = vmpackc.low %vm2332, %vm2332
        %vm2365 = vmpackc.low %vm2333, %vm2333
        %v2366 = vsel %vm2334, 65537, 0
        %v2367 = vsel %vm2335, 65537, 0
        %v2368 = vsel %vm2336, 65537, 0
        %v2369 = vsel %vm2337, 65537, 0
        %v2370 = vsel %vm2338, 65537, 0
        %v2371 = vsel %vm2339, 65537, 0
        %v2372 = vsel %vm2340, 65537, 0
        %v2373 = vsel %vm2341, 65537, 0
        %v2374 = vsel %vm2342, 65537, 0
        %v2375 = vsel %vm2343, 65537, 0
        %v2376 = vsel %vm2344, 65537, 0
        %v2377 = vsel %vm2345, 65537, 0
        %v2378 = vsel %vm2346, 65537, 0
        %v2379 = vsel %vm2347, 65537, 0
        %v2380 = vsel %vm2348, 65537, 0
        %v2381 = vsel %vm2349, 65537, 0
        %v2382 = vsel %vm2350, 65537, 0
        %v2383 = vsel %vm2351, 65537, 0
        %v2384 = vsel %vm2352, 65537, 0
        %v2385 = vsel %vm2353, 65537, 0
        %v2386 = vsel %vm2354, 65537, 0
        %v2387 = vsel %vm2355, 65537, 0
        %v2388 = vsel %vm2356, 65537, 0
        %v2389 = vsel %vm2357, 65537, 0
        %v2390 = vsel %vm2358, 65537, 0
        %v2391 = vsel %vm2359, 65537, 0
        %v2392 = vsel %vm2360, 65537, 0
        %v2393 = vsel %vm2361, 65537, 0
        %v2394 = vsel %vm2362, 65537, 0
        %v2395 = vsel %vm2363, 65537, 0
        %v2396 = vsel %vm2364, 65537, 0
        %v2397 = vsel %vm2365, 65537, 0
        %vm2398 = vsmask.f32 256
        %vm2399 = vsmask.f32 4368
        %vm2400 = vmor %vm2398, %vm2399
        %v2402 = vshrl.u32 %v2366, 16
        %v2404 = vrot.slane %v2402, 7
        %v2405 = vshll.u32 %v2366, 16
        %v2407 = vor.u32 %v2404, %v2405
        %v2408 = vrot.slane %v2404, 4
        %v2410 = vshrl.u32 %v2367, 16
        %v2412 = vrot.slane %v2410, 7
        %v2413 = vshll.u32 %v2367, 16
        %v2415 = vor.u32 %v2412, %v2413
        %v2416 = vsel %vm2400, %v2408, %v2415
        %v2417 = vrot.slane %v2412, 4
        %v2419 = vshrl.u32 %v2368, 16
        %v2421 = vrot.slane %v2419, 7
        %v2422 = vshll.u32 %v2368, 16
        %v2424 = vor.u32 %v2421, %v2422
        %v2425 = vsel %vm2400, %v2417, %v2424
        %v2426 = vrot.slane %v2421, 4
        %v2428 = vshrl.u32 %v2369, 16
        %v2430 = vrot.slane %v2428, 7
        %v2431 = vshll.u32 %v2369, 16
        %v2433 = vor.u32 %v2430, %v2431
        %v2434 = vsel %vm2400, %v2426, %v2433
        %v2435 = vrot.slane %v2430, 4
        %v2437 = vshrl.u32 %v2370, 16
        %v2439 = vrot.slane %v2437, 7
        %v2440 = vshll.u32 %v2370, 16
        %v2442 = vor.u32 %v2439, %v2440
        %v2443 = vsel %vm2400, %v2435, %v2442
        %v2444 = vrot.slane %v2439, 4
        %v2446 = vshrl.u32 %v2371, 16
        %v2448 = vrot.slane %v2446, 7
        %v2449 = vshll.u32 %v2371, 16
        %v2451 = vor.u32 %v2448, %v2449
        %v2452 = vsel %vm2400, %v2444, %v2451
        %v2453 = vrot.slane %v2448, 4
        %v2455 = vshrl.u32 %v2372, 16
        %v2457 = vrot.slane %v2455, 7
        %v2458 = vshll.u32 %v2372, 16
        %v2460 = vor.u32 %v2457, %v2458
        %v2461 = vsel %vm2400, %v2453, %v2460
        %v2462 = vrot.slane %v2457, 4
        %v2464 = vshrl.u32 %v2373, 16
        %v2466 = vrot.slane %v2464, 7
        %v2467 = vshll.u32 %v2373, 16
        %v2469 = vor.u32 %v2466, %v2467
        %v2470 = vsel %vm2400, %v2462, %v2469
        %v2471 = vrot.slane %v2466, 4
        %v2473 = vshrl.u32 %v2374, 16
        %v2475 = vrot.slane %v2473, 7
        %v2476 = vshll.u32 %v2374, 16
        %v2478 = vor.u32 %v2475, %v2476
        %v2479 = vsel %vm2400, %v2471, %v2478
        %v2480 = vrot.slane %v2475, 4
        %v2482 = vshrl.u32 %v2375, 16
        %v2484 = vrot.slane %v2482, 7
        %v2485 = vshll.u32 %v2375, 16
        %v2487 = vor.u32 %v2484, %v2485
        %v2488 = vsel %vm2400, %v2480, %v2487
        %v2489 = vrot.slane %v2484, 4
        %v2491 = vshrl.u32 %v2376, 16
        %v2493 = vrot.slane %v2491, 7
        %v2494 = vshll.u32 %v2376, 16
        %v2496 = vor.u32 %v2493, %v2494
        %v2497 = vsel %vm2400, %v2489, %v2496
        %v2498 = vrot.slane %v2493, 4
        %v2500 = vshrl.u32 %v2377, 16
        %v2502 = vrot.slane %v2500, 7
        %v2503 = vshll.u32 %v2377, 16
        %v2505 = vor.u32 %v2502, %v2503
        %v2506 = vsel %vm2400, %v2498, %v2505
        %v2507 = vrot.slane %v2502, 4
        %v2509 = vshrl.u32 %v2378, 16
        %v2511 = vrot.slane %v2509, 7
        %v2512 = vshll.u32 %v2378, 16
        %v2514 = vor.u32 %v2511, %v2512
        %v2515 = vsel %vm2400, %v2507, %v2514
        %v2516 = vrot.slane %v2511, 4
        %v2518 = vshrl.u32 %v2379, 16
        %v2520 = vrot.slane %v2518, 7
        %v2521 = vshll.u32 %v2379, 16
        %v2523 = vor.u32 %v2520, %v2521
        %v2524 = vsel %vm2400, %v2516, %v2523
        %v2525 = vrot.slane %v2520, 4
        %v2527 = vshrl.u32 %v2380, 16
        %v2529 = vrot.slane %v2527, 7
        %v2530 = vshll.u32 %v2380, 16
        %v2532 = vor.u32 %v2529, %v2530
        %v2533 = vsel %vm2400, %v2525, %v2532
        %v2534 = vrot.slane %v2529, 4
        %v2536 = vshrl.u32 %v2381, 16
        %v2538 = vrot.slane %v2536, 7
        %v2539 = vshll.u32 %v2381, 16
        %v2541 = vor.u32 %v2538, %v2539
        %v2542 = vsel %vm2400, %v2534, %v2541
        %v2543 = vrot.slane %v2538, 4
        %v2545 = vshrl.u32 %v2382, 16
        %v2547 = vrot.slane %v2545, 7
        %v2548 = vshll.u32 %v2382, 16
        %v2550 = vor.u32 %v2547, %v2548
        %v2551 = vsel %vm2400, %v2543, %v2550
        %v2552 = vrot.slane %v2547, 4
        %v2554 = vshrl.u32 %v2383, 16
        %v2556 = vrot.slane %v2554, 7
        %v2557 = vshll.u32 %v2383, 16
        %v2559 = vor.u32 %v2556, %v2557
        %v2560 = vsel %vm2400, %v2552, %v2559
        %v2561 = vrot.slane %v2556, 4
        %v2563 = vshrl.u32 %v2384, 16
        %v2565 = vrot.slane %v2563, 7
        %v2566 = vshll.u32 %v2384, 16
        %v2568 = vor.u32 %v2565, %v2566
        %v2569 = vsel %vm2400, %v2561, %v2568
        %v2570 = vrot.slane %v2565, 4
        %v2572 = vshrl.u32 %v2385, 16
        %v2574 = vrot.slane %v2572, 7
        %v2575 = vshll.u32 %v2385, 16
        %v2577 = vor.u32 %v2574, %v2575
        %v2578 = vsel %vm2400, %v2570, %v2577
        %v2579 = vrot.slane %v2574, 4
        %v2581 = vshrl.u32 %v2386, 16
        %v2583 = vrot.slane %v2581, 7
        %v2584 = vshll.u32 %v2386, 16
        %v2586 = vor.u32 %v2583, %v2584
        %v2587 = vsel %vm2400, %v2579, %v2586
        %v2588 = vrot.slane %v2583, 4
        %v2590 = vshrl.u32 %v2387, 16
        %v2592 = vrot.slane %v2590, 7
        %v2593 = vshll.u32 %v2387, 16
        %v2595 = vor.u32 %v2592, %v2593
        %v2596 = vsel %vm2400, %v2588, %v2595
        %v2597 = vrot.slane %v2592, 4
        %v2599 = vshrl.u32 %v2388, 16
        %v2601 = vrot.slane %v2599, 7
        %v2602 = vshll.u32 %v2388, 16
        %v2604 = vor.u32 %v2601, %v2602
        %v2605 = vsel %vm2400, %v2597, %v2604
        %v2606 = vrot.slane %v2601, 4
        %v2608 = vshrl.u32 %v2389, 16
        %v2610 = vrot.slane %v2608, 7
        %v2611 = vshll.u32 %v2389, 16
        %v2613 = vor.u32 %v2610, %v2611
        %v2614 = vsel %vm2400, %v2606, %v2613
        %v2615 = vrot.slane %v2610, 4
        %v2617 = vshrl.u32 %v2390, 16
        %v2619 = vrot.slane %v2617, 7
        %v2620 = vshll.u32 %v2390, 16
        %v2622 = vor.u32 %v2619, %v2620
        %v2623 = vsel %vm2400, %v2615, %v2622
        %v2624 = vrot.slane %v2619, 4
        %v2626 = vshrl.u32 %v2391, 16
        %v2628 = vrot.slane %v2626, 7
        %v2629 = vshll.u32 %v2391, 16
        %v2631 = vor.u32 %v2628, %v2629
        %v2632 = vsel %vm2400, %v2624, %v2631
        %v2633 = vrot.slane %v2628, 4
        %v2635 = vshrl.u32 %v2392, 16
        %v2637 = vrot.slane %v2635, 7
        %v2638 = vshll.u32 %v2392, 16
        %v2640 = vor.u32 %v2637, %v2638
        %v2641 = vsel %vm2400, %v2633, %v2640
        %v2642 = vrot.slane %v2637, 4
        %v2644 = vshrl.u32 %v2393, 16
        %v2646 = vrot.slane %v2644, 7
        %v2647 = vshll.u32 %v2393, 16
        %v2649 = vor.u32 %v2646, %v2647
        %v2650 = vsel %vm2400, %v2642, %v2649
        %v2651 = vrot.slane %v2646, 4
        %v2653 = vshrl.u32 %v2394, 16
        %v2655 = vrot.slane %v2653, 7
        %v2656 = vshll.u32 %v2394, 16
        %v2658 = vor.u32 %v2655, %v2656
        %v2659 = vsel %vm2400, %v2651, %v2658
        %v2660 = vrot.slane %v2655, 4
        %v2662 = vshrl.u32 %v2395, 16
        %v2664 = vrot.slane %v2662, 7
        %v2665 = vshll.u32 %v2395, 16
        %v2667 = vor.u32 %v2664, %v2665
        %v2668 = vsel %vm2400, %v2660, %v2667
        %v2669 = vrot.slane %v2664, 4
        %v2671 = vshrl.u32 %v2396, 16
        %v2673 = vrot.slane %v2671, 7
        %v2674 = vshll.u32 %v2396, 16
        %v2676 = vor.u32 %v2673, %v2674
        %v2677 = vsel %vm2400, %v2669, %v2676
        %v2678 = vrot.slane %v2673, 4
        %v2680 = vshrl.u32 %v2397, 16
        %v2682 = vrot.slane %v2680, 7
        %v2683 = vshll.u32 %v2397, 16
        %v2685 = vor.u32 %v2682, %v2683
        %v2686 = vsel %vm2400, %v2678, %v2685
        %v2687 = vrot.slane %v2682, 4
        %v2688 = vunpack.c.l.b16 %v2407
        %v2689 = vunpack.c.h.b16 %v2407
        %v2690 = vunpack.c.l.b16 0
        %v2691 = vunpack.c.h.b16 0
        %vm2692 = vcmp.ne.s32.totalorder %v2688, %v2690
        %vm2693 = vcmp.ne.s32.totalorder %v2689, %v2691
        %vm2694 = vmpackc.low %vm2693, %vm2692
        %v2695 = vunpack.c.l.b16 %v2416
        %v2696 = vunpack.c.h.b16 %v2416
        %v2697 = vunpack.c.l.b16 0
        %v2698 = vunpack.c.h.b16 0
        %vm2699 = vcmp.ne.s32.totalorder %v2695, %v2697
        %vm2700 = vcmp.ne.s32.totalorder %v2696, %v2698
        %vm2701 = vmpackc.low %vm2700, %vm2699
        %v2702 = vunpack.c.l.b16 %v2425
        %v2703 = vunpack.c.h.b16 %v2425
        %v2704 = vunpack.c.l.b16 0
        %v2705 = vunpack.c.h.b16 0
        %vm2706 = vcmp.ne.s32.totalorder %v2702, %v2704
        %vm2707 = vcmp.ne.s32.totalorder %v2703, %v2705
        %vm2708 = vmpackc.low %vm2707, %vm2706
        %v2709 = vunpack.c.l.b16 %v2434
        %v2710 = vunpack.c.h.b16 %v2434
        %v2711 = vunpack.c.l.b16 0
        %v2712 = vunpack.c.h.b16 0
        %vm2713 = vcmp.ne.s32.totalorder %v2709, %v2711
        %vm2714 = vcmp.ne.s32.totalorder %v2710, %v2712
        %vm2715 = vmpackc.low %vm2714, %vm2713
        %v2716 = vunpack.c.l.b16 %v2443
        %v2717 = vunpack.c.h.b16 %v2443
        %v2718 = vunpack.c.l.b16 0
        %v2719 = vunpack.c.h.b16 0
        %vm2720 = vcmp.ne.s32.totalorder %v2716, %v2718
        %vm2721 = vcmp.ne.s32.totalorder %v2717, %v2719
        %vm2722 = vmpackc.low %vm2721, %vm2720
        %v2723 = vunpack.c.l.b16 %v2452
        %v2724 = vunpack.c.h.b16 %v2452
        %v2725 = vunpack.c.l.b16 0
        %v2726 = vunpack.c.h.b16 0
        %vm2727 = vcmp.ne.s32.totalorder %v2723, %v2725
        %vm2728 = vcmp.ne.s32.totalorder %v2724, %v2726
        %vm2729 = vmpackc.low %vm2728, %vm2727
        %v2730 = vunpack.c.l.b16 %v2461
        %v2731 = vunpack.c.h.b16 %v2461
        %v2732 = vunpack.c.l.b16 0
        %v2733 = vunpack.c.h.b16 0
        %vm2734 = vcmp.ne.s32.totalorder %v2730, %v2732
        %vm2735 = vcmp.ne.s32.totalorder %v2731, %v2733
        %vm2736 = vmpackc.low %vm2735, %vm2734
        %v2737 = vunpack.c.l.b16 %v2470
        %v2738 = vunpack.c.h.b16 %v2470
        %v2739 = vunpack.c.l.b16 0
        %v2740 = vunpack.c.h.b16 0
        %vm2741 = vcmp.ne.s32.totalorder %v2737, %v2739
        %vm2742 = vcmp.ne.s32.totalorder %v2738, %v2740
        %vm2743 = vmpackc.low %vm2742, %vm2741
        %v2744 = vunpack.c.l.b16 %v2479
        %v2745 = vunpack.c.h.b16 %v2479
        %v2746 = vunpack.c.l.b16 0
        %v2747 = vunpack.c.h.b16 0
        %vm2748 = vcmp.ne.s32.totalorder %v2744, %v2746
        %vm2749 = vcmp.ne.s32.totalorder %v2745, %v2747
        %vm2750 = vmpackc.low %vm2749, %vm2748
        %v2751 = vunpack.c.l.b16 %v2488
        %v2752 = vunpack.c.h.b16 %v2488
        %v2753 = vunpack.c.l.b16 0
        %v2754 = vunpack.c.h.b16 0
        %vm2755 = vcmp.ne.s32.totalorder %v2751, %v2753
        %vm2756 = vcmp.ne.s32.totalorder %v2752, %v2754
        %vm2757 = vmpackc.low %vm2756, %vm2755
        %v2758 = vunpack.c.l.b16 %v2497
        %v2759 = vunpack.c.h.b16 %v2497
        %v2760 = vunpack.c.l.b16 0
        %v2761 = vunpack.c.h.b16 0
        %vm2762 = vcmp.ne.s32.totalorder %v2758, %v2760
        %vm2763 = vcmp.ne.s32.totalorder %v2759, %v2761
        %vm2764 = vmpackc.low %vm2763, %vm2762
        %v2765 = vunpack.c.l.b16 %v2506
        %v2766 = vunpack.c.h.b16 %v2506
        %v2767 = vunpack.c.l.b16 0
        %v2768 = vunpack.c.h.b16 0
        %vm2769 = vcmp.ne.s32.totalorder %v2765, %v2767
        %vm2770 = vcmp.ne.s32.totalorder %v2766, %v2768
        %vm2771 = vmpackc.low %vm2770, %vm2769
        %v2772 = vunpack.c.l.b16 %v2515
        %v2773 = vunpack.c.h.b16 %v2515
        %v2774 = vunpack.c.l.b16 0
        %v2775 = vunpack.c.h.b16 0
        %vm2776 = vcmp.ne.s32.totalorder %v2772, %v2774
        %vm2777 = vcmp.ne.s32.totalorder %v2773, %v2775
        %vm2778 = vmpackc.low %vm2777, %vm2776
        %v2779 = vunpack.c.l.b16 %v2524
        %v2780 = vunpack.c.h.b16 %v2524
        %v2781 = vunpack.c.l.b16 0
        %v2782 = vunpack.c.h.b16 0
        %vm2783 = vcmp.ne.s32.totalorder %v2779, %v2781
        %vm2784 = vcmp.ne.s32.totalorder %v2780, %v2782
        %vm2785 = vmpackc.low %vm2784, %vm2783
        %v2786 = vunpack.c.l.b16 %v2533
        %v2787 = vunpack.c.h.b16 %v2533
        %v2788 = vunpack.c.l.b16 0
        %v2789 = vunpack.c.h.b16 0
        %vm2790 = vcmp.ne.s32.totalorder %v2786, %v2788
        %vm2791 = vcmp.ne.s32.totalorder %v2787, %v2789
        %vm2792 = vmpackc.low %vm2791, %vm2790
        %v2793 = vunpack.c.l.b16 %v2542
        %v2794 = vunpack.c.h.b16 %v2542
        %v2795 = vunpack.c.l.b16 0
        %v2796 = vunpack.c.h.b16 0
        %vm2797 = vcmp.ne.s32.totalorder %v2793, %v2795
        %vm2798 = vcmp.ne.s32.totalorder %v2794, %v2796
        %vm2799 = vmpackc.low %vm2798, %vm2797
        %v2800 = vunpack.c.l.b16 %v2551
        %v2801 = vunpack.c.h.b16 %v2551
        %v2802 = vunpack.c.l.b16 0
        %v2803 = vunpack.c.h.b16 0
        %vm2804 = vcmp.ne.s32.totalorder %v2800, %v2802
        %vm2805 = vcmp.ne.s32.totalorder %v2801, %v2803
        %vm2806 = vmpackc.low %vm2805, %vm2804
        %v2807 = vunpack.c.l.b16 %v2560
        %v2808 = vunpack.c.h.b16 %v2560
        %v2809 = vunpack.c.l.b16 0
        %v2810 = vunpack.c.h.b16 0
        %vm2811 = vcmp.ne.s32.totalorder %v2807, %v2809
        %vm2812 = vcmp.ne.s32.totalorder %v2808, %v2810
        %vm2813 = vmpackc.low %vm2812, %vm2811
        %v2814 = vunpack.c.l.b16 %v2569
        %v2815 = vunpack.c.h.b16 %v2569
        %v2816 = vunpack.c.l.b16 0
        %v2817 = vunpack.c.h.b16 0
        %vm2818 = vcmp.ne.s32.totalorder %v2814, %v2816
        %vm2819 = vcmp.ne.s32.totalorder %v2815, %v2817
        %vm2820 = vmpackc.low %vm2819, %vm2818
        %v2821 = vunpack.c.l.b16 %v2578
        %v2822 = vunpack.c.h.b16 %v2578
        %v2823 = vunpack.c.l.b16 0
        %v2824 = vunpack.c.h.b16 0
        %vm2825 = vcmp.ne.s32.totalorder %v2821, %v2823
        %vm2826 = vcmp.ne.s32.totalorder %v2822, %v2824
        %vm2827 = vmpackc.low %vm2826, %vm2825
        %v2828 = vunpack.c.l.b16 %v2587
        %v2829 = vunpack.c.h.b16 %v2587
        %v2830 = vunpack.c.l.b16 0
        %v2831 = vunpack.c.h.b16 0
        %vm2832 = vcmp.ne.s32.totalorder %v2828, %v2830
        %vm2833 = vcmp.ne.s32.totalorder %v2829, %v2831
        %vm2834 = vmpackc.low %vm2833, %vm2832
        %v2835 = vunpack.c.l.b16 %v2596
        %v2836 = vunpack.c.h.b16 %v2596
        %v2837 = vunpack.c.l.b16 0
        %v2838 = vunpack.c.h.b16 0
        %vm2839 = vcmp.ne.s32.totalorder %v2835, %v2837
        %vm2840 = vcmp.ne.s32.totalorder %v2836, %v2838
        %vm2841 = vmpackc.low %vm2840, %vm2839
        %v2842 = vunpack.c.l.b16 %v2605
        %v2843 = vunpack.c.h.b16 %v2605
        %v2844 = vunpack.c.l.b16 0
        %v2845 = vunpack.c.h.b16 0
        %vm2846 = vcmp.ne.s32.totalorder %v2842, %v2844
        %vm2847 = vcmp.ne.s32.totalorder %v2843, %v2845
        %vm2848 = vmpackc.low %vm2847, %vm2846
        %v2849 = vunpack.c.l.b16 %v2614
        %v2850 = vunpack.c.h.b16 %v2614
        %v2851 = vunpack.c.l.b16 0
        %v2852 = vunpack.c.h.b16 0
        %vm2853 = vcmp.ne.s32.totalorder %v2849, %v2851
        %vm2854 = vcmp.ne.s32.totalorder %v2850, %v2852
        %vm2855 = vmpackc.low %vm2854, %vm2853
        %v2856 = vunpack.c.l.b16 %v2623
        %v2857 = vunpack.c.h.b16 %v2623
        %v2858 = vunpack.c.l.b16 0
        %v2859 = vunpack.c.h.b16 0
        %vm2860 = vcmp.ne.s32.totalorder %v2856, %v2858
        %vm2861 = vcmp.ne.s32.totalorder %v2857, %v2859
        %vm2862 = vmpackc.low %vm2861, %vm2860
        %v2863 = vunpack.c.l.b16 %v2632
        %v2864 = vunpack.c.h.b16 %v2632
        %v2865 = vunpack.c.l.b16 0
        %v2866 = vunpack.c.h.b16 0
        %vm2867 = vcmp.ne.s32.totalorder %v2863, %v2865
        %vm2868 = vcmp.ne.s32.totalorder %v2864, %v2866
        %vm2869 = vmpackc.low %vm2868, %vm2867
        %v2870 = vunpack.c.l.b16 %v2641
        %v2871 = vunpack.c.h.b16 %v2641
        %v2872 = vunpack.c.l.b16 0
        %v2873 = vunpack.c.h.b16 0
        %vm2874 = vcmp.ne.s32.totalorder %v2870, %v2872
        %vm2875 = vcmp.ne.s32.totalorder %v2871, %v2873
        %vm2876 = vmpackc.low %vm2875, %vm2874
        %v2877 = vunpack.c.l.b16 %v2650
        %v2878 = vunpack.c.h.b16 %v2650
        %v2879 = vunpack.c.l.b16 0
        %v2880 = vunpack.c.h.b16 0
        %vm2881 = vcmp.ne.s32.totalorder %v2877, %v2879
        %vm2882 = vcmp.ne.s32.totalorder %v2878, %v2880
        %vm2883 = vmpackc.low %vm2882, %vm2881
        %v2884 = vunpack.c.l.b16 %v2659
        %v2885 = vunpack.c.h.b16 %v2659
        %v2886 = vunpack.c.l.b16 0
        %v2887 = vunpack.c.h.b16 0
        %vm2888 = vcmp.ne.s32.totalorder %v2884, %v2886
        %vm2889 = vcmp.ne.s32.totalorder %v2885, %v2887
        %vm2890 = vmpackc.low %vm2889, %vm2888
        %v2891 = vunpack.c.l.b16 %v2668
        %v2892 = vunpack.c.h.b16 %v2668
        %v2893 = vunpack.c.l.b16 0
        %v2894 = vunpack.c.h.b16 0
        %vm2895 = vcmp.ne.s32.totalorder %v2891, %v2893
        %vm2896 = vcmp.ne.s32.totalorder %v2892, %v2894
        %vm2897 = vmpackc.low %vm2896, %vm2895
        %v2898 = vunpack.c.l.b16 %v2677
        %v2899 = vunpack.c.h.b16 %v2677
        %v2900 = vunpack.c.l.b16 0
        %v2901 = vunpack.c.h.b16 0
        %vm2902 = vcmp.ne.s32.totalorder %v2898, %v2900
        %vm2903 = vcmp.ne.s32.totalorder %v2899, %v2901
        %vm2904 = vmpackc.low %vm2903, %vm2902
        %v2905 = vunpack.c.l.b16 %v2686
        %v2906 = vunpack.c.h.b16 %v2686
        %v2907 = vunpack.c.l.b16 0
        %v2908 = vunpack.c.h.b16 0
        %vm2909 = vcmp.ne.s32.totalorder %v2905, %v2907
        %vm2910 = vcmp.ne.s32.totalorder %v2906, %v2908
        %vm2911 = vmpackc.low %vm2910, %vm2909
        %v2912 = vunpack.c.l.b16 %v2687
        %v2913 = vunpack.c.h.b16 %v2687
        %v2914 = vunpack.c.l.b16 0
        %v2915 = vunpack.c.h.b16 0
        %vm2916 = vcmp.ne.s32.totalorder %v2912, %v2914
        %vm2917 = vcmp.ne.s32.totalorder %v2913, %v2915
        %vm2918 = vmpackc.low %vm2917, %vm2916
        %v2919 = vsel %vm2694, %v2237, 0
        %v2920 = vsel %vm2701, %v2238, 0
        %v2921 = vsel %vm2708, %v2239, 0
        %v2922 = vsel %vm2715, %v2240, 0
        %v2923 = vsel %vm2722, %v2241, 0
        %v2924 = vsel %vm2729, %v2242, 0
        %v2925 = vsel %vm2736, %v2243, 0
        %v2926 = vsel %vm2743, %v2244, 0
        %v2927 = vsel %vm2750, %v2245, 0
        %v2928 = vsel %vm2757, %v2246, 0
        %v2929 = vsel %vm2764, %v2247, 0
        %v2930 = vsel %vm2771, %v2248, 0
        %v2931 = vsel %vm2778, %v2249, 0
        %v2932 = vsel %vm2785, %v2250, 0
        %v2933 = vsel %vm2792, %v2251, 0
        %v2934 = vsel %vm2799, %v2252, 0
        %v2935 = vsel %vm2806, %v2253, 0
        %v2936 = vsel %vm2813, %v2254, 0
        %v2937 = vsel %vm2820, %v2255, 0
        %v2938 = vsel %vm2827, %v2256, 0
        %v2939 = vsel %vm2834, %v2257, 0
        %v2940 = vsel %vm2841, %v2258, 0
        %v2941 = vsel %vm2848, %v2259, 0
        %v2942 = vsel %vm2855, %v2260, 0
        %v2943 = vsel %vm2862, %v2261, 0
        %v2944 = vsel %vm2869, %v2262, 0
        %v2945 = vsel %vm2876, %v2263, 0
        %v2946 = vsel %vm2883, %v2264, 0
        %v2947 = vsel %vm2890, %v2265, 0
        %v2948 = vsel %vm2897, %v2266, 0
        %v2949 = vsel %vm2904, %v2267, 0
        %v2950 = vsel %vm2911, %v2268, 0
        %v2951 = vsel %vm2918, %v2269, 0
        %s2952 = scalar_lea.vmem %s3, 4
        %v2953 = vld [vmem:[%s2952] sm:$0x3]
        %v2987 = vunpack.c.l.b16 %v2919
        %v2988 = vunpack.c.l.b16 %v2920
        %v2989 = vunpack.c.l.b16 %v2921
        %v2990 = vunpack.c.l.b16 %v2922
        %v2991 = vunpack.c.l.b16 %v2923
        %v2992 = vunpack.c.l.b16 %v2924
        %v2993 = vunpack.c.l.b16 %v2925
        %v2994 = vunpack.c.l.b16 %v2926
        %v2995 = vunpack.c.l.b16 %v2927
        %v2996 = vunpack.c.l.b16 %v2928
        %v2997 = vunpack.c.l.b16 %v2929
        %v2998 = vunpack.c.l.b16 %v2930
        %v2999 = vunpack.c.l.b16 %v2931
        %v3000 = vunpack.c.l.b16 %v2932
        %v3001 = vunpack.c.l.b16 %v2933
        %v3002 = vunpack.c.l.b16 %v2934
        %v3003 = vunpack.c.l.b16 %v2935
        %v3004 = vunpack.c.l.b16 %v2936
        %v3005 = vunpack.c.l.b16 %v2937
        %v3006 = vunpack.c.l.b16 %v2938
        %v3007 = vunpack.c.l.b16 %v2939
        %v3008 = vunpack.c.l.b16 %v2940
        %v3009 = vunpack.c.l.b16 %v2941
        %v3010 = vunpack.c.l.b16 %v2942
        %v3011 = vunpack.c.l.b16 %v2943
        %v3012 = vunpack.c.l.b16 %v2944
        %v3013 = vunpack.c.l.b16 %v2945
        %v3014 = vunpack.c.l.b16 %v2946
        %v3015 = vunpack.c.l.b16 %v2947
        %v3016 = vunpack.c.l.b16 %v2948
        %v3017 = vunpack.c.l.b16 %v2949
        %v3018 = vunpack.c.l.b16 %v2950
        %v3019 = vunpack.c.l.b16 %v2951
        %v3020 = vpack.c.b16 %v2988, %v2987
        %v3021 = vpack.c.b16 %v2990, %v2989
        %v3022 = vpack.c.b16 %v2992, %v2991
        %v3023 = vpack.c.b16 %v2994, %v2993
        %v3024 = vpack.c.b16 %v2996, %v2995
        %v3025 = vpack.c.b16 %v2998, %v2997
        %v3026 = vpack.c.b16 %v3000, %v2999
        %v3027 = vpack.c.b16 %v3002, %v3001
        %v3028 = vpack.c.b16 %v3004, %v3003
        %v3029 = vpack.c.b16 %v3006, %v3005
        %v3030 = vpack.c.b16 %v3008, %v3007
        %v3031 = vpack.c.b16 %v3010, %v3009
        %v3032 = vpack.c.b16 %v3012, %v3011
        %v3033 = vpack.c.b16 %v3014, %v3013
        %v3034 = vpack.c.b16 %v3016, %v3015
        %v3035 = vpack.c.b16 %v3018, %v3017
        %v3036 = vpack.c.b16 %v3019, %v3019
        %vm3037 = vsmask.f32 7424
        %v3039 = vshrl.u32 %v3020, 16
        %v3041 = vshll.u32 %v3020, 16
        %v3043 = vrot.slane %v3041, 1
        %v3044 = vor.u32 %v3039, %v3043
        %v3046 = vshll.u32 %v3021, 16
        %v3048 = vrot.slane %v3046, 1
        %v3049 = vsel %vm3037, %v3044, %v3048
        %v3050 = vshrl.u32 %v3021, 16
        %v3052 = vor.u32 %v3050, %v3048
        %v3054 = vshll.u32 %v3022, 16
        %v3056 = vrot.slane %v3054, 1
        %v3057 = vsel %vm3037, %v3052, %v3056
        %v3058 = vshrl.u32 %v3022, 16
        %v3060 = vor.u32 %v3058, %v3056
        %v3062 = vshll.u32 %v3023, 16
        %v3064 = vrot.slane %v3062, 1
        %v3065 = vsel %vm3037, %v3060, %v3064
        %v3066 = vshrl.u32 %v3023, 16
        %v3068 = vor.u32 %v3066, %v3064
        %v3070 = vshll.u32 %v3024, 16
        %v3072 = vrot.slane %v3070, 1
        %v3073 = vsel %vm3037, %v3068, %v3072
        %v3074 = vshrl.u32 %v3024, 16
        %v3076 = vor.u32 %v3074, %v3072
        %v3078 = vshll.u32 %v3025, 16
        %v3080 = vrot.slane %v3078, 1
        %v3081 = vsel %vm3037, %v3076, %v3080
        %v3082 = vshrl.u32 %v3025, 16
        %v3084 = vor.u32 %v3082, %v3080
        %v3086 = vshll.u32 %v3026, 16
        %v3088 = vrot.slane %v3086, 1
        %v3089 = vsel %vm3037, %v3084, %v3088
        %v3090 = vshrl.u32 %v3026, 16
        %v3092 = vor.u32 %v3090, %v3088
        %v3094 = vshll.u32 %v3027, 16
        %v3096 = vrot.slane %v3094, 1
        %v3097 = vsel %vm3037, %v3092, %v3096
        %v3098 = vshrl.u32 %v3027, 16
        %v3100 = vor.u32 %v3098, %v3096
        %v3102 = vshll.u32 %v3028, 16
        %v3104 = vrot.slane %v3102, 1
        %v3105 = vsel %vm3037, %v3100, %v3104
        %v3106 = vshrl.u32 %v3028, 16
        %v3108 = vor.u32 %v3106, %v3104
        %v3110 = vshll.u32 %v3029, 16
        %v3112 = vrot.slane %v3110, 1
        %v3113 = vsel %vm3037, %v3108, %v3112
        %v3114 = vshrl.u32 %v3029, 16
        %v3116 = vor.u32 %v3114, %v3112
        %v3118 = vshll.u32 %v3030, 16
        %v3120 = vrot.slane %v3118, 1
        %v3121 = vsel %vm3037, %v3116, %v3120
        %v3122 = vshrl.u32 %v3030, 16
        %v3124 = vor.u32 %v3122, %v3120
        %v3126 = vshll.u32 %v3031, 16
        %v3128 = vrot.slane %v3126, 1
        %v3129 = vsel %vm3037, %v3124, %v3128
        %v3130 = vshrl.u32 %v3031, 16
        %v3132 = vor.u32 %v3130, %v3128
        %v3134 = vshll.u32 %v3032, 16
        %v3136 = vrot.slane %v3134, 1
        %v3137 = vsel %vm3037, %v3132, %v3136
        %v3138 = vshrl.u32 %v3032, 16
        %v3140 = vor.u32 %v3138, %v3136
        %v3142 = vshll.u32 %v3033, 16
        %v3144 = vrot.slane %v3142, 1
        %v3145 = vsel %vm3037, %v3140, %v3144
        %v3146 = vshrl.u32 %v3033, 16
        %v3148 = vor.u32 %v3146, %v3144
        %v3150 = vshll.u32 %v3034, 16
        %v3152 = vrot.slane %v3150, 1
        %v3153 = vsel %vm3037, %v3148, %v3152
        %v3154 = vshrl.u32 %v3034, 16
        %v3156 = vor.u32 %v3154, %v3152
        %v3158 = vshll.u32 %v3035, 16
        %v3160 = vrot.slane %v3158, 1
        %v3161 = vsel %vm3037, %v3156, %v3160
        %v3162 = vshrl.u32 %v3035, 16
        %v3164 = vor.u32 %v3162, %v3160
        %v3166 = vshll.u32 %v3036, 16
        %v3168 = vrot.slane %v3166, 1
        %v3169 = vsel %vm3037, %v3164, %v3168
        %v3171 = vsel %vm1719, %v3049, 0
        %v3174 = vsel %vm1719, %v3057, 0
        %v3177 = vsel %vm1719, %v3065, 0
        %v3180 = vsel %vm1719, %v3073, 0
        %v3183 = vsel %vm1719, %v3081, 0
        %v3186 = vsel %vm1719, %v3089, 0
        %v3189 = vsel %vm1719, %v3097, 0
        %v3192 = vsel %vm1719, %v3105, 0
        %v3195 = vsel %vm1719, %v3113, 0
        %v3198 = vsel %vm1719, %v3121, 0
        %v3201 = vsel %vm1719, %v3129, 0
        %v3204 = vsel %vm1719, %v3137, 0
        %v3207 = vsel %vm1719, %v3145, 0
        %v3210 = vsel %vm1719, %v3153, 0
        %v3213 = vsel %vm1719, %v3161, 0
        %v3216 = vsel %vm1719, %v3169, 0
        %v3219 = vsel %vm1768, %v2953, 0
        %3221 = vmatpush.bf16.msra.mxu0 0
        %3222 = vmatpush.bf16.msra.mxu0 0
        %3223 = vmatpush.bf16.msra.mxu0 0
        %3224 = vmatpush.bf16.msra.mxu0 0
        %3225 = vmatpush.bf16.msra.mxu0 0
        %3226 = vmatpush.bf16.msra.mxu0 0
        %3227 = vmatpush.bf16.msra.mxu0 0
        %3228 = vmatpush.bf16.msra.mxu0 %v3219
        %3229 = vmatmul.bf16.gmra.mxu0 %v3171
        %v3230 = vpop.f32.mrf.mxu0
        %v3231 = vadd.f32 0.0, %v3230
        %v3232 = vpop.f32.mrf.mxu0
        %v3233 = vadd.f32 0.0, %v3232
        %3234 = vmatmul.bf16.gmra.mxu0 %v3174
        %v3235 = vpop.f32.mrf.mxu0
        %v3236 = vadd.f32 0.0, %v3235
        %v3237 = vpop.f32.mrf.mxu0
        %v3238 = vadd.f32 0.0, %v3237
        %3239 = vmatmul.bf16.gmra.mxu0 %v3177
        %v3240 = vpop.f32.mrf.mxu0
        %v3241 = vadd.f32 0.0, %v3240
        %v3242 = vpop.f32.mrf.mxu0
        %v3243 = vadd.f32 0.0, %v3242
        %3244 = vmatmul.bf16.gmra.mxu0 %v3180
        %v3245 = vpop.f32.mrf.mxu0
        %v3246 = vadd.f32 0.0, %v3245
        %v3247 = vpop.f32.mrf.mxu0
        %v3248 = vadd.f32 0.0, %v3247
        %3249 = vmatmul.bf16.gmra.mxu0 %v3183
        %v3250 = vpop.f32.mrf.mxu0
        %v3251 = vadd.f32 0.0, %v3250
        %v3252 = vpop.f32.mrf.mxu0
        %v3253 = vadd.f32 0.0, %v3252
        %3254 = vmatmul.bf16.gmra.mxu0 %v3186
        %v3255 = vpop.f32.mrf.mxu0
        %v3256 = vadd.f32 0.0, %v3255
        %v3257 = vpop.f32.mrf.mxu0
        %v3258 = vadd.f32 0.0, %v3257
        %3259 = vmatmul.bf16.gmra.mxu0 %v3189
        %v3260 = vpop.f32.mrf.mxu0
        %v3261 = vadd.f32 0.0, %v3260
        %v3262 = vpop.f32.mrf.mxu0
        %v3263 = vadd.f32 0.0, %v3262
        %3264 = vmatmul.bf16.gmra.mxu0 %v3192
        %v3265 = vpop.f32.mrf.mxu0
        %v3266 = vadd.f32 0.0, %v3265
        %v3267 = vpop.f32.mrf.mxu0
        %v3268 = vadd.f32 0.0, %v3267
        %3269 = vmatmul.bf16.gmra.mxu0 %v3195
        %v3270 = vpop.f32.mrf.mxu0
        %v3271 = vadd.f32 0.0, %v3270
        %v3272 = vpop.f32.mrf.mxu0
        %v3273 = vadd.f32 0.0, %v3272
        %3274 = vmatmul.bf16.gmra.mxu0 %v3198
        %v3275 = vpop.f32.mrf.mxu0
        %v3276 = vadd.f32 0.0, %v3275
        %v3277 = vpop.f32.mrf.mxu0
        %v3278 = vadd.f32 0.0, %v3277
        %3279 = vmatmul.bf16.gmra.mxu0 %v3201
        %v3280 = vpop.f32.mrf.mxu0
        %v3281 = vadd.f32 0.0, %v3280
        %v3282 = vpop.f32.mrf.mxu0
        %v3283 = vadd.f32 0.0, %v3282
        %3284 = vmatmul.bf16.gmra.mxu0 %v3204
        %v3285 = vpop.f32.mrf.mxu0
        %v3286 = vadd.f32 0.0, %v3285
        %v3287 = vpop.f32.mrf.mxu0
        %v3288 = vadd.f32 0.0, %v3287
        %3289 = vmatmul.bf16.gmra.mxu0 %v3207
        %v3290 = vpop.f32.mrf.mxu0
        %v3291 = vadd.f32 0.0, %v3290
        %v3292 = vpop.f32.mrf.mxu0
        %v3293 = vadd.f32 0.0, %v3292
        %3294 = vmatmul.bf16.gmra.mxu0 %v3210
        %v3295 = vpop.f32.mrf.mxu0
        %v3296 = vadd.f32 0.0, %v3295
        %v3297 = vpop.f32.mrf.mxu0
        %v3298 = vadd.f32 0.0, %v3297
        %3299 = vmatmul.bf16.gmra.mxu0 %v3213
        %v3300 = vpop.f32.mrf.mxu0
        %v3301 = vadd.f32 0.0, %v3300
        %v3302 = vpop.f32.mrf.mxu0
        %v3303 = vadd.f32 0.0, %v3302
        %3304 = vmatmul.bf16.gmra.mxu0 %v3216
        %v3305 = vpop.f32.mrf.mxu0
        %v3306 = vadd.f32 0.0, %v3305
        %v3307 = vpop.f32.mrf.mxu0
        %v3308 = vadd.f32 0.0, %v3307
        %3309 = vdwg.mxu0
        %v3310 = vadd.f32 %v2158, %v3231
        %v3311 = vadd.f32 %v2160, %v3233
        %v3312 = vadd.f32 %v2163, %v3236
        %v3313 = vadd.f32 %v2165, %v3238
        %v3314 = vadd.f32 %v2168, %v3241
        %v3315 = vadd.f32 %v2170, %v3243
        %v3316 = vadd.f32 %v2173, %v3246
        %v3317 = vadd.f32 %v2175, %v3248
        %v3318 = vadd.f32 %v2178, %v3251
        %v3319 = vadd.f32 %v2180, %v3253
        %v3320 = vadd.f32 %v2183, %v3256
        %v3321 = vadd.f32 %v2185, %v3258
        %v3322 = vadd.f32 %v2188, %v3261
        %v3323 = vadd.f32 %v2190, %v3263
        %v3324 = vadd.f32 %v2193, %v3266
        %v3325 = vadd.f32 %v2195, %v3268
        %v3326 = vadd.f32 %v2198, %v3271
        %v3327 = vadd.f32 %v2200, %v3273
        %v3328 = vadd.f32 %v2203, %v3276
        %v3329 = vadd.f32 %v2205, %v3278
        %v3330 = vadd.f32 %v2208, %v3281
        %v3331 = vadd.f32 %v2210, %v3283
        %v3332 = vadd.f32 %v2213, %v3286
        %v3333 = vadd.f32 %v2215, %v3288
        %v3334 = vadd.f32 %v2218, %v3291
        %v3335 = vadd.f32 %v2220, %v3293
        %v3336 = vadd.f32 %v2223, %v3296
        %v3337 = vadd.f32 %v2225, %v3298
        %v3338 = vadd.f32 %v2228, %v3301
        %v3339 = vadd.f32 %v2230, %v3303
        %v3340 = vadd.f32 %v2233, %v3306
        %v3341 = vadd.f32 %v2235, %v3308
        %v3342 = vld [vmem:[#allocation2 + $0xc] sm:$0x8]
        %v3343 = vld [vmem:[#allocation2 + $0x10] sm:$0xf]
        %v3344 = vld [vmem:[#allocation2 + $0x14] sm:$0xf]
        %v3345 = vld [vmem:[#allocation2 + $0x18] sm:$0xf]
        %v3346 = vld [vmem:[#allocation2 + $0x1c] sm:$0xf]
        %v3347 = vld [vmem:[#allocation2 + $0x20] sm:$0xf]
        %v3348 = vld [vmem:[#allocation2 + $0x24] sm:$0xf]
        %v3349 = vld [vmem:[#allocation2 + $0x28] sm:$0xf]
        %v3350 = vld [vmem:[#allocation2 + $0x2c] sm:$0xf]
        %v3351 = vld [vmem:[#allocation2 + $0x30] sm:$0xf]
        %v3352 = vld [vmem:[#allocation2 + $0x34] sm:$0xf]
        %v3353 = vld [vmem:[#allocation2 + $0x38] sm:$0xf]
        %v3354 = vld [vmem:[#allocation2 + $0x3c] sm:$0xf]
        %v3355 = vld [vmem:[#allocation2 + $0x40] sm:$0xf]
        %v3356 = vld [vmem:[#allocation2 + $0x44] sm:$0xf]
        %v3357 = vld [vmem:[#allocation2 + $0x48] sm:$0xf]
        %v3358 = vld [vmem:[#allocation2 + $0x4c] sm:$0xf]
        %v3359 = vld [vmem:[#allocation2 + $0x50] sm:$0xf]
        %v3360 = vld [vmem:[#allocation2 + $0x54] sm:$0xf]
        %v3361 = vld [vmem:[#allocation2 + $0x58] sm:$0xf]
        %v3362 = vld [vmem:[#allocation2 + $0x5c] sm:$0xf]
        %v3363 = vld [vmem:[#allocation2 + $0x60] sm:$0xf]
        %v3364 = vld [vmem:[#allocation2 + $0x64] sm:$0xf]
        %v3365 = vld [vmem:[#allocation2 + $0x68] sm:$0xf]
        %v3366 = vld [vmem:[#allocation2 + $0x6c] sm:$0xf]
        %v3367 = vld [vmem:[#allocation2 + $0x70] sm:$0xf]
        %v3368 = vld [vmem:[#allocation2 + $0x74] sm:$0xf]
        %v3369 = vld [vmem:[#allocation2 + $0x78] sm:$0xf]
        %v3370 = vld [vmem:[#allocation2 + $0x7c] sm:$0xf]
        %v3371 = vld [vmem:[#allocation2 + $0x80] sm:$0xf]
        %v3372 = vld [vmem:[#allocation2 + $0x84] sm:$0xf]
        %v3373 = vld [vmem:[#allocation2 + $0x88] sm:$0xf]
        %v3374 = vld [vmem:[#allocation2 + $0x8c] sm:$0xf]
        %v3375 = vsel %vm1378, %v3342, 0
        %v3376 = vsel %vm1385, %v3343, 0
        %v3377 = vsel %vm1392, %v3344, 0
        %v3378 = vsel %vm1399, %v3345, 0
        %v3379 = vsel %vm1406, %v3346, 0
        %v3380 = vsel %vm1413, %v3347, 0
        %v3381 = vsel %vm1420, %v3348, 0
        %v3382 = vsel %vm1427, %v3349, 0
        %v3383 = vsel %vm1434, %v3350, 0
        %v3384 = vsel %vm1441, %v3351, 0
        %v3385 = vsel %vm1448, %v3352, 0
        %v3386 = vsel %vm1455, %v3353, 0
        %v3387 = vsel %vm1462, %v3354, 0
        %v3388 = vsel %vm1469, %v3355, 0
        %v3389 = vsel %vm1476, %v3356, 0
        %v3390 = vsel %vm1483, %v3357, 0
        %v3391 = vsel %vm1490, %v3358, 0
        %v3392 = vsel %vm1497, %v3359, 0
        %v3393 = vsel %vm1504, %v3360, 0
        %v3394 = vsel %vm1511, %v3361, 0
        %v3395 = vsel %vm1518, %v3362, 0
        %v3396 = vsel %vm1525, %v3363, 0
        %v3397 = vsel %vm1532, %v3364, 0
        %v3398 = vsel %vm1539, %v3365, 0
        %v3399 = vsel %vm1546, %v3366, 0
        %v3400 = vsel %vm1553, %v3367, 0
        %v3401 = vsel %vm1560, %v3368, 0
        %v3402 = vsel %vm1567, %v3369, 0
        %v3403 = vsel %vm1574, %v3370, 0
        %v3404 = vsel %vm1581, %v3371, 0
        %v3405 = vsel %vm1588, %v3372, 0
        %v3406 = vsel %vm1595, %v3373, 0
        %v3407 = vsel %vm1602, %v3374, 0
        %s3408 = scalar_lea.vmem %s3, 6
        %v3409 = vld [vmem:[%s3408] sm:$0x3]
        %v3443 = vunpack.c.l.b16 %v3375
        %v3444 = vunpack.c.l.b16 %v3376
        %v3445 = vunpack.c.l.b16 %v3377
        %v3446 = vunpack.c.l.b16 %v3378
        %v3447 = vunpack.c.l.b16 %v3379
        %v3448 = vunpack.c.l.b16 %v3380
        %v3449 = vunpack.c.l.b16 %v3381
        %v3450 = vunpack.c.l.b16 %v3382
        %v3451 = vunpack.c.l.b16 %v3383
        %v3452 = vunpack.c.l.b16 %v3384
        %v3453 = vunpack.c.l.b16 %v3385
        %v3454 = vunpack.c.l.b16 %v3386
        %v3455 = vunpack.c.l.b16 %v3387
        %v3456 = vunpack.c.l.b16 %v3388
        %v3457 = vunpack.c.l.b16 %v3389
        %v3458 = vunpack.c.l.b16 %v3390
        %v3459 = vunpack.c.l.b16 %v3391
        %v3460 = vunpack.c.l.b16 %v3392
        %v3461 = vunpack.c.l.b16 %v3393
        %v3462 = vunpack.c.l.b16 %v3394
        %v3463 = vunpack.c.l.b16 %v3395
        %v3464 = vunpack.c.l.b16 %v3396
        %v3465 = vunpack.c.l.b16 %v3397
        %v3466 = vunpack.c.l.b16 %v3398
        %v3467 = vunpack.c.l.b16 %v3399
        %v3468 = vunpack.c.l.b16 %v3400
        %v3469 = vunpack.c.l.b16 %v3401
        %v3470 = vunpack.c.l.b16 %v3402
        %v3471 = vunpack.c.l.b16 %v3403
        %v3472 = vunpack.c.l.b16 %v3404
        %v3473 = vunpack.c.l.b16 %v3405
        %v3474 = vunpack.c.l.b16 %v3406
        %v3475 = vunpack.c.l.b16 %v3407
        %v3476 = vpack.c.b16 %v3444, %v3443
        %v3477 = vpack.c.b16 %v3446, %v3445
        %v3478 = vpack.c.b16 %v3448, %v3447
        %v3479 = vpack.c.b16 %v3450, %v3449
        %v3480 = vpack.c.b16 %v3452, %v3451
        %v3481 = vpack.c.b16 %v3454, %v3453
        %v3482 = vpack.c.b16 %v3456, %v3455
        %v3483 = vpack.c.b16 %v3458, %v3457
        %v3484 = vpack.c.b16 %v3460, %v3459
        %v3485 = vpack.c.b16 %v3462, %v3461
        %v3486 = vpack.c.b16 %v3464, %v3463
        %v3487 = vpack.c.b16 %v3466, %v3465
        %v3488 = vpack.c.b16 %v3468, %v3467
        %v3489 = vpack.c.b16 %v3470, %v3469
        %v3490 = vpack.c.b16 %v3472, %v3471
        %v3491 = vpack.c.b16 %v3474, %v3473
        %v3492 = vpack.c.b16 %v3475, %v3475
        %v3494 = vshrl.u32 %v3476, 16
        %v3496 = vrot.slane %v3494, 3
        %v3497 = vshll.u32 %v3476, 16
        %v3499 = vrot.slane %v3497, 4
        %v3500 = vor.u32 %v3496, %v3499
        %v3502 = vshrl.u32 %v3477, 16
        %v3504 = vrot.slane %v3502, 3
        %v3505 = vshll.u32 %v3477, 16
        %v3507 = vrot.slane %v3505, 4
        %v3508 = vor.u32 %v3504, %v3507
        %v3509 = vsel %vm1944, %v3500, %v3508
        %v3511 = vshrl.u32 %v3478, 16
        %v3513 = vrot.slane %v3511, 3
        %v3514 = vshll.u32 %v3478, 16
        %v3516 = vrot.slane %v3514, 4
        %v3517 = vor.u32 %v3513, %v3516
        %v3518 = vsel %vm1944, %v3508, %v3517
        %v3520 = vshrl.u32 %v3479, 16
        %v3522 = vrot.slane %v3520, 3
        %v3523 = vshll.u32 %v3479, 16
        %v3525 = vrot.slane %v3523, 4
        %v3526 = vor.u32 %v3522, %v3525
        %v3527 = vsel %vm1944, %v3517, %v3526
        %v3529 = vshrl.u32 %v3480, 16
        %v3531 = vrot.slane %v3529, 3
        %v3532 = vshll.u32 %v3480, 16
        %v3534 = vrot.slane %v3532, 4
        %v3535 = vor.u32 %v3531, %v3534
        %v3536 = vsel %vm1944, %v3526, %v3535
        %v3538 = vshrl.u32 %v3481, 16
        %v3540 = vrot.slane %v3538, 3
        %v3541 = vshll.u32 %v3481, 16
        %v3543 = vrot.slane %v3541, 4
        %v3544 = vor.u32 %v3540, %v3543
        %v3545 = vsel %vm1944, %v3535, %v3544
        %v3547 = vshrl.u32 %v3482, 16
        %v3549 = vrot.slane %v3547, 3
        %v3550 = vshll.u32 %v3482, 16
        %v3552 = vrot.slane %v3550, 4
        %v3553 = vor.u32 %v3549, %v3552
        %v3554 = vsel %vm1944, %v3544, %v3553
        %v3556 = vshrl.u32 %v3483, 16
        %v3558 = vrot.slane %v3556, 3
        %v3559 = vshll.u32 %v3483, 16
        %v3561 = vrot.slane %v3559, 4
        %v3562 = vor.u32 %v3558, %v3561
        %v3563 = vsel %vm1944, %v3553, %v3562
        %v3565 = vshrl.u32 %v3484, 16
        %v3567 = vrot.slane %v3565, 3
        %v3568 = vshll.u32 %v3484, 16
        %v3570 = vrot.slane %v3568, 4
        %v3571 = vor.u32 %v3567, %v3570
        %v3572 = vsel %vm1944, %v3562, %v3571
        %v3574 = vshrl.u32 %v3485, 16
        %v3576 = vrot.slane %v3574, 3
        %v3577 = vshll.u32 %v3485, 16
        %v3579 = vrot.slane %v3577, 4
        %v3580 = vor.u32 %v3576, %v3579
        %v3581 = vsel %vm1944, %v3571, %v3580
        %v3583 = vshrl.u32 %v3486, 16
        %v3585 = vrot.slane %v3583, 3
        %v3586 = vshll.u32 %v3486, 16
        %v3588 = vrot.slane %v3586, 4
        %v3589 = vor.u32 %v3585, %v3588
        %v3590 = vsel %vm1944, %v3580, %v3589
        %v3592 = vshrl.u32 %v3487, 16
        %v3594 = vrot.slane %v3592, 3
        %v3595 = vshll.u32 %v3487, 16
        %v3597 = vrot.slane %v3595, 4
        %v3598 = vor.u32 %v3594, %v3597
        %v3599 = vsel %vm1944, %v3589, %v3598
        %v3601 = vshrl.u32 %v3488, 16
        %v3603 = vrot.slane %v3601, 3
        %v3604 = vshll.u32 %v3488, 16
        %v3606 = vrot.slane %v3604, 4
        %v3607 = vor.u32 %v3603, %v3606
        %v3608 = vsel %vm1944, %v3598, %v3607
        %v3610 = vshrl.u32 %v3489, 16
        %v3612 = vrot.slane %v3610, 3
        %v3613 = vshll.u32 %v3489, 16
        %v3615 = vrot.slane %v3613, 4
        %v3616 = vor.u32 %v3612, %v3615
        %v3617 = vsel %vm1944, %v3607, %v3616
        %v3619 = vshrl.u32 %v3490, 16
        %v3621 = vrot.slane %v3619, 3
        %v3622 = vshll.u32 %v3490, 16
        %v3624 = vrot.slane %v3622, 4
        %v3625 = vor.u32 %v3621, %v3624
        %v3626 = vsel %vm1944, %v3616, %v3625
        %v3628 = vshrl.u32 %v3491, 16
        %v3630 = vrot.slane %v3628, 3
        %v3631 = vshll.u32 %v3491, 16
        %v3633 = vrot.slane %v3631, 4
        %v3634 = vor.u32 %v3630, %v3633
        %v3635 = vsel %vm1944, %v3625, %v3634
        %v3637 = vshrl.u32 %v3492, 16
        %v3639 = vrot.slane %v3637, 3
        %v3640 = vshll.u32 %v3492, 16
        %v3642 = vrot.slane %v3640, 4
        %v3643 = vor.u32 %v3639, %v3642
        %v3644 = vsel %vm1944, %v3634, %v3643
        %v3646 = vsel %vm1719, %v3509, 0
        %v3649 = vsel %vm1719, %v3518, 0
        %v3652 = vsel %vm1719, %v3527, 0
        %v3655 = vsel %vm1719, %v3536, 0
        %v3658 = vsel %vm1719, %v3545, 0
        %v3661 = vsel %vm1719, %v3554, 0
        %v3664 = vsel %vm1719, %v3563, 0
        %v3667 = vsel %vm1719, %v3572, 0
        %v3670 = vsel %vm1719, %v3581, 0
        %v3673 = vsel %vm1719, %v3590, 0
        %v3676 = vsel %vm1719, %v3599, 0
        %v3679 = vsel %vm1719, %v3608, 0
        %v3682 = vsel %vm1719, %v3617, 0
        %v3685 = vsel %vm1719, %v3626, 0
        %v3688 = vsel %vm1719, %v3635, 0
        %v3691 = vsel %vm1719, %v3644, 0
        %v3694 = vsel %vm1768, %v3409, 0
        %3696 = vmatpush.bf16.msra.mxu0 0
        %3697 = vmatpush.bf16.msra.mxu0 0
        %3698 = vmatpush.bf16.msra.mxu0 0
        %3699 = vmatpush.bf16.msra.mxu0 0
        %3700 = vmatpush.bf16.msra.mxu0 0
        %3701 = vmatpush.bf16.msra.mxu0 0
        %3702 = vmatpush.bf16.msra.mxu0 0
        %3703 = vmatpush.bf16.msra.mxu0 %v3694
        %3704 = vmatmul.bf16.gmra.mxu0 %v3646
        %v3705 = vpop.f32.mrf.mxu0
        %v3706 = vadd.f32 0.0, %v3705
        %v3707 = vpop.f32.mrf.mxu0
        %v3708 = vadd.f32 0.0, %v3707
        %3709 = vmatmul.bf16.gmra.mxu0 %v3649
        %v3710 = vpop.f32.mrf.mxu0
        %v3711 = vadd.f32 0.0, %v3710
        %v3712 = vpop.f32.mrf.mxu0
        %v3713 = vadd.f32 0.0, %v3712
        %3714 = vmatmul.bf16.gmra.mxu0 %v3652
        %v3715 = vpop.f32.mrf.mxu0
        %v3716 = vadd.f32 0.0, %v3715
        %v3717 = vpop.f32.mrf.mxu0
        %v3718 = vadd.f32 0.0, %v3717
        %3719 = vmatmul.bf16.gmra.mxu0 %v3655
        %v3720 = vpop.f32.mrf.mxu0
        %v3721 = vadd.f32 0.0, %v3720
        %v3722 = vpop.f32.mrf.mxu0
        %v3723 = vadd.f32 0.0, %v3722
        %3724 = vmatmul.bf16.gmra.mxu0 %v3658
        %v3725 = vpop.f32.mrf.mxu0
        %v3726 = vadd.f32 0.0, %v3725
        %v3727 = vpop.f32.mrf.mxu0
        %v3728 = vadd.f32 0.0, %v3727
        %3729 = vmatmul.bf16.gmra.mxu0 %v3661
        %v3730 = vpop.f32.mrf.mxu0
        %v3731 = vadd.f32 0.0, %v3730
        %v3732 = vpop.f32.mrf.mxu0
        %v3733 = vadd.f32 0.0, %v3732
        %3734 = vmatmul.bf16.gmra.mxu0 %v3664
        %v3735 = vpop.f32.mrf.mxu0
        %v3736 = vadd.f32 0.0, %v3735
        %v3737 = vpop.f32.mrf.mxu0
        %v3738 = vadd.f32 0.0, %v3737
        %3739 = vmatmul.bf16.gmra.mxu0 %v3667
        %v3740 = vpop.f32.mrf.mxu0
        %v3741 = vadd.f32 0.0, %v3740
        %v3742 = vpop.f32.mrf.mxu0
        %v3743 = vadd.f32 0.0, %v3742
        %3744 = vmatmul.bf16.gmra.mxu0 %v3670
        %v3745 = vpop.f32.mrf.mxu0
        %v3746 = vadd.f32 0.0, %v3745
        %v3747 = vpop.f32.mrf.mxu0
        %v3748 = vadd.f32 0.0, %v3747
        %3749 = vmatmul.bf16.gmra.mxu0 %v3673
        %v3750 = vpop.f32.mrf.mxu0
        %v3751 = vadd.f32 0.0, %v3750
        %v3752 = vpop.f32.mrf.mxu0
        %v3753 = vadd.f32 0.0, %v3752
        %3754 = vmatmul.bf16.gmra.mxu0 %v3676
        %v3755 = vpop.f32.mrf.mxu0
        %v3756 = vadd.f32 0.0, %v3755
        %v3757 = vpop.f32.mrf.mxu0
        %v3758 = vadd.f32 0.0, %v3757
        %3759 = vmatmul.bf16.gmra.mxu0 %v3679
        %v3760 = vpop.f32.mrf.mxu0
        %v3761 = vadd.f32 0.0, %v3760
        %v3762 = vpop.f32.mrf.mxu0
        %v3763 = vadd.f32 0.0, %v3762
        %3764 = vmatmul.bf16.gmra.mxu0 %v3682
        %v3765 = vpop.f32.mrf.mxu0
        %v3766 = vadd.f32 0.0, %v3765
        %v3767 = vpop.f32.mrf.mxu0
        %v3768 = vadd.f32 0.0, %v3767
        %3769 = vmatmul.bf16.gmra.mxu0 %v3685
        %v3770 = vpop.f32.mrf.mxu0
        %v3771 = vadd.f32 0.0, %v3770
        %v3772 = vpop.f32.mrf.mxu0
        %v3773 = vadd.f32 0.0, %v3772
        %3774 = vmatmul.bf16.gmra.mxu0 %v3688
        %v3775 = vpop.f32.mrf.mxu0
        %v3776 = vadd.f32 0.0, %v3775
        %v3777 = vpop.f32.mrf.mxu0
        %v3778 = vadd.f32 0.0, %v3777
        %3779 = vmatmul.bf16.gmra.mxu0 %v3691
        %v3780 = vpop.f32.mrf.mxu0
        %v3781 = vadd.f32 0.0, %v3780
        %v3782 = vpop.f32.mrf.mxu0
        %v3783 = vadd.f32 0.0, %v3782
        %3784 = vdwg.mxu0
        %v3785 = vadd.f32 %v3310, %v3706
        %v3786 = vadd.f32 %v3311, %v3708
        %v3787 = vadd.f32 %v3312, %v3711
        %v3788 = vadd.f32 %v3313, %v3713
        %v3789 = vadd.f32 %v3314, %v3716
        %v3790 = vadd.f32 %v3315, %v3718
        %v3791 = vadd.f32 %v3316, %v3721
        %v3792 = vadd.f32 %v3317, %v3723
        %v3793 = vadd.f32 %v3318, %v3726
        %v3794 = vadd.f32 %v3319, %v3728
        %v3795 = vadd.f32 %v3320, %v3731
        %v3796 = vadd.f32 %v3321, %v3733
        %v3797 = vadd.f32 %v3322, %v3736
        %v3798 = vadd.f32 %v3323, %v3738
        %v3799 = vadd.f32 %v3324, %v3741
        %v3800 = vadd.f32 %v3325, %v3743
        %v3801 = vadd.f32 %v3326, %v3746
        %v3802 = vadd.f32 %v3327, %v3748
        %v3803 = vadd.f32 %v3328, %v3751
        %v3804 = vadd.f32 %v3329, %v3753
        %v3805 = vadd.f32 %v3330, %v3756
        %v3806 = vadd.f32 %v3331, %v3758
        %v3807 = vadd.f32 %v3332, %v3761
        %v3808 = vadd.f32 %v3333, %v3763
        %v3809 = vadd.f32 %v3334, %v3766
        %v3810 = vadd.f32 %v3335, %v3768
        %v3811 = vadd.f32 %v3336, %v3771
        %v3812 = vadd.f32 %v3337, %v3773
        %v3813 = vadd.f32 %v3338, %v3776
        %v3814 = vadd.f32 %v3339, %v3778
        %v3815 = vadd.f32 %v3340, %v3781
        %v3816 = vadd.f32 %v3341, %v3783
        %s3817 = scalar_lea.vmem %s3, 8
        %v3818 = vld [vmem:[%s3817] sm:$0x3]
        %v3851 = vunpack.c.l.b16 %v3343
        %v3852 = vunpack.c.l.b16 %v3344
        %v3853 = vunpack.c.l.b16 %v3345
        %v3854 = vunpack.c.l.b16 %v3346
        %v3855 = vunpack.c.l.b16 %v3347
        %v3856 = vunpack.c.l.b16 %v3348
        %v3857 = vunpack.c.l.b16 %v3349
        %v3858 = vunpack.c.l.b16 %v3350
        %v3859 = vunpack.c.l.b16 %v3351
        %v3860 = vunpack.c.l.b16 %v3352
        %v3861 = vunpack.c.l.b16 %v3353
        %v3862 = vunpack.c.l.b16 %v3354
        %v3863 = vunpack.c.l.b16 %v3355
        %v3864 = vunpack.c.l.b16 %v3356
        %v3865 = vunpack.c.l.b16 %v3357
        %v3866 = vunpack.c.l.b16 %v3358
        %v3867 = vunpack.c.l.b16 %v3359
        %v3868 = vunpack.c.l.b16 %v3360
        %v3869 = vunpack.c.l.b16 %v3361
        %v3870 = vunpack.c.l.b16 %v3362
        %v3871 = vunpack.c.l.b16 %v3363
        %v3872 = vunpack.c.l.b16 %v3364
        %v3873 = vunpack.c.l.b16 %v3365
        %v3874 = vunpack.c.l.b16 %v3366
        %v3875 = vunpack.c.l.b16 %v3367
        %v3876 = vunpack.c.l.b16 %v3368
        %v3877 = vunpack.c.l.b16 %v3369
        %v3878 = vunpack.c.l.b16 %v3370
        %v3879 = vunpack.c.l.b16 %v3371
        %v3880 = vunpack.c.l.b16 %v3372
        %v3881 = vunpack.c.l.b16 %v3373
        %v3882 = vunpack.c.l.b16 %v3374
        %v3883 = vpack.c.b16 %v3852, %v3851
        %v3884 = vpack.c.b16 %v3854, %v3853
        %v3885 = vpack.c.b16 %v3856, %v3855
        %v3886 = vpack.c.b16 %v3858, %v3857
        %v3887 = vpack.c.b16 %v3860, %v3859
        %v3888 = vpack.c.b16 %v3862, %v3861
        %v3889 = vpack.c.b16 %v3864, %v3863
        %v3890 = vpack.c.b16 %v3866, %v3865
        %v3891 = vpack.c.b16 %v3868, %v3867
        %v3892 = vpack.c.b16 %v3870, %v3869
        %v3893 = vpack.c.b16 %v3872, %v3871
        %v3894 = vpack.c.b16 %v3874, %v3873
        %v3895 = vpack.c.b16 %v3876, %v3875
        %v3896 = vpack.c.b16 %v3878, %v3877
        %v3897 = vpack.c.b16 %v3880, %v3879
        %v3898 = vpack.c.b16 %v3882, %v3881
        %v3900 = vsel %vm1719, %v3883, 0
        %v3903 = vsel %vm1719, %v3884, 0
        %v3906 = vsel %vm1719, %v3885, 0
        %v3909 = vsel %vm1719, %v3886, 0
        %v3912 = vsel %vm1719, %v3887, 0
        %v3915 = vsel %vm1719, %v3888, 0
        %v3918 = vsel %vm1719, %v3889, 0
        %v3921 = vsel %vm1719, %v3890, 0
        %v3924 = vsel %vm1719, %v3891, 0
        %v3927 = vsel %vm1719, %v3892, 0
        %v3930 = vsel %vm1719, %v3893, 0
        %v3933 = vsel %vm1719, %v3894, 0
        %v3936 = vsel %vm1719, %v3895, 0
        %v3939 = vsel %vm1719, %v3896, 0
        %v3942 = vsel %vm1719, %v3897, 0
        %v3945 = vsel %vm1719, %v3898, 0
        %v3948 = vsel %vm1768, %v3818, 0
        %3950 = vmatpush.bf16.msra.mxu0 0
        %3951 = vmatpush.bf16.msra.mxu0 0
        %3952 = vmatpush.bf16.msra.mxu0 0
        %3953 = vmatpush.bf16.msra.mxu0 0
        %3954 = vmatpush.bf16.msra.mxu0 0
        %3955 = vmatpush.bf16.msra.mxu0 0
        %3956 = vmatpush.bf16.msra.mxu0 0
        %3957 = vmatpush.bf16.msra.mxu0 %v3948
        %3958 = vmatmul.bf16.gmra.mxu0 %v3900
        %v3959 = vpop.f32.mrf.mxu0
        %v3960 = vadd.f32 0.0, %v3959
        %v3961 = vpop.f32.mrf.mxu0
        %v3962 = vadd.f32 0.0, %v3961
        %3963 = vmatmul.bf16.gmra.mxu0 %v3903
        %v3964 = vpop.f32.mrf.mxu0
        %v3965 = vadd.f32 0.0, %v3964
        %v3966 = vpop.f32.mrf.mxu0
        %v3967 = vadd.f32 0.0, %v3966
        %3968 = vmatmul.bf16.gmra.mxu0 %v3906
        %v3969 = vpop.f32.mrf.mxu0
        %v3970 = vadd.f32 0.0, %v3969
        %v3971 = vpop.f32.mrf.mxu0
        %v3972 = vadd.f32 0.0, %v3971
        %3973 = vmatmul.bf16.gmra.mxu0 %v3909
        %v3974 = vpop.f32.mrf.mxu0
        %v3975 = vadd.f32 0.0, %v3974
        %v3976 = vpop.f32.mrf.mxu0
        %v3977 = vadd.f32 0.0, %v3976
        %3978 = vmatmul.bf16.gmra.mxu0 %v3912
        %v3979 = vpop.f32.mrf.mxu0
        %v3980 = vadd.f32 0.0, %v3979
        %v3981 = vpop.f32.mrf.mxu0
        %v3982 = vadd.f32 0.0, %v3981
        %3983 = vmatmul.bf16.gmra.mxu0 %v3915
        %v3984 = vpop.f32.mrf.mxu0
        %v3985 = vadd.f32 0.0, %v3984
        %v3986 = vpop.f32.mrf.mxu0
        %v3987 = vadd.f32 0.0, %v3986
        %3988 = vmatmul.bf16.gmra.mxu0 %v3918
        %v3989 = vpop.f32.mrf.mxu0
        %v3990 = vadd.f32 0.0, %v3989
        %v3991 = vpop.f32.mrf.mxu0
        %v3992 = vadd.f32 0.0, %v3991
        %3993 = vmatmul.bf16.gmra.mxu0 %v3921
        %v3994 = vpop.f32.mrf.mxu0
        %v3995 = vadd.f32 0.0, %v3994
        %v3996 = vpop.f32.mrf.mxu0
        %v3997 = vadd.f32 0.0, %v3996
        %3998 = vmatmul.bf16.gmra.mxu0 %v3924
        %v3999 = vpop.f32.mrf.mxu0
        %v4000 = vadd.f32 0.0, %v3999
        %v4001 = vpop.f32.mrf.mxu0
        %v4002 = vadd.f32 0.0, %v4001
        %4003 = vmatmul.bf16.gmra.mxu0 %v3927
        %v4004 = vpop.f32.mrf.mxu0
        %v4005 = vadd.f32 0.0, %v4004
        %v4006 = vpop.f32.mrf.mxu0
        %v4007 = vadd.f32 0.0, %v4006
        %4008 = vmatmul.bf16.gmra.mxu0 %v3930
        %v4009 = vpop.f32.mrf.mxu0
        %v4010 = vadd.f32 0.0, %v4009
        %v4011 = vpop.f32.mrf.mxu0
        %v4012 = vadd.f32 0.0, %v4011
        %4013 = vmatmul.bf16.gmra.mxu0 %v3933
        %v4014 = vpop.f32.mrf.mxu0
        %v4015 = vadd.f32 0.0, %v4014
        %v4016 = vpop.f32.mrf.mxu0
        %v4017 = vadd.f32 0.0, %v4016
        %4018 = vmatmul.bf16.gmra.mxu0 %v3936
        %v4019 = vpop.f32.mrf.mxu0
        %v4020 = vadd.f32 0.0, %v4019
        %v4021 = vpop.f32.mrf.mxu0
        %v4022 = vadd.f32 0.0, %v4021
        %4023 = vmatmul.bf16.gmra.mxu0 %v3939
        %v4024 = vpop.f32.mrf.mxu0
        %v4025 = vadd.f32 0.0, %v4024
        %v4026 = vpop.f32.mrf.mxu0
        %v4027 = vadd.f32 0.0, %v4026
        %4028 = vmatmul.bf16.gmra.mxu0 %v3942
        %v4029 = vpop.f32.mrf.mxu0
        %v4030 = vadd.f32 0.0, %v4029
        %v4031 = vpop.f32.mrf.mxu0
        %v4032 = vadd.f32 0.0, %v4031
        %4033 = vmatmul.bf16.gmra.mxu0 %v3945
        %v4034 = vpop.f32.mrf.mxu0
        %v4035 = vadd.f32 0.0, %v4034
        %v4036 = vpop.f32.mrf.mxu0
        %v4037 = vadd.f32 0.0, %v4036
        %4038 = vdwg.mxu0
        %v4039 = vadd.f32 %v3785, %v3960
        %v4040 = vadd.f32 %v3786, %v3962
        %v4041 = vadd.f32 %v3787, %v3965
        %v4042 = vadd.f32 %v3788, %v3967
        %v4043 = vadd.f32 %v3789, %v3970
        %v4044 = vadd.f32 %v3790, %v3972
        %v4045 = vadd.f32 %v3791, %v3975
        %v4046 = vadd.f32 %v3792, %v3977
        %v4047 = vadd.f32 %v3793, %v3980
        %v4048 = vadd.f32 %v3794, %v3982
        %v4049 = vadd.f32 %v3795, %v3985
        %v4050 = vadd.f32 %v3796, %v3987
        %v4051 = vadd.f32 %v3797, %v3990
        %v4052 = vadd.f32 %v3798, %v3992
        %v4053 = vadd.f32 %v3799, %v3995
        %v4054 = vadd.f32 %v3800, %v3997
        %v4055 = vadd.f32 %v3801, %v4000
        %v4056 = vadd.f32 %v3802, %v4002
        %v4057 = vadd.f32 %v3803, %v4005
        %v4058 = vadd.f32 %v3804, %v4007
        %v4059 = vadd.f32 %v3805, %v4010
        %v4060 = vadd.f32 %v3806, %v4012
        %v4061 = vadd.f32 %v3807, %v4015
        %v4062 = vadd.f32 %v3808, %v4017
        %v4063 = vadd.f32 %v3809, %v4020
        %v4064 = vadd.f32 %v3810, %v4022
        %v4065 = vadd.f32 %v3811, %v4025
        %v4066 = vadd.f32 %v3812, %v4027
        %v4067 = vadd.f32 %v3813, %v4030
        %v4068 = vadd.f32 %v3814, %v4032
        %v4069 = vadd.f32 %v3815, %v4035
        %v4070 = vadd.f32 %v3816, %v4037
        %v4071 = vld [vmem:[#allocation2 + $0x10] sm:$0xf]
        %v4072 = vld [vmem:[#allocation2 + $0x14] sm:$0xf]
        %v4073 = vld [vmem:[#allocation2 + $0x18] sm:$0xf]
        %v4074 = vld [vmem:[#allocation2 + $0x1c] sm:$0xf]
        %v4075 = vld [vmem:[#allocation2 + $0x20] sm:$0xf]
        %v4076 = vld [vmem:[#allocation2 + $0x24] sm:$0xf]
        %v4077 = vld [vmem:[#allocation2 + $0x28] sm:$0xf]
        %v4078 = vld [vmem:[#allocation2 + $0x2c] sm:$0xf]
        %v4079 = vld [vmem:[#allocation2 + $0x30] sm:$0xf]
        %v4080 = vld [vmem:[#allocation2 + $0x34] sm:$0xf]
        %v4081 = vld [vmem:[#allocation2 + $0x38] sm:$0xf]
        %v4082 = vld [vmem:[#allocation2 + $0x3c] sm:$0xf]
        %v4083 = vld [vmem:[#allocation2 + $0x40] sm:$0xf]
        %v4084 = vld [vmem:[#allocation2 + $0x44] sm:$0xf]
        %v4085 = vld [vmem:[#allocation2 + $0x48] sm:$0xf]
        %v4086 = vld [vmem:[#allocation2 + $0x4c] sm:$0xf]
        %v4087 = vld [vmem:[#allocation2 + $0x50] sm:$0xf]
        %v4088 = vld [vmem:[#allocation2 + $0x54] sm:$0xf]
        %v4089 = vld [vmem:[#allocation2 + $0x58] sm:$0xf]
        %v4090 = vld [vmem:[#allocation2 + $0x5c] sm:$0xf]
        %v4091 = vld [vmem:[#allocation2 + $0x60] sm:$0xf]
        %v4092 = vld [vmem:[#allocation2 + $0x64] sm:$0xf]
        %v4093 = vld [vmem:[#allocation2 + $0x68] sm:$0xf]
        %v4094 = vld [vmem:[#allocation2 + $0x6c] sm:$0xf]
        %v4095 = vld [vmem:[#allocation2 + $0x70] sm:$0xf]
        %v4096 = vld [vmem:[#allocation2 + $0x74] sm:$0xf]
        %v4097 = vld [vmem:[#allocation2 + $0x78] sm:$0xf]
        %v4098 = vld [vmem:[#allocation2 + $0x7c] sm:$0xf]
        %v4099 = vld [vmem:[#allocation2 + $0x80] sm:$0xf]
        %v4100 = vld [vmem:[#allocation2 + $0x84] sm:$0xf]
        %v4101 = vld [vmem:[#allocation2 + $0x88] sm:$0xf]
        %v4102 = vld [vmem:[#allocation2 + $0x8c] sm:$0xf]
        %v4103 = vld [vmem:[#allocation2 + $0x90] sm:$0x1]
        %v4104 = vsel %vm2694, %v4071, 0
        %v4105 = vsel %vm2701, %v4072, 0
        %v4106 = vsel %vm2708, %v4073, 0
        %v4107 = vsel %vm2715, %v4074, 0
        %v4108 = vsel %vm2722, %v4075, 0
        %v4109 = vsel %vm2729, %v4076, 0
        %v4110 = vsel %vm2736, %v4077, 0
        %v4111 = vsel %vm2743, %v4078, 0
        %v4112 = vsel %vm2750, %v4079, 0
        %v4113 = vsel %vm2757, %v4080, 0
        %v4114 = vsel %vm2764, %v4081, 0
        %v4115 = vsel %vm2771, %v4082, 0
        %v4116 = vsel %vm2778, %v4083, 0
        %v4117 = vsel %vm2785, %v4084, 0
        %v4118 = vsel %vm2792, %v4085, 0
        %v4119 = vsel %vm2799, %v4086, 0
        %v4120 = vsel %vm2806, %v4087, 0
        %v4121 = vsel %vm2813, %v4088, 0
        %v4122 = vsel %vm2820, %v4089, 0
        %v4123 = vsel %vm2827, %v4090, 0
        %v4124 = vsel %vm2834, %v4091, 0
        %v4125 = vsel %vm2841, %v4092, 0
        %v4126 = vsel %vm2848, %v4093, 0
        %v4127 = vsel %vm2855, %v4094, 0
        %v4128 = vsel %vm2862, %v4095, 0
        %v4129 = vsel %vm2869, %v4096, 0
        %v4130 = vsel %vm2876, %v4097, 0
        %v4131 = vsel %vm2883, %v4098, 0
        %v4132 = vsel %vm2890, %v4099, 0
        %v4133 = vsel %vm2897, %v4100, 0
        %v4134 = vsel %vm2904, %v4101, 0
        %v4135 = vsel %vm2911, %v4102, 0
        %v4136 = vsel %vm2918, %v4103, 0
        %s4137 = scalar_lea.vmem %s3, 10
        %v4138 = vld [vmem:[%s4137] sm:$0x3]
        %v4172 = vunpack.c.l.b16 %v4104
        %v4173 = vunpack.c.l.b16 %v4105
        %v4174 = vunpack.c.l.b16 %v4106
        %v4175 = vunpack.c.l.b16 %v4107
        %v4176 = vunpack.c.l.b16 %v4108
        %v4177 = vunpack.c.l.b16 %v4109
        %v4178 = vunpack.c.l.b16 %v4110
        %v4179 = vunpack.c.l.b16 %v4111
        %v4180 = vunpack.c.l.b16 %v4112
        %v4181 = vunpack.c.l.b16 %v4113
        %v4182 = vunpack.c.l.b16 %v4114
        %v4183 = vunpack.c.l.b16 %v4115
        %v4184 = vunpack.c.l.b16 %v4116
        %v4185 = vunpack.c.l.b16 %v4117
        %v4186 = vunpack.c.l.b16 %v4118
        %v4187 = vunpack.c.l.b16 %v4119
        %v4188 = vunpack.c.l.b16 %v4120
        %v4189 = vunpack.c.l.b16 %v4121
        %v4190 = vunpack.c.l.b16 %v4122
        %v4191 = vunpack.c.l.b16 %v4123
        %v4192 = vunpack.c.l.b16 %v4124
        %v4193 = vunpack.c.l.b16 %v4125
        %v4194 = vunpack.c.l.b16 %v4126
        %v4195 = vunpack.c.l.b16 %v4127
        %v4196 = vunpack.c.l.b16 %v4128
        %v4197 = vunpack.c.l.b16 %v4129
        %v4198 = vunpack.c.l.b16 %v4130
        %v4199 = vunpack.c.l.b16 %v4131
        %v4200 = vunpack.c.l.b16 %v4132
        %v4201 = vunpack.c.l.b16 %v4133
        %v4202 = vunpack.c.l.b16 %v4134
        %v4203 = vunpack.c.l.b16 %v4135
        %v4204 = vunpack.c.l.b16 %v4136
        %v4205 = vpack.c.b16 %v4173, %v4172
        %v4206 = vpack.c.b16 %v4175, %v4174
        %v4207 = vpack.c.b16 %v4177, %v4176
        %v4208 = vpack.c.b16 %v4179, %v4178
        %v4209 = vpack.c.b16 %v4181, %v4180
        %v4210 = vpack.c.b16 %v4183, %v4182
        %v4211 = vpack.c.b16 %v4185, %v4184
        %v4212 = vpack.c.b16 %v4187, %v4186
        %v4213 = vpack.c.b16 %v4189, %v4188
        %v4214 = vpack.c.b16 %v4191, %v4190
        %v4215 = vpack.c.b16 %v4193, %v4192
        %v4216 = vpack.c.b16 %v4195, %v4194
        %v4217 = vpack.c.b16 %v4197, %v4196
        %v4218 = vpack.c.b16 %v4199, %v4198
        %v4219 = vpack.c.b16 %v4201, %v4200
        %v4220 = vpack.c.b16 %v4203, %v4202
        %v4221 = vpack.c.b16 %v4204, %v4204
        %v4223 = vshrl.u32 %v4205, 16
        %v4225 = vshll.u32 %v4205, 16
        %v4227 = vrot.slane %v4225, 1
        %v4228 = vor.u32 %v4223, %v4227
        %v4230 = vshll.u32 %v4206, 16
        %v4232 = vrot.slane %v4230, 1
        %v4233 = vsel %vm3037, %v4228, %v4232
        %v4234 = vshrl.u32 %v4206, 16
        %v4236 = vor.u32 %v4234, %v4232
        %v4238 = vshll.u32 %v4207, 16
        %v4240 = vrot.slane %v4238, 1
        %v4241 = vsel %vm3037, %v4236, %v4240
        %v4242 = vshrl.u32 %v4207, 16
        %v4244 = vor.u32 %v4242, %v4240
        %v4246 = vshll.u32 %v4208, 16
        %v4248 = vrot.slane %v4246, 1
        %v4249 = vsel %vm3037, %v4244, %v4248
        %v4250 = vshrl.u32 %v4208, 16
        %v4252 = vor.u32 %v4250, %v4248
        %v4254 = vshll.u32 %v4209, 16
        %v4256 = vrot.slane %v4254, 1
        %v4257 = vsel %vm3037, %v4252, %v4256
        %v4258 = vshrl.u32 %v4209, 16
        %v4260 = vor.u32 %v4258, %v4256
        %v4262 = vshll.u32 %v4210, 16
        %v4264 = vrot.slane %v4262, 1
        %v4265 = vsel %vm3037, %v4260, %v4264
        %v4266 = vshrl.u32 %v4210, 16
        %v4268 = vor.u32 %v4266, %v4264
        %v4270 = vshll.u32 %v4211, 16
        %v4272 = vrot.slane %v4270, 1
        %v4273 = vsel %vm3037, %v4268, %v4272
        %v4274 = vshrl.u32 %v4211, 16
        %v4276 = vor.u32 %v4274, %v4272
        %v4278 = vshll.u32 %v4212, 16
        %v4280 = vrot.slane %v4278, 1
        %v4281 = vsel %vm3037, %v4276, %v4280
        %v4282 = vshrl.u32 %v4212, 16
        %v4284 = vor.u32 %v4282, %v4280
        %v4286 = vshll.u32 %v4213, 16
        %v4288 = vrot.slane %v4286, 1
        %v4289 = vsel %vm3037, %v4284, %v4288
        %v4290 = vshrl.u32 %v4213, 16
        %v4292 = vor.u32 %v4290, %v4288
        %v4294 = vshll.u32 %v4214, 16
        %v4296 = vrot.slane %v4294, 1
        %v4297 = vsel %vm3037, %v4292, %v4296
        %v4298 = vshrl.u32 %v4214, 16
        %v4300 = vor.u32 %v4298, %v4296
        %v4302 = vshll.u32 %v4215, 16
        %v4304 = vrot.slane %v4302, 1
        %v4305 = vsel %vm3037, %v4300, %v4304
        %v4306 = vshrl.u32 %v4215, 16
        %v4308 = vor.u32 %v4306, %v4304
        %v4310 = vshll.u32 %v4216, 16
        %v4312 = vrot.slane %v4310, 1
        %v4313 = vsel %vm3037, %v4308, %v4312
        %v4314 = vshrl.u32 %v4216, 16
        %v4316 = vor.u32 %v4314, %v4312
        %v4318 = vshll.u32 %v4217, 16
        %v4320 = vrot.slane %v4318, 1
        %v4321 = vsel %vm3037, %v4316, %v4320
        %v4322 = vshrl.u32 %v4217, 16
        %v4324 = vor.u32 %v4322, %v4320
        %v4326 = vshll.u32 %v4218, 16
        %v4328 = vrot.slane %v4326, 1
        %v4329 = vsel %vm3037, %v4324, %v4328
        %v4330 = vshrl.u32 %v4218, 16
        %v4332 = vor.u32 %v4330, %v4328
        %v4334 = vshll.u32 %v4219, 16
        %v4336 = vrot.slane %v4334, 1
        %v4337 = vsel %vm3037, %v4332, %v4336
        %v4338 = vshrl.u32 %v4219, 16
        %v4340 = vor.u32 %v4338, %v4336
        %v4342 = vshll.u32 %v4220, 16
        %v4344 = vrot.slane %v4342, 1
        %v4345 = vsel %vm3037, %v4340, %v4344
        %v4346 = vshrl.u32 %v4220, 16
        %v4348 = vor.u32 %v4346, %v4344
        %v4350 = vshll.u32 %v4221, 16
        %v4352 = vrot.slane %v4350, 1
        %v4353 = vsel %vm3037, %v4348, %v4352
        %v4355 = vsel %vm1719, %v4233, 0
        %v4358 = vsel %vm1719, %v4241, 0
        %v4361 = vsel %vm1719, %v4249, 0
        %v4364 = vsel %vm1719, %v4257, 0
        %v4367 = vsel %vm1719, %v4265, 0
        %v4370 = vsel %vm1719, %v4273, 0
        %v4373 = vsel %vm1719, %v4281, 0
        %v4376 = vsel %vm1719, %v4289, 0
        %v4379 = vsel %vm1719, %v4297, 0
        %v4382 = vsel %vm1719, %v4305, 0
        %v4385 = vsel %vm1719, %v4313, 0
        %v4388 = vsel %vm1719, %v4321, 0
        %v4391 = vsel %vm1719, %v4329, 0
        %v4394 = vsel %vm1719, %v4337, 0
        %v4397 = vsel %vm1719, %v4345, 0
        %v4400 = vsel %vm1719, %v4353, 0
        %v4403 = vsel %vm1768, %v4138, 0
        %4405 = vmatpush.bf16.msra.mxu0 0
        %4406 = vmatpush.bf16.msra.mxu0 0
        %4407 = vmatpush.bf16.msra.mxu0 0
        %4408 = vmatpush.bf16.msra.mxu0 0
        %4409 = vmatpush.bf16.msra.mxu0 0
        %4410 = vmatpush.bf16.msra.mxu0 0
        %4411 = vmatpush.bf16.msra.mxu0 0
        %4412 = vmatpush.bf16.msra.mxu0 %v4403
        %4413 = vmatmul.bf16.gmra.mxu0 %v4355
        %v4414 = vpop.f32.mrf.mxu0
        %v4415 = vadd.f32 0.0, %v4414
        %v4416 = vpop.f32.mrf.mxu0
        %v4417 = vadd.f32 0.0, %v4416
        %4418 = vmatmul.bf16.gmra.mxu0 %v4358
        %v4419 = vpop.f32.mrf.mxu0
        %v4420 = vadd.f32 0.0, %v4419
        %v4421 = vpop.f32.mrf.mxu0
        %v4422 = vadd.f32 0.0, %v4421
        %4423 = vmatmul.bf16.gmra.mxu0 %v4361
        %v4424 = vpop.f32.mrf.mxu0
        %v4425 = vadd.f32 0.0, %v4424
        %v4426 = vpop.f32.mrf.mxu0
        %v4427 = vadd.f32 0.0, %v4426
        %4428 = vmatmul.bf16.gmra.mxu0 %v4364
        %v4429 = vpop.f32.mrf.mxu0
        %v4430 = vadd.f32 0.0, %v4429
        %v4431 = vpop.f32.mrf.mxu0
        %v4432 = vadd.f32 0.0, %v4431
        %4433 = vmatmul.bf16.gmra.mxu0 %v4367
        %v4434 = vpop.f32.mrf.mxu0
        %v4435 = vadd.f32 0.0, %v4434
        %v4436 = vpop.f32.mrf.mxu0
        %v4437 = vadd.f32 0.0, %v4436
        %4438 = vmatmul.bf16.gmra.mxu0 %v4370
        %v4439 = vpop.f32.mrf.mxu0
        %v4440 = vadd.f32 0.0, %v4439
        %v4441 = vpop.f32.mrf.mxu0
        %v4442 = vadd.f32 0.0, %v4441
        %4443 = vmatmul.bf16.gmra.mxu0 %v4373
        %v4444 = vpop.f32.mrf.mxu0
        %v4445 = vadd.f32 0.0, %v4444
        %v4446 = vpop.f32.mrf.mxu0
        %v4447 = vadd.f32 0.0, %v4446
        %4448 = vmatmul.bf16.gmra.mxu0 %v4376
        %v4449 = vpop.f32.mrf.mxu0
        %v4450 = vadd.f32 0.0, %v4449
        %v4451 = vpop.f32.mrf.mxu0
        %v4452 = vadd.f32 0.0, %v4451
        %4453 = vmatmul.bf16.gmra.mxu0 %v4379
        %v4454 = vpop.f32.mrf.mxu0
        %v4455 = vadd.f32 0.0, %v4454
        %v4456 = vpop.f32.mrf.mxu0
        %v4457 = vadd.f32 0.0, %v4456
        %4458 = vmatmul.bf16.gmra.mxu0 %v4382
        %v4459 = vpop.f32.mrf.mxu0
        %v4460 = vadd.f32 0.0, %v4459
        %v4461 = vpop.f32.mrf.mxu0
        %v4462 = vadd.f32 0.0, %v4461
        %4463 = vmatmul.bf16.gmra.mxu0 %v4385
        %v4464 = vpop.f32.mrf.mxu0
        %v4465 = vadd.f32 0.0, %v4464
        %v4466 = vpop.f32.mrf.mxu0
        %v4467 = vadd.f32 0.0, %v4466
        %4468 = vmatmul.bf16.gmra.mxu0 %v4388
        %v4469 = vpop.f32.mrf.mxu0
        %v4470 = vadd.f32 0.0, %v4469
        %v4471 = vpop.f32.mrf.mxu0
        %v4472 = vadd.f32 0.0, %v4471
        %4473 = vmatmul.bf16.gmra.mxu0 %v4391
        %v4474 = vpop.f32.mrf.mxu0
        %v4475 = vadd.f32 0.0, %v4474
        %v4476 = vpop.f32.mrf.mxu0
        %v4477 = vadd.f32 0.0, %v4476
        %4478 = vmatmul.bf16.gmra.mxu0 %v4394
        %v4479 = vpop.f32.mrf.mxu0
        %v4480 = vadd.f32 0.0, %v4479
        %v4481 = vpop.f32.mrf.mxu0
        %v4482 = vadd.f32 0.0, %v4481
        %4483 = vmatmul.bf16.gmra.mxu0 %v4397
        %v4484 = vpop.f32.mrf.mxu0
        %v4485 = vadd.f32 0.0, %v4484
        %v4486 = vpop.f32.mrf.mxu0
        %v4487 = vadd.f32 0.0, %v4486
        %4488 = vmatmul.bf16.gmra.mxu0 %v4400
        %v4489 = vpop.f32.mrf.mxu0
        %v4490 = vadd.f32 0.0, %v4489
        %v4491 = vpop.f32.mrf.mxu0
        %v4492 = vadd.f32 0.0, %v4491
        %4493 = vdwg.mxu0
        %v4494 = vadd.f32 %v4039, %v4415
        %v4495 = vadd.f32 %v4040, %v4417
        %v4496 = vadd.f32 %v4041, %v4420
        %v4497 = vadd.f32 %v4042, %v4422
        %v4498 = vadd.f32 %v4043, %v4425
        %v4499 = vadd.f32 %v4044, %v4427
        %v4500 = vadd.f32 %v4045, %v4430
        %v4501 = vadd.f32 %v4046, %v4432
        %v4502 = vadd.f32 %v4047, %v4435
        %v4503 = vadd.f32 %v4048, %v4437
        %v4504 = vadd.f32 %v4049, %v4440
        %v4505 = vadd.f32 %v4050, %v4442
        %v4506 = vadd.f32 %v4051, %v4445
        %v4507 = vadd.f32 %v4052, %v4447
        %v4508 = vadd.f32 %v4053, %v4450
        %v4509 = vadd.f32 %v4054, %v4452
        %v4510 = vadd.f32 %v4055, %v4455
        %v4511 = vadd.f32 %v4056, %v4457
        %v4512 = vadd.f32 %v4057, %v4460
        %v4513 = vadd.f32 %v4058, %v4462
        %v4514 = vadd.f32 %v4059, %v4465
        %v4515 = vadd.f32 %v4060, %v4467
        %v4516 = vadd.f32 %v4061, %v4470
        %v4517 = vadd.f32 %v4062, %v4472
        %v4518 = vadd.f32 %v4063, %v4475
        %v4519 = vadd.f32 %v4064, %v4477
        %v4520 = vadd.f32 %v4065, %v4480
        %v4521 = vadd.f32 %v4066, %v4482
        %v4522 = vadd.f32 %v4067, %v4485
        %v4523 = vadd.f32 %v4068, %v4487
        %v4524 = vadd.f32 %v4069, %v4490
        %v4525 = vadd.f32 %v4070, %v4492
        %v4526 = vld [vmem:[#allocation2 + $0x14] sm:$0x8]
        %v4527 = vld [vmem:[#allocation2 + $0x18] sm:$0xf]
        %v4528 = vld [vmem:[#allocation2 + $0x1c] sm:$0xf]
        %v4529 = vld [vmem:[#allocation2 + $0x20] sm:$0xf]
        %v4530 = vld [vmem:[#allocation2 + $0x24] sm:$0xf]
        %v4531 = vld [vmem:[#allocation2 + $0x28] sm:$0xf]
        %v4532 = vld [vmem:[#allocation2 + $0x2c] sm:$0xf]
        %v4533 = vld [vmem:[#allocation2 + $0x30] sm:$0xf]
        %v4534 = vld [vmem:[#allocation2 + $0x34] sm:$0xf]
        %v4535 = vld [vmem:[#allocation2 + $0x38] sm:$0xf]
        %v4536 = vld [vmem:[#allocation2 + $0x3c] sm:$0xf]
        %v4537 = vld [vmem:[#allocation2 + $0x40] sm:$0xf]
        %v4538 = vld [vmem:[#allocation2 + $0x44] sm:$0xf]
        %v4539 = vld [vmem:[#allocation2 + $0x48] sm:$0xf]
        %v4540 = vld [vmem:[#allocation2 + $0x4c] sm:$0xf]
        %v4541 = vld [vmem:[#allocation2 + $0x50] sm:$0xf]
        %v4542 = vld [vmem:[#allocation2 + $0x54] sm:$0xf]
        %v4543 = vld [vmem:[#allocation2 + $0x58] sm:$0xf]
        %v4544 = vld [vmem:[#allocation2 + $0x5c] sm:$0xf]
        %v4545 = vld [vmem:[#allocation2 + $0x60] sm:$0xf]
        %v4546 = vld [vmem:[#allocation2 + $0x64] sm:$0xf]
        %v4547 = vld [vmem:[#allocation2 + $0x68] sm:$0xf]
        %v4548 = vld [vmem:[#allocation2 + $0x6c] sm:$0xf]
        %v4549 = vld [vmem:[#allocation2 + $0x70] sm:$0xf]
        %v4550 = vld [vmem:[#allocation2 + $0x74] sm:$0xf]
        %v4551 = vld [vmem:[#allocation2 + $0x78] sm:$0xf]
        %v4552 = vld [vmem:[#allocation2 + $0x7c] sm:$0xf]
        %v4553 = vld [vmem:[#allocation2 + $0x80] sm:$0xf]
        %v4554 = vld [vmem:[#allocation2 + $0x84] sm:$0xf]
        %v4555 = vld [vmem:[#allocation2 + $0x88] sm:$0xf]
        %v4556 = vld [vmem:[#allocation2 + $0x8c] sm:$0xf]
        %v4557 = vld [vmem:[#allocation2 + $0x90] sm:$0xf]
        %v4558 = vld [vmem:[#allocation2 + $0x94] sm:$0xf]
        %v4559 = vsel %vm1378, %v4526, 0
        %v4560 = vsel %vm1385, %v4527, 0
        %v4561 = vsel %vm1392, %v4528, 0
        %v4562 = vsel %vm1399, %v4529, 0
        %v4563 = vsel %vm1406, %v4530, 0
        %v4564 = vsel %vm1413, %v4531, 0
        %v4565 = vsel %vm1420, %v4532, 0
        %v4566 = vsel %vm1427, %v4533, 0
        %v4567 = vsel %vm1434, %v4534, 0
        %v4568 = vsel %vm1441, %v4535, 0
        %v4569 = vsel %vm1448, %v4536, 0
        %v4570 = vsel %vm1455, %v4537, 0
        %v4571 = vsel %vm1462, %v4538, 0
        %v4572 = vsel %vm1469, %v4539, 0
        %v4573 = vsel %vm1476, %v4540, 0
        %v4574 = vsel %vm1483, %v4541, 0
        %v4575 = vsel %vm1490, %v4542, 0
        %v4576 = vsel %vm1497, %v4543, 0
        %v4577 = vsel %vm1504, %v4544, 0
        %v4578 = vsel %vm1511, %v4545, 0
        %v4579 = vsel %vm1518, %v4546, 0
        %v4580 = vsel %vm1525, %v4547, 0
        %v4581 = vsel %vm1532, %v4548, 0
        %v4582 = vsel %vm1539, %v4549, 0
        %v4583 = vsel %vm1546, %v4550, 0
        %v4584 = vsel %vm1553, %v4551, 0
        %v4585 = vsel %vm1560, %v4552, 0
        %v4586 = vsel %vm1567, %v4553, 0
        %v4587 = vsel %vm1574, %v4554, 0
        %v4588 = vsel %vm1581, %v4555, 0
        %v4589 = vsel %vm1588, %v4556, 0
        %v4590 = vsel %vm1595, %v4557, 0
        %v4591 = vsel %vm1602, %v4558, 0
        %s4592 = scalar_lea.vmem %s3, 12
        %v4593 = vld [vmem:[%s4592] sm:$0x3]
        %v4627 = vunpack.c.l.b16 %v4559
        %v4628 = vunpack.c.l.b16 %v4560
        %v4629 = vunpack.c.l.b16 %v4561
        %v4630 = vunpack.c.l.b16 %v4562
        %v4631 = vunpack.c.l.b16 %v4563
        %v4632 = vunpack.c.l.b16 %v4564
        %v4633 = vunpack.c.l.b16 %v4565
        %v4634 = vunpack.c.l.b16 %v4566
        %v4635 = vunpack.c.l.b16 %v4567
        %v4636 = vunpack.c.l.b16 %v4568
        %v4637 = vunpack.c.l.b16 %v4569
        %v4638 = vunpack.c.l.b16 %v4570
        %v4639 = vunpack.c.l.b16 %v4571
        %v4640 = vunpack.c.l.b16 %v4572
        %v4641 = vunpack.c.l.b16 %v4573
        %v4642 = vunpack.c.l.b16 %v4574
        %v4643 = vunpack.c.l.b16 %v4575
        %v4644 = vunpack.c.l.b16 %v4576
        %v4645 = vunpack.c.l.b16 %v4577
        %v4646 = vunpack.c.l.b16 %v4578
        %v4647 = vunpack.c.l.b16 %v4579
        %v4648 = vunpack.c.l.b16 %v4580
        %v4649 = vunpack.c.l.b16 %v4581
        %v4650 = vunpack.c.l.b16 %v4582
        %v4651 = vunpack.c.l.b16 %v4583
        %v4652 = vunpack.c.l.b16 %v4584
        %v4653 = vunpack.c.l.b16 %v4585
        %v4654 = vunpack.c.l.b16 %v4586
        %v4655 = vunpack.c.l.b16 %v4587
        %v4656 = vunpack.c.l.b16 %v4588
        %v4657 = vunpack.c.l.b16 %v4589
        %v4658 = vunpack.c.l.b16 %v4590
        %v4659 = vunpack.c.l.b16 %v4591
        %v4660 = vpack.c.b16 %v4628, %v4627
        %v4661 = vpack.c.b16 %v4630, %v4629
        %v4662 = vpack.c.b16 %v4632, %v4631
        %v4663 = vpack.c.b16 %v4634, %v4633
        %v4664 = vpack.c.b16 %v4636, %v4635
        %v4665 = vpack.c.b16 %v4638, %v4637
        %v4666 = vpack.c.b16 %v4640, %v4639
        %v4667 = vpack.c.b16 %v4642, %v4641
        %v4668 = vpack.c.b16 %v4644, %v4643
        %v4669 = vpack.c.b16 %v4646, %v4645
        %v4670 = vpack.c.b16 %v4648, %v4647
        %v4671 = vpack.c.b16 %v4650, %v4649
        %v4672 = vpack.c.b16 %v4652, %v4651
        %v4673 = vpack.c.b16 %v4654, %v4653
        %v4674 = vpack.c.b16 %v4656, %v4655
        %v4675 = vpack.c.b16 %v4658, %v4657
        %v4676 = vpack.c.b16 %v4659, %v4659
        %v4678 = vshrl.u32 %v4660, 16
        %v4680 = vrot.slane %v4678, 3
        %v4681 = vshll.u32 %v4660, 16
        %v4683 = vrot.slane %v4681, 4
        %v4684 = vor.u32 %v4680, %v4683
        %v4686 = vshrl.u32 %v4661, 16
        %v4688 = vrot.slane %v4686, 3
        %v4689 = vshll.u32 %v4661, 16
        %v4691 = vrot.slane %v4689, 4
        %v4692 = vor.u32 %v4688, %v4691
        %v4693 = vsel %vm1944, %v4684, %v4692
        %v4695 = vshrl.u32 %v4662, 16
        %v4697 = vrot.slane %v4695, 3
        %v4698 = vshll.u32 %v4662, 16
        %v4700 = vrot.slane %v4698, 4
        %v4701 = vor.u32 %v4697, %v4700
        %v4702 = vsel %vm1944, %v4692, %v4701
        %v4704 = vshrl.u32 %v4663, 16
        %v4706 = vrot.slane %v4704, 3
        %v4707 = vshll.u32 %v4663, 16
        %v4709 = vrot.slane %v4707, 4
        %v4710 = vor.u32 %v4706, %v4709
        %v4711 = vsel %vm1944, %v4701, %v4710
        %v4713 = vshrl.u32 %v4664, 16
        %v4715 = vrot.slane %v4713, 3
        %v4716 = vshll.u32 %v4664, 16
        %v4718 = vrot.slane %v4716, 4
        %v4719 = vor.u32 %v4715, %v4718
        %v4720 = vsel %vm1944, %v4710, %v4719
        %v4722 = vshrl.u32 %v4665, 16
        %v4724 = vrot.slane %v4722, 3
        %v4725 = vshll.u32 %v4665, 16
        %v4727 = vrot.slane %v4725, 4
        %v4728 = vor.u32 %v4724, %v4727
        %v4729 = vsel %vm1944, %v4719, %v4728
        %v4731 = vshrl.u32 %v4666, 16
        %v4733 = vrot.slane %v4731, 3
        %v4734 = vshll.u32 %v4666, 16
        %v4736 = vrot.slane %v4734, 4
        %v4737 = vor.u32 %v4733, %v4736
        %v4738 = vsel %vm1944, %v4728, %v4737
        %v4740 = vshrl.u32 %v4667, 16
        %v4742 = vrot.slane %v4740, 3
        %v4743 = vshll.u32 %v4667, 16
        %v4745 = vrot.slane %v4743, 4
        %v4746 = vor.u32 %v4742, %v4745
        %v4747 = vsel %vm1944, %v4737, %v4746
        %v4749 = vshrl.u32 %v4668, 16
        %v4751 = vrot.slane %v4749, 3
        %v4752 = vshll.u32 %v4668, 16
        %v4754 = vrot.slane %v4752, 4
        %v4755 = vor.u32 %v4751, %v4754
        %v4756 = vsel %vm1944, %v4746, %v4755
        %v4758 = vshrl.u32 %v4669, 16
        %v4760 = vrot.slane %v4758, 3
        %v4761 = vshll.u32 %v4669, 16
        %v4763 = vrot.slane %v4761, 4
        %v4764 = vor.u32 %v4760, %v4763
        %v4765 = vsel %vm1944, %v4755, %v4764
        %v4767 = vshrl.u32 %v4670, 16
        %v4769 = vrot.slane %v4767, 3
        %v4770 = vshll.u32 %v4670, 16
        %v4772 = vrot.slane %v4770, 4
        %v4773 = vor.u32 %v4769, %v4772
        %v4774 = vsel %vm1944, %v4764, %v4773
        %v4776 = vshrl.u32 %v4671, 16
        %v4778 = vrot.slane %v4776, 3
        %v4779 = vshll.u32 %v4671, 16
        %v4781 = vrot.slane %v4779, 4
        %v4782 = vor.u32 %v4778, %v4781
        %v4783 = vsel %vm1944, %v4773, %v4782
        %v4785 = vshrl.u32 %v4672, 16
        %v4787 = vrot.slane %v4785, 3
        %v4788 = vshll.u32 %v4672, 16
        %v4790 = vrot.slane %v4788, 4
        %v4791 = vor.u32 %v4787, %v4790
        %v4792 = vsel %vm1944, %v4782, %v4791
        %v4794 = vshrl.u32 %v4673, 16
        %v4796 = vrot.slane %v4794, 3
        %v4797 = vshll.u32 %v4673, 16
        %v4799 = vrot.slane %v4797, 4
        %v4800 = vor.u32 %v4796, %v4799
        %v4801 = vsel %vm1944, %v4791, %v4800
        %v4803 = vshrl.u32 %v4674, 16
        %v4805 = vrot.slane %v4803, 3
        %v4806 = vshll.u32 %v4674, 16
        %v4808 = vrot.slane %v4806, 4
        %v4809 = vor.u32 %v4805, %v4808
        %v4810 = vsel %vm1944, %v4800, %v4809
        %v4812 = vshrl.u32 %v4675, 16
        %v4814 = vrot.slane %v4812, 3
        %v4815 = vshll.u32 %v4675, 16
        %v4817 = vrot.slane %v4815, 4
        %v4818 = vor.u32 %v4814, %v4817
        %v4819 = vsel %vm1944, %v4809, %v4818
        %v4821 = vshrl.u32 %v4676, 16
        %v4823 = vrot.slane %v4821, 3
        %v4824 = vshll.u32 %v4676, 16
        %v4826 = vrot.slane %v4824, 4
        %v4827 = vor.u32 %v4823, %v4826
        %v4828 = vsel %vm1944, %v4818, %v4827
        %v4830 = vsel %vm1719, %v4693, 0
        %v4833 = vsel %vm1719, %v4702, 0
        %v4836 = vsel %vm1719, %v4711, 0
        %v4839 = vsel %vm1719, %v4720, 0
        %v4842 = vsel %vm1719, %v4729, 0
        %v4845 = vsel %vm1719, %v4738, 0
        %v4848 = vsel %vm1719, %v4747, 0
        %v4851 = vsel %vm1719, %v4756, 0
        %v4854 = vsel %vm1719, %v4765, 0
        %v4857 = vsel %vm1719, %v4774, 0
        %v4860 = vsel %vm1719, %v4783, 0
        %v4863 = vsel %vm1719, %v4792, 0
        %v4866 = vsel %vm1719, %v4801, 0
        %v4869 = vsel %vm1719, %v4810, 0
        %v4872 = vsel %vm1719, %v4819, 0
        %v4875 = vsel %vm1719, %v4828, 0
        %v4878 = vsel %vm1768, %v4593, 0
        %4880 = vmatpush.bf16.msra.mxu0 0
        %4881 = vmatpush.bf16.msra.mxu0 0
        %4882 = vmatpush.bf16.msra.mxu0 0
        %4883 = vmatpush.bf16.msra.mxu0 0
        %4884 = vmatpush.bf16.msra.mxu0 0
        %4885 = vmatpush.bf16.msra.mxu0 0
        %4886 = vmatpush.bf16.msra.mxu0 0
        %4887 = vmatpush.bf16.msra.mxu0 %v4878
        %4888 = vmatmul.bf16.gmra.mxu0 %v4830
        %v4889 = vpop.f32.mrf.mxu0
        %v4890 = vadd.f32 0.0, %v4889
        %v4891 = vpop.f32.mrf.mxu0
        %v4892 = vadd.f32 0.0, %v4891
        %4893 = vmatmul.bf16.gmra.mxu0 %v4833
        %v4894 = vpop.f32.mrf.mxu0
        %v4895 = vadd.f32 0.0, %v4894
        %v4896 = vpop.f32.mrf.mxu0
        %v4897 = vadd.f32 0.0, %v4896
        %4898 = vmatmul.bf16.gmra.mxu0 %v4836
        %v4899 = vpop.f32.mrf.mxu0
        %v4900 = vadd.f32 0.0, %v4899
        %v4901 = vpop.f32.mrf.mxu0
        %v4902 = vadd.f32 0.0, %v4901
        %4903 = vmatmul.bf16.gmra.mxu0 %v4839
        %v4904 = vpop.f32.mrf.mxu0
        %v4905 = vadd.f32 0.0, %v4904
        %v4906 = vpop.f32.mrf.mxu0
        %v4907 = vadd.f32 0.0, %v4906
        %4908 = vmatmul.bf16.gmra.mxu0 %v4842
        %v4909 = vpop.f32.mrf.mxu0
        %v4910 = vadd.f32 0.0, %v4909
        %v4911 = vpop.f32.mrf.mxu0
        %v4912 = vadd.f32 0.0, %v4911
        %4913 = vmatmul.bf16.gmra.mxu0 %v4845
        %v4914 = vpop.f32.mrf.mxu0
        %v4915 = vadd.f32 0.0, %v4914
        %v4916 = vpop.f32.mrf.mxu0
        %v4917 = vadd.f32 0.0, %v4916
        %4918 = vmatmul.bf16.gmra.mxu0 %v4848
        %v4919 = vpop.f32.mrf.mxu0
        %v4920 = vadd.f32 0.0, %v4919
        %v4921 = vpop.f32.mrf.mxu0
        %v4922 = vadd.f32 0.0, %v4921
        %4923 = vmatmul.bf16.gmra.mxu0 %v4851
        %v4924 = vpop.f32.mrf.mxu0
        %v4925 = vadd.f32 0.0, %v4924
        %v4926 = vpop.f32.mrf.mxu0
        %v4927 = vadd.f32 0.0, %v4926
        %4928 = vmatmul.bf16.gmra.mxu0 %v4854
        %v4929 = vpop.f32.mrf.mxu0
        %v4930 = vadd.f32 0.0, %v4929
        %v4931 = vpop.f32.mrf.mxu0
        %v4932 = vadd.f32 0.0, %v4931
        %4933 = vmatmul.bf16.gmra.mxu0 %v4857
        %v4934 = vpop.f32.mrf.mxu0
        %v4935 = vadd.f32 0.0, %v4934
        %v4936 = vpop.f32.mrf.mxu0
        %v4937 = vadd.f32 0.0, %v4936
        %4938 = vmatmul.bf16.gmra.mxu0 %v4860
        %v4939 = vpop.f32.mrf.mxu0
        %v4940 = vadd.f32 0.0, %v4939
        %v4941 = vpop.f32.mrf.mxu0
        %v4942 = vadd.f32 0.0, %v4941
        %4943 = vmatmul.bf16.gmra.mxu0 %v4863
        %v4944 = vpop.f32.mrf.mxu0
        %v4945 = vadd.f32 0.0, %v4944
        %v4946 = vpop.f32.mrf.mxu0
        %v4947 = vadd.f32 0.0, %v4946
        %4948 = vmatmul.bf16.gmra.mxu0 %v4866
        %v4949 = vpop.f32.mrf.mxu0
        %v4950 = vadd.f32 0.0, %v4949
        %v4951 = vpop.f32.mrf.mxu0
        %v4952 = vadd.f32 0.0, %v4951
        %4953 = vmatmul.bf16.gmra.mxu0 %v4869
        %v4954 = vpop.f32.mrf.mxu0
        %v4955 = vadd.f32 0.0, %v4954
        %v4956 = vpop.f32.mrf.mxu0
        %v4957 = vadd.f32 0.0, %v4956
        %4958 = vmatmul.bf16.gmra.mxu0 %v4872
        %v4959 = vpop.f32.mrf.mxu0
        %v4960 = vadd.f32 0.0, %v4959
        %v4961 = vpop.f32.mrf.mxu0
        %v4962 = vadd.f32 0.0, %v4961
        %4963 = vmatmul.bf16.gmra.mxu0 %v4875
        %v4964 = vpop.f32.mrf.mxu0
        %v4965 = vadd.f32 0.0, %v4964
        %v4966 = vpop.f32.mrf.mxu0
        %v4967 = vadd.f32 0.0, %v4966
        %4968 = vdwg.mxu0
        %v4969 = vadd.f32 %v4494, %v4890
        %v4970 = vadd.f32 %v4495, %v4892
        %v4971 = vadd.f32 %v4496, %v4895
        %v4972 = vadd.f32 %v4497, %v4897
        %v4973 = vadd.f32 %v4498, %v4900
        %v4974 = vadd.f32 %v4499, %v4902
        %v4975 = vadd.f32 %v4500, %v4905
        %v4976 = vadd.f32 %v4501, %v4907
        %v4977 = vadd.f32 %v4502, %v4910
        %v4978 = vadd.f32 %v4503, %v4912
        %v4979 = vadd.f32 %v4504, %v4915
        %v4980 = vadd.f32 %v4505, %v4917
        %v4981 = vadd.f32 %v4506, %v4920
        %v4982 = vadd.f32 %v4507, %v4922
        %v4983 = vadd.f32 %v4508, %v4925
        %v4984 = vadd.f32 %v4509, %v4927
        %v4985 = vadd.f32 %v4510, %v4930
        %v4986 = vadd.f32 %v4511, %v4932
        %v4987 = vadd.f32 %v4512, %v4935
        %v4988 = vadd.f32 %v4513, %v4937
        %v4989 = vadd.f32 %v4514, %v4940
        %v4990 = vadd.f32 %v4515, %v4942
        %v4991 = vadd.f32 %v4516, %v4945
        %v4992 = vadd.f32 %v4517, %v4947
        %v4993 = vadd.f32 %v4518, %v4950
        %v4994 = vadd.f32 %v4519, %v4952
        %v4995 = vadd.f32 %v4520, %v4955
        %v4996 = vadd.f32 %v4521, %v4957
        %v4997 = vadd.f32 %v4522, %v4960
        %v4998 = vadd.f32 %v4523, %v4962
        %v4999 = vadd.f32 %v4524, %v4965
        %v5000 = vadd.f32 %v4525, %v4967
        %s5001 = scalar_lea.vmem %s3, 14
        %v5002 = vld [vmem:[%s5001] sm:$0x3]
        %v5035 = vunpack.c.l.b16 %v4527
        %v5036 = vunpack.c.l.b16 %v4528
        %v5037 = vunpack.c.l.b16 %v4529
        %v5038 = vunpack.c.l.b16 %v4530
        %v5039 = vunpack.c.l.b16 %v4531
        %v5040 = vunpack.c.l.b16 %v4532
        %v5041 = vunpack.c.l.b16 %v4533
        %v5042 = vunpack.c.l.b16 %v4534
        %v5043 = vunpack.c.l.b16 %v4535
        %v5044 = vunpack.c.l.b16 %v4536
        %v5045 = vunpack.c.l.b16 %v4537
        %v5046 = vunpack.c.l.b16 %v4538
        %v5047 = vunpack.c.l.b16 %v4539
        %v5048 = vunpack.c.l.b16 %v4540
        %v5049 = vunpack.c.l.b16 %v4541
        %v5050 = vunpack.c.l.b16 %v4542
        %v5051 = vunpack.c.l.b16 %v4543
        %v5052 = vunpack.c.l.b16 %v4544
        %v5053 = vunpack.c.l.b16 %v4545
        %v5054 = vunpack.c.l.b16 %v4546
        %v5055 = vunpack.c.l.b16 %v4547
        %v5056 = vunpack.c.l.b16 %v4548
        %v5057 = vunpack.c.l.b16 %v4549
        %v5058 = vunpack.c.l.b16 %v4550
        %v5059 = vunpack.c.l.b16 %v4551
        %v5060 = vunpack.c.l.b16 %v4552
        %v5061 = vunpack.c.l.b16 %v4553
        %v5062 = vunpack.c.l.b16 %v4554
        %v5063 = vunpack.c.l.b16 %v4555
        %v5064 = vunpack.c.l.b16 %v4556
        %v5065 = vunpack.c.l.b16 %v4557
        %v5066 = vunpack.c.l.b16 %v4558
        %v5067 = vpack.c.b16 %v5036, %v5035
        %v5068 = vpack.c.b16 %v5038, %v5037
        %v5069 = vpack.c.b16 %v5040, %v5039
        %v5070 = vpack.c.b16 %v5042, %v5041
        %v5071 = vpack.c.b16 %v5044, %v5043
        %v5072 = vpack.c.b16 %v5046, %v5045
        %v5073 = vpack.c.b16 %v5048, %v5047
        %v5074 = vpack.c.b16 %v5050, %v5049
        %v5075 = vpack.c.b16 %v5052, %v5051
        %v5076 = vpack.c.b16 %v5054, %v5053
        %v5077 = vpack.c.b16 %v5056, %v5055
        %v5078 = vpack.c.b16 %v5058, %v5057
        %v5079 = vpack.c.b16 %v5060, %v5059
        %v5080 = vpack.c.b16 %v5062, %v5061
        %v5081 = vpack.c.b16 %v5064, %v5063
        %v5082 = vpack.c.b16 %v5066, %v5065
        %v5084 = vsel %vm1719, %v5067, 0
        %v5087 = vsel %vm1719, %v5068, 0
        %v5090 = vsel %vm1719, %v5069, 0
        %v5093 = vsel %vm1719, %v5070, 0
        %v5096 = vsel %vm1719, %v5071, 0
        %v5099 = vsel %vm1719, %v5072, 0
        %v5102 = vsel %vm1719, %v5073, 0
        %v5105 = vsel %vm1719, %v5074, 0
        %v5108 = vsel %vm1719, %v5075, 0
        %v5111 = vsel %vm1719, %v5076, 0
        %v5114 = vsel %vm1719, %v5077, 0
        %v5117 = vsel %vm1719, %v5078, 0
        %v5120 = vsel %vm1719, %v5079, 0
        %v5123 = vsel %vm1719, %v5080, 0
        %v5126 = vsel %vm1719, %v5081, 0
        %v5129 = vsel %vm1719, %v5082, 0
        %v5132 = vsel %vm1768, %v5002, 0
        %5134 = vmatpush.bf16.msra.mxu0 0
        %5135 = vmatpush.bf16.msra.mxu0 0
        %5136 = vmatpush.bf16.msra.mxu0 0
        %5137 = vmatpush.bf16.msra.mxu0 0
        %5138 = vmatpush.bf16.msra.mxu0 0
        %5139 = vmatpush.bf16.msra.mxu0 0
        %5140 = vmatpush.bf16.msra.mxu0 0
        %5141 = vmatpush.bf16.msra.mxu0 %v5132
        %5142 = vmatmul.bf16.gmra.mxu0 %v5084
        %v5143 = vpop.f32.mrf.mxu0
        %v5144 = vadd.f32 0.0, %v5143
        %v5145 = vpop.f32.mrf.mxu0
        %v5146 = vadd.f32 0.0, %v5145
        %5147 = vmatmul.bf16.gmra.mxu0 %v5087
        %v5148 = vpop.f32.mrf.mxu0
        %v5149 = vadd.f32 0.0, %v5148
        %v5150 = vpop.f32.mrf.mxu0
        %v5151 = vadd.f32 0.0, %v5150
        %5152 = vmatmul.bf16.gmra.mxu0 %v5090
        %v5153 = vpop.f32.mrf.mxu0
        %v5154 = vadd.f32 0.0, %v5153
        %v5155 = vpop.f32.mrf.mxu0
        %v5156 = vadd.f32 0.0, %v5155
        %5157 = vmatmul.bf16.gmra.mxu0 %v5093
        %v5158 = vpop.f32.mrf.mxu0
        %v5159 = vadd.f32 0.0, %v5158
        %v5160 = vpop.f32.mrf.mxu0
        %v5161 = vadd.f32 0.0, %v5160
        %5162 = vmatmul.bf16.gmra.mxu0 %v5096
        %v5163 = vpop.f32.mrf.mxu0
        %v5164 = vadd.f32 0.0, %v5163
        %v5165 = vpop.f32.mrf.mxu0
        %v5166 = vadd.f32 0.0, %v5165
        %5167 = vmatmul.bf16.gmra.mxu0 %v5099
        %v5168 = vpop.f32.mrf.mxu0
        %v5169 = vadd.f32 0.0, %v5168
        %v5170 = vpop.f32.mrf.mxu0
        %v5171 = vadd.f32 0.0, %v5170
        %5172 = vmatmul.bf16.gmra.mxu0 %v5102
        %v5173 = vpop.f32.mrf.mxu0
        %v5174 = vadd.f32 0.0, %v5173
        %v5175 = vpop.f32.mrf.mxu0
        %v5176 = vadd.f32 0.0, %v5175
        %5177 = vmatmul.bf16.gmra.mxu0 %v5105
        %v5178 = vpop.f32.mrf.mxu0
        %v5179 = vadd.f32 0.0, %v5178
        %v5180 = vpop.f32.mrf.mxu0
        %v5181 = vadd.f32 0.0, %v5180
        %5182 = vmatmul.bf16.gmra.mxu0 %v5108
        %v5183 = vpop.f32.mrf.mxu0
        %v5184 = vadd.f32 0.0, %v5183
        %v5185 = vpop.f32.mrf.mxu0
        %v5186 = vadd.f32 0.0, %v5185
        %5187 = vmatmul.bf16.gmra.mxu0 %v5111
        %v5188 = vpop.f32.mrf.mxu0
        %v5189 = vadd.f32 0.0, %v5188
        %v5190 = vpop.f32.mrf.mxu0
        %v5191 = vadd.f32 0.0, %v5190
        %5192 = vmatmul.bf16.gmra.mxu0 %v5114
        %v5193 = vpop.f32.mrf.mxu0
        %v5194 = vadd.f32 0.0, %v5193
        %v5195 = vpop.f32.mrf.mxu0
        %v5196 = vadd.f32 0.0, %v5195
        %5197 = vmatmul.bf16.gmra.mxu0 %v5117
        %v5198 = vpop.f32.mrf.mxu0
        %v5199 = vadd.f32 0.0, %v5198
        %v5200 = vpop.f32.mrf.mxu0
        %v5201 = vadd.f32 0.0, %v5200
        %5202 = vmatmul.bf16.gmra.mxu0 %v5120
        %v5203 = vpop.f32.mrf.mxu0
        %v5204 = vadd.f32 0.0, %v5203
        %v5205 = vpop.f32.mrf.mxu0
        %v5206 = vadd.f32 0.0, %v5205
        %5207 = vmatmul.bf16.gmra.mxu0 %v5123
        %v5208 = vpop.f32.mrf.mxu0
        %v5209 = vadd.f32 0.0, %v5208
        %v5210 = vpop.f32.mrf.mxu0
        %v5211 = vadd.f32 0.0, %v5210
        %5212 = vmatmul.bf16.gmra.mxu0 %v5126
        %v5213 = vpop.f32.mrf.mxu0
        %v5214 = vadd.f32 0.0, %v5213
        %v5215 = vpop.f32.mrf.mxu0
        %v5216 = vadd.f32 0.0, %v5215
        %5217 = vmatmul.bf16.gmra.mxu0 %v5129
        %v5218 = vpop.f32.mrf.mxu0
        %v5219 = vadd.f32 0.0, %v5218
        %v5220 = vpop.f32.mrf.mxu0
        %v5221 = vadd.f32 0.0, %v5220
        %5222 = vdwg.mxu0
        %v5223 = vadd.f32 %v4969, %v5144
        %v5224 = vadd.f32 %v4970, %v5146
        %v5225 = vadd.f32 %v4971, %v5149
        %v5226 = vadd.f32 %v4972, %v5151
        %v5227 = vadd.f32 %v4973, %v5154
        %v5228 = vadd.f32 %v4974, %v5156
        %v5229 = vadd.f32 %v4975, %v5159
        %v5230 = vadd.f32 %v4976, %v5161
        %v5231 = vadd.f32 %v4977, %v5164
        %v5232 = vadd.f32 %v4978, %v5166
        %v5233 = vadd.f32 %v4979, %v5169
        %v5234 = vadd.f32 %v4980, %v5171
        %v5235 = vadd.f32 %v4981, %v5174
        %v5236 = vadd.f32 %v4982, %v5176
        %v5237 = vadd.f32 %v4983, %v5179
        %v5238 = vadd.f32 %v4984, %v5181
        %v5239 = vadd.f32 %v4985, %v5184
        %v5240 = vadd.f32 %v4986, %v5186
        %v5241 = vadd.f32 %v4987, %v5189
        %v5242 = vadd.f32 %v4988, %v5191
        %v5243 = vadd.f32 %v4989, %v5194
        %v5244 = vadd.f32 %v4990, %v5196
        %v5245 = vadd.f32 %v4991, %v5199
        %v5246 = vadd.f32 %v4992, %v5201
        %v5247 = vadd.f32 %v4993, %v5204
        %v5248 = vadd.f32 %v4994, %v5206
        %v5249 = vadd.f32 %v4995, %v5209
        %v5250 = vadd.f32 %v4996, %v5211
        %v5251 = vadd.f32 %v4997, %v5214
        %v5252 = vadd.f32 %v4998, %v5216
        %v5253 = vadd.f32 %v4999, %v5219
        %v5254 = vadd.f32 %v5000, %v5221
        %v5255 = vld [vmem:[#allocation2 + $0x18] sm:$0xf]
        %v5256 = vld [vmem:[#allocation2 + $0x1c] sm:$0xf]
        %v5257 = vld [vmem:[#allocation2 + $0x20] sm:$0xf]
        %v5258 = vld [vmem:[#allocation2 + $0x24] sm:$0xf]
        %v5259 = vld [vmem:[#allocation2 + $0x28] sm:$0xf]
        %v5260 = vld [vmem:[#allocation2 + $0x2c] sm:$0xf]
        %v5261 = vld [vmem:[#allocation2 + $0x30] sm:$0xf]
        %v5262 = vld [vmem:[#allocation2 + $0x34] sm:$0xf]
        %v5263 = vld [vmem:[#allocation2 + $0x38] sm:$0xf]
        %v5264 = vld [vmem:[#allocation2 + $0x3c] sm:$0xf]
        %v5265 = vld [vmem:[#allocation2 + $0x40] sm:$0xf]
        %v5266 = vld [vmem:[#allocation2 + $0x44] sm:$0xf]
        %v5267 = vld [vmem:[#allocation2 + $0x48] sm:$0xf]
        %v5268 = vld [vmem:[#allocation2 + $0x4c] sm:$0xf]
        %v5269 = vld [vmem:[#allocation2 + $0x50] sm:$0xf]
        %v5270 = vld [vmem:[#allocation2 + $0x54] sm:$0xf]
        %v5271 = vld [vmem:[#allocation2 + $0x58] sm:$0xf]
        %v5272 = vld [vmem:[#allocation2 + $0x5c] sm:$0xf]
        %v5273 = vld [vmem:[#allocation2 + $0x60] sm:$0xf]
        %v5274 = vld [vmem:[#allocation2 + $0x64] sm:$0xf]
        %v5275 = vld [vmem:[#allocation2 + $0x68] sm:$0xf]
        %v5276 = vld [vmem:[#allocation2 + $0x6c] sm:$0xf]
        %v5277 = vld [vmem:[#allocation2 + $0x70] sm:$0xf]
        %v5278 = vld [vmem:[#allocation2 + $0x74] sm:$0xf]
        %v5279 = vld [vmem:[#allocation2 + $0x78] sm:$0xf]
        %v5280 = vld [vmem:[#allocation2 + $0x7c] sm:$0xf]
        %v5281 = vld [vmem:[#allocation2 + $0x80] sm:$0xf]
        %v5282 = vld [vmem:[#allocation2 + $0x84] sm:$0xf]
        %v5283 = vld [vmem:[#allocation2 + $0x88] sm:$0xf]
        %v5284 = vld [vmem:[#allocation2 + $0x8c] sm:$0xf]
        %v5285 = vld [vmem:[#allocation2 + $0x90] sm:$0xf]
        %v5286 = vld [vmem:[#allocation2 + $0x94] sm:$0xf]
        %v5287 = vld [vmem:[#allocation2 + $0x98] sm:$0x1]
        %v5288 = vsel %vm2694, %v5255, 0
        %v5289 = vsel %vm2701, %v5256, 0
        %v5290 = vsel %vm2708, %v5257, 0
        %v5291 = vsel %vm2715, %v5258, 0
        %v5292 = vsel %vm2722, %v5259, 0
        %v5293 = vsel %vm2729, %v5260, 0
        %v5294 = vsel %vm2736, %v5261, 0
        %v5295 = vsel %vm2743, %v5262, 0
        %v5296 = vsel %vm2750, %v5263, 0
        %v5297 = vsel %vm2757, %v5264, 0
        %v5298 = vsel %vm2764, %v5265, 0
        %v5299 = vsel %vm2771, %v5266, 0
        %v5300 = vsel %vm2778, %v5267, 0
        %v5301 = vsel %vm2785, %v5268, 0
        %v5302 = vsel %vm2792, %v5269, 0
        %v5303 = vsel %vm2799, %v5270, 0
        %v5304 = vsel %vm2806, %v5271, 0
        %v5305 = vsel %vm2813, %v5272, 0
        %v5306 = vsel %vm2820, %v5273, 0
        %v5307 = vsel %vm2827, %v5274, 0
        %v5308 = vsel %vm2834, %v5275, 0
        %v5309 = vsel %vm2841, %v5276, 0
        %v5310 = vsel %vm2848, %v5277, 0
        %v5311 = vsel %vm2855, %v5278, 0
        %v5312 = vsel %vm2862, %v5279, 0
        %v5313 = vsel %vm2869, %v5280, 0
        %v5314 = vsel %vm2876, %v5281, 0
        %v5315 = vsel %vm2883, %v5282, 0
        %v5316 = vsel %vm2890, %v5283, 0
        %v5317 = vsel %vm2897, %v5284, 0
        %v5318 = vsel %vm2904, %v5285, 0
        %v5319 = vsel %vm2911, %v5286, 0
        %v5320 = vsel %vm2918, %v5287, 0
        %s5321 = scalar_lea.vmem %s3, 16
        %v5322 = vld [vmem:[%s5321] sm:$0x3]
        %v5356 = vunpack.c.l.b16 %v5288
        %v5357 = vunpack.c.l.b16 %v5289
        %v5358 = vunpack.c.l.b16 %v5290
        %v5359 = vunpack.c.l.b16 %v5291
        %v5360 = vunpack.c.l.b16 %v5292
        %v5361 = vunpack.c.l.b16 %v5293
        %v5362 = vunpack.c.l.b16 %v5294
        %v5363 = vunpack.c.l.b16 %v5295
        %v5364 = vunpack.c.l.b16 %v5296
        %v5365 = vunpack.c.l.b16 %v5297
        %v5366 = vunpack.c.l.b16 %v5298
        %v5367 = vunpack.c.l.b16 %v5299
        %v5368 = vunpack.c.l.b16 %v5300
        %v5369 = vunpack.c.l.b16 %v5301
        %v5370 = vunpack.c.l.b16 %v5302
        %v5371 = vunpack.c.l.b16 %v5303
        %v5372 = vunpack.c.l.b16 %v5304
        %v5373 = vunpack.c.l.b16 %v5305
        %v5374 = vunpack.c.l.b16 %v5306
        %v5375 = vunpack.c.l.b16 %v5307
        %v5376 = vunpack.c.l.b16 %v5308
        %v5377 = vunpack.c.l.b16 %v5309
        %v5378 = vunpack.c.l.b16 %v5310
        %v5379 = vunpack.c.l.b16 %v5311
        %v5380 = vunpack.c.l.b16 %v5312
        %v5381 = vunpack.c.l.b16 %v5313
        %v5382 = vunpack.c.l.b16 %v5314
        %v5383 = vunpack.c.l.b16 %v5315
        %v5384 = vunpack.c.l.b16 %v5316
        %v5385 = vunpack.c.l.b16 %v5317
        %v5386 = vunpack.c.l.b16 %v5318
        %v5387 = vunpack.c.l.b16 %v5319
        %v5388 = vunpack.c.l.b16 %v5320
        %v5389 = vpack.c.b16 %v5357, %v5356
        %v5390 = vpack.c.b16 %v5359, %v5358
        %v5391 = vpack.c.b16 %v5361, %v5360
        %v5392 = vpack.c.b16 %v5363, %v5362
        %v5393 = vpack.c.b16 %v5365, %v5364
        %v5394 = vpack.c.b16 %v5367, %v5366
        %v5395 = vpack.c.b16 %v5369, %v5368
        %v5396 = vpack.c.b16 %v5371, %v5370
        %v5397 = vpack.c.b16 %v5373, %v5372
        %v5398 = vpack.c.b16 %v5375, %v5374
        %v5399 = vpack.c.b16 %v5377, %v5376
        %v5400 = vpack.c.b16 %v5379, %v5378
        %v5401 = vpack.c.b16 %v5381, %v5380
        %v5402 = vpack.c.b16 %v5383, %v5382
        %v5403 = vpack.c.b16 %v5385, %v5384
        %v5404 = vpack.c.b16 %v5387, %v5386
        %v5405 = vpack.c.b16 %v5388, %v5388
        %v5407 = vshrl.u32 %v5389, 16
        %v5409 = vshll.u32 %v5389, 16
        %v5411 = vrot.slane %v5409, 1
        %v5412 = vor.u32 %v5407, %v5411
        %v5414 = vshll.u32 %v5390, 16
        %v5416 = vrot.slane %v5414, 1
        %v5417 = vsel %vm3037, %v5412, %v5416
        %v5418 = vshrl.u32 %v5390, 16
        %v5420 = vor.u32 %v5418, %v5416
        %v5422 = vshll.u32 %v5391, 16
        %v5424 = vrot.slane %v5422, 1
        %v5425 = vsel %vm3037, %v5420, %v5424
        %v5426 = vshrl.u32 %v5391, 16
        %v5428 = vor.u32 %v5426, %v5424
        %v5430 = vshll.u32 %v5392, 16
        %v5432 = vrot.slane %v5430, 1
        %v5433 = vsel %vm3037, %v5428, %v5432
        %v5434 = vshrl.u32 %v5392, 16
        %v5436 = vor.u32 %v5434, %v5432
        %v5438 = vshll.u32 %v5393, 16
        %v5440 = vrot.slane %v5438, 1
        %v5441 = vsel %vm3037, %v5436, %v5440
        %v5442 = vshrl.u32 %v5393, 16
        %v5444 = vor.u32 %v5442, %v5440
        %v5446 = vshll.u32 %v5394, 16
        %v5448 = vrot.slane %v5446, 1
        %v5449 = vsel %vm3037, %v5444, %v5448
        %v5450 = vshrl.u32 %v5394, 16
        %v5452 = vor.u32 %v5450, %v5448
        %v5454 = vshll.u32 %v5395, 16
        %v5456 = vrot.slane %v5454, 1
        %v5457 = vsel %vm3037, %v5452, %v5456
        %v5458 = vshrl.u32 %v5395, 16
        %v5460 = vor.u32 %v5458, %v5456
        %v5462 = vshll.u32 %v5396, 16
        %v5464 = vrot.slane %v5462, 1
        %v5465 = vsel %vm3037, %v5460, %v5464
        %v5466 = vshrl.u32 %v5396, 16
        %v5468 = vor.u32 %v5466, %v5464
        %v5470 = vshll.u32 %v5397, 16
        %v5472 = vrot.slane %v5470, 1
        %v5473 = vsel %vm3037, %v5468, %v5472
        %v5474 = vshrl.u32 %v5397, 16
        %v5476 = vor.u32 %v5474, %v5472
        %v5478 = vshll.u32 %v5398, 16
        %v5480 = vrot.slane %v5478, 1
        %v5481 = vsel %vm3037, %v5476, %v5480
        %v5482 = vshrl.u32 %v5398, 16
        %v5484 = vor.u32 %v5482, %v5480
        %v5486 = vshll.u32 %v5399, 16
        %v5488 = vrot.slane %v5486, 1
        %v5489 = vsel %vm3037, %v5484, %v5488
        %v5490 = vshrl.u32 %v5399, 16
        %v5492 = vor.u32 %v5490, %v5488
        %v5494 = vshll.u32 %v5400, 16
        %v5496 = vrot.slane %v5494, 1
        %v5497 = vsel %vm3037, %v5492, %v5496
        %v5498 = vshrl.u32 %v5400, 16
        %v5500 = vor.u32 %v5498, %v5496
        %v5502 = vshll.u32 %v5401, 16
        %v5504 = vrot.slane %v5502, 1
        %v5505 = vsel %vm3037, %v5500, %v5504
        %v5506 = vshrl.u32 %v5401, 16
        %v5508 = vor.u32 %v5506, %v5504
        %v5510 = vshll.u32 %v5402, 16
        %v5512 = vrot.slane %v5510, 1
        %v5513 = vsel %vm3037, %v5508, %v5512
        %v5514 = vshrl.u32 %v5402, 16
        %v5516 = vor.u32 %v5514, %v5512
        %v5518 = vshll.u32 %v5403, 16
        %v5520 = vrot.slane %v5518, 1
        %v5521 = vsel %vm3037, %v5516, %v5520
        %v5522 = vshrl.u32 %v5403, 16
        %v5524 = vor.u32 %v5522, %v5520
        %v5526 = vshll.u32 %v5404, 16
        %v5528 = vrot.slane %v5526, 1
        %v5529 = vsel %vm3037, %v5524, %v5528
        %v5530 = vshrl.u32 %v5404, 16
        %v5532 = vor.u32 %v5530, %v5528
        %v5534 = vshll.u32 %v5405, 16
        %v5536 = vrot.slane %v5534, 1
        %v5537 = vsel %vm3037, %v5532, %v5536
        %v5539 = vsel %vm1719, %v5417, 0
        %v5542 = vsel %vm1719, %v5425, 0
        %v5545 = vsel %vm1719, %v5433, 0
        %v5548 = vsel %vm1719, %v5441, 0
        %v5551 = vsel %vm1719, %v5449, 0
        %v5554 = vsel %vm1719, %v5457, 0
        %v5557 = vsel %vm1719, %v5465, 0
        %v5560 = vsel %vm1719, %v5473, 0
        %v5563 = vsel %vm1719, %v5481, 0
        %v5566 = vsel %vm1719, %v5489, 0
        %v5569 = vsel %vm1719, %v5497, 0
        %v5572 = vsel %vm1719, %v5505, 0
        %v5575 = vsel %vm1719, %v5513, 0
        %v5578 = vsel %vm1719, %v5521, 0
        %v5581 = vsel %vm1719, %v5529, 0
        %v5584 = vsel %vm1719, %v5537, 0
        %v5587 = vsel %vm1768, %v5322, 0
        %5589 = vmatpush.bf16.msra.mxu0 0
        %5590 = vmatpush.bf16.msra.mxu0 0
        %5591 = vmatpush.bf16.msra.mxu0 0
        %5592 = vmatpush.bf16.msra.mxu0 0
        %5593 = vmatpush.bf16.msra.mxu0 0
        %5594 = vmatpush.bf16.msra.mxu0 0
        %5595 = vmatpush.bf16.msra.mxu0 0
        %5596 = vmatpush.bf16.msra.mxu0 %v5587
        %5597 = vmatmul.bf16.gmra.mxu0 %v5539
        %v5598 = vpop.f32.mrf.mxu0
        %v5599 = vadd.f32 0.0, %v5598
        %v5600 = vpop.f32.mrf.mxu0
        %v5601 = vadd.f32 0.0, %v5600
        %5602 = vmatmul.bf16.gmra.mxu0 %v5542
        %v5603 = vpop.f32.mrf.mxu0
        %v5604 = vadd.f32 0.0, %v5603
        %v5605 = vpop.f32.mrf.mxu0
        %v5606 = vadd.f32 0.0, %v5605
        %5607 = vmatmul.bf16.gmra.mxu0 %v5545
        %v5608 = vpop.f32.mrf.mxu0
        %v5609 = vadd.f32 0.0, %v5608
        %v5610 = vpop.f32.mrf.mxu0
        %v5611 = vadd.f32 0.0, %v5610
        %5612 = vmatmul.bf16.gmra.mxu0 %v5548
        %v5613 = vpop.f32.mrf.mxu0
        %v5614 = vadd.f32 0.0, %v5613
        %v5615 = vpop.f32.mrf.mxu0
        %v5616 = vadd.f32 0.0, %v5615
        %5617 = vmatmul.bf16.gmra.mxu0 %v5551
        %v5618 = vpop.f32.mrf.mxu0
        %v5619 = vadd.f32 0.0, %v5618
        %v5620 = vpop.f32.mrf.mxu0
        %v5621 = vadd.f32 0.0, %v5620
        %5622 = vmatmul.bf16.gmra.mxu0 %v5554
        %v5623 = vpop.f32.mrf.mxu0
        %v5624 = vadd.f32 0.0, %v5623
        %v5625 = vpop.f32.mrf.mxu0
        %v5626 = vadd.f32 0.0, %v5625
        %5627 = vmatmul.bf16.gmra.mxu0 %v5557
        %v5628 = vpop.f32.mrf.mxu0
        %v5629 = vadd.f32 0.0, %v5628
        %v5630 = vpop.f32.mrf.mxu0
        %v5631 = vadd.f32 0.0, %v5630
        %5632 = vmatmul.bf16.gmra.mxu0 %v5560
        %v5633 = vpop.f32.mrf.mxu0
        %v5634 = vadd.f32 0.0, %v5633
        %v5635 = vpop.f32.mrf.mxu0
        %v5636 = vadd.f32 0.0, %v5635
        %5637 = vmatmul.bf16.gmra.mxu0 %v5563
        %v5638 = vpop.f32.mrf.mxu0
        %v5639 = vadd.f32 0.0, %v5638
        %v5640 = vpop.f32.mrf.mxu0
        %v5641 = vadd.f32 0.0, %v5640
        %5642 = vmatmul.bf16.gmra.mxu0 %v5566
        %v5643 = vpop.f32.mrf.mxu0
        %v5644 = vadd.f32 0.0, %v5643
        %v5645 = vpop.f32.mrf.mxu0
        %v5646 = vadd.f32 0.0, %v5645
        %5647 = vmatmul.bf16.gmra.mxu0 %v5569
        %v5648 = vpop.f32.mrf.mxu0
        %v5649 = vadd.f32 0.0, %v5648
        %v5650 = vpop.f32.mrf.mxu0
        %v5651 = vadd.f32 0.0, %v5650
        %5652 = vmatmul.bf16.gmra.mxu0 %v5572
        %v5653 = vpop.f32.mrf.mxu0
        %v5654 = vadd.f32 0.0, %v5653
        %v5655 = vpop.f32.mrf.mxu0
        %v5656 = vadd.f32 0.0, %v5655
        %5657 = vmatmul.bf16.gmra.mxu0 %v5575
        %v5658 = vpop.f32.mrf.mxu0
        %v5659 = vadd.f32 0.0, %v5658
        %v5660 = vpop.f32.mrf.mxu0
        %v5661 = vadd.f32 0.0, %v5660
        %5662 = vmatmul.bf16.gmra.mxu0 %v5578
        %v5663 = vpop.f32.mrf.mxu0
        %v5664 = vadd.f32 0.0, %v5663
        %v5665 = vpop.f32.mrf.mxu0
        %v5666 = vadd.f32 0.0, %v5665
        %5667 = vmatmul.bf16.gmra.mxu0 %v5581
        %v5668 = vpop.f32.mrf.mxu0
        %v5669 = vadd.f32 0.0, %v5668
        %v5670 = vpop.f32.mrf.mxu0
        %v5671 = vadd.f32 0.0, %v5670
        %5672 = vmatmul.bf16.gmra.mxu0 %v5584
        %v5673 = vpop.f32.mrf.mxu0
        %v5674 = vadd.f32 0.0, %v5673
        %v5675 = vpop.f32.mrf.mxu0
        %v5676 = vadd.f32 0.0, %v5675
        %5677 = vdwg.mxu0
        %v5678 = vadd.f32 %v5223, %v5599
        %v5679 = vadd.f32 %v5224, %v5601
        %v5680 = vadd.f32 %v5225, %v5604
        %v5681 = vadd.f32 %v5226, %v5606
        %v5682 = vadd.f32 %v5227, %v5609
        %v5683 = vadd.f32 %v5228, %v5611
        %v5684 = vadd.f32 %v5229, %v5614
        %v5685 = vadd.f32 %v5230, %v5616
        %v5686 = vadd.f32 %v5231, %v5619
        %v5687 = vadd.f32 %v5232, %v5621
        %v5688 = vadd.f32 %v5233, %v5624
        %v5689 = vadd.f32 %v5234, %v5626
        %v5690 = vadd.f32 %v5235, %v5629
        %v5691 = vadd.f32 %v5236, %v5631
        %v5692 = vadd.f32 %v5237, %v5634
        %v5693 = vadd.f32 %v5238, %v5636
        %v5694 = vadd.f32 %v5239, %v5639
        %v5695 = vadd.f32 %v5240, %v5641
        %v5696 = vadd.f32 %v5241, %v5644
        %v5697 = vadd.f32 %v5242, %v5646
        %v5698 = vadd.f32 %v5243, %v5649
        %v5699 = vadd.f32 %v5244, %v5651
        %v5700 = vadd.f32 %v5245, %v5654
        %v5701 = vadd.f32 %v5246, %v5656
        %v5702 = vadd.f32 %v5247, %v5659
        %v5703 = vadd.f32 %v5248, %v5661
        %v5704 = vadd.f32 %v5249, %v5664
        %v5705 = vadd.f32 %v5250, %v5666
        %v5706 = vadd.f32 %v5251, %v5669
        %v5707 = vadd.f32 %v5252, %v5671
        %v5708 = vadd.f32 %v5253, %v5674
        %v5709 = vadd.f32 %v5254, %v5676
        %5710 = vst [vmem:[%s190] sm:$0xff] %v5678
        %5711 = vst [vmem:[%s190 + $0x8] sm:$0xff] %v5679
        %5712 = vst [vmem:[%s190 + $0x10] sm:$0xff] %v5680
        %5713 = vst [vmem:[%s190 + $0x18] sm:$0xff] %v5681
        %5714 = vst [vmem:[%s190 + $0x20] sm:$0xff] %v5682
        %5715 = vst [vmem:[%s190 + $0x28] sm:$0xff] %v5683
        %5716 = vst [vmem:[%s190 + $0x30] sm:$0xff] %v5684
        %5717 = vst [vmem:[%s190 + $0x38] sm:$0xff] %v5685
        %5718 = vst [vmem:[%s190 + $0x40] sm:$0xff] %v5686
        %5719 = vst [vmem:[%s190 + $0x48] sm:$0xff] %v5687
        %5720 = vst [vmem:[%s190 + $0x50] sm:$0xff] %v5688
        %5721 = vst [vmem:[%s190 + $0x58] sm:$0xff] %v5689
        %5722 = vst [vmem:[%s190 + $0x60] sm:$0xff] %v5690
        %5723 = vst [vmem:[%s190 + $0x68] sm:$0xff] %v5691
        %5724 = vst [vmem:[%s190 + $0x70] sm:$0xff] %v5692
        %5725 = vst [vmem:[%s190 + $0x78] sm:$0xff] %v5693
        %5726 = vst [vmem:[%s190 + $0x80] sm:$0xff] %v5694
        %5727 = vst [vmem:[%s190 + $0x88] sm:$0xff] %v5695
        %5728 = vst [vmem:[%s190 + $0x90] sm:$0xff] %v5696
        %5729 = vst [vmem:[%s190 + $0x98] sm:$0xff] %v5697
        %5730 = vst [vmem:[%s190 + $0xa0] sm:$0xff] %v5698
        %5731 = vst [vmem:[%s190 + $0xa8] sm:$0xff] %v5699
        %5732 = vst [vmem:[%s190 + $0xb0] sm:$0xff] %v5700
        %5733 = vst [vmem:[%s190 + $0xb8] sm:$0xff] %v5701
        %5734 = vst [vmem:[%s190 + $0xc0] sm:$0xff] %v5702
        %5735 = vst [vmem:[%s190 + $0xc8] sm:$0xff] %v5703
        %5736 = vst [vmem:[%s190 + $0xd0] sm:$0xff] %v5704
        %5737 = vst [vmem:[%s190 + $0xd8] sm:$0xff] %v5705
        %5738 = vst [vmem:[%s190 + $0xe0] sm:$0xff] %v5706
        %5739 = vst [vmem:[%s190 + $0xe8] sm:$0xff] %v5707
        %5740 = vst [vmem:[%s190 + $0xf0] sm:$0xff] %v5708
        %5741 = vst [vmem:[%s190 + $0xf8] sm:$0xff] %v5709
        %s5742 = sand.u32 %s115, 1
        %s5743 = scalar_lea.sflag [#allocation4], %s5742
        %s5744 = sand.u32 %s115, 1
        %s5745 = smul.addr %s5744, 256
        %s5746 = scalar_lea.vmem [#allocation3], %s5745
        // Predicated region
        $region37: #{tpu_custom_call.1} parent=35 // pred_check
          %p5747 = pneg %p125
        $region38: #{tpu_custom_call.1} parent=35 // pred_check_branch
          %5749 = sbr.rel (%p5747) target = $region40
        $region39: #{tpu_custom_call.1} parent=35 // pred_region
          %5751 = vsyncadd %s5743, 0
          %s5752 = smul.addr %s18, 32
          %s5753 = smul.addr %s5752, 8
          %s5754 = scalar_lea.hbm %s4, %s5753
          %s5755 = sshll.u32 %s5746, 4
          %s5756 = int_to_ptr.vmem [resolvable:$true] %s5755
          %s5757 = sshll.u32 %s5754, 4
          %s5758 = int_to_ptr.hbm [resolvable:$true] %s5757
          %5763 = dma.vmem_to_hbm [thread:$0]  %s5756, 4096, %s5758, %s5743, 128, 128, 8
        $region40: #{tpu_custom_call.1} parent=35 // pred_fallthru
          _
      $region36: #{tpu_custom_call.1} parent=5 // pred_fallthru
        _
      %p5764 = scmp.le.s32.totalorder 2, %s13
      // Predicated region
      $region41: #{tpu_custom_call.1} parent=5 // pred_check
        %p5765 = pneg %p5764
      $region42: #{tpu_custom_call.1} parent=5 // pred_check_branch
        %5767 = sbr.rel (%p5765) target = $region44
      $region43: #{tpu_custom_call.1} parent=5 // pred_region
        %s5768 = ssub.s32 %s13, 2
        // Predicated region
        $region45: #{tpu_custom_call.1} parent=43 // pred_check
          %p5769 = pneg %p131
        $region46: #{tpu_custom_call.1} parent=43 // pred_check_branch
          %5771 = sbr.rel (%p5769) target = $region48
        $region47: #{tpu_custom_call.1} parent=43 // pred_region
          %s5772 = sand.u32 %s116, 1
          %s5773 = scalar_lea.sflag [#allocation4], %s5772
          %s5774 = sand.u32 %s116, 1
          %s5775 = smul.addr %s5774, 256
          %s5776 = scalar_lea.vmem [#allocation3], %s5775
          %5778 = dma.done %s5773, 4096
        $region48: #{tpu_custom_call.1} parent=43 // pred_fallthru
          _
      $region44: #{tpu_custom_call.1} parent=5 // pred_fallthru
        _
    $region6: #{tpu_custom_call.1} parent=1 // loop_footer
      %s17 = sadd.s32 1, %s13
    $region7: #{tpu_custom_call.1} parent=1 // loop_footer_branch
      %12 = sbr.rel target = $region3
    $region8: #{tpu_custom_call.1} parent=1 // loop_exit
      _
    %5779 = vsyncpa [#allocation4], 1
    %s5780 = scalar_lea.sflag [#allocation4], 1
    %5781 = vsyncpa %s5780, 1

</llo_original>
